<compile_context>
chip_gen: v7x
topology: tpu7x:2x2x1
jax: 0.10.0
libtpu: 0.0.40
codegen_flags: <defaults>
</compile_context>

<pallas_src>
import functools

import numpy as np
import jax
import jax.numpy as jnp
from jax.experimental import pallas as pl
from jax.experimental.pallas import tpu as pltpu

_EPS_IN = 1e-5       # nn.InstanceNorm2d default eps (affine=False)
_LRELU_SLOPE = 0.1   # nn.LeakyReLU(0.1)


# ---------------------------------------------------------------------------
# Hardware-aware tile / VMEM selection
# ---------------------------------------------------------------------------
def _tpu_generation():
    """Best-effort chip-generation sniff: 'v5' / 'v6' / 'v7' / None."""
    try:
        kind = jax.devices()[0].device_kind.lower()
    except Exception:
        return None
    for gen in ("v7", "v6", "v5"):
        if gen in kind:
            return gen
    return None


def _tile_and_vmem(cout):
    gen = _tpu_generation()
    if gen == "v5":
        # v5e MXU is 4x128x128: ct=256 buys nothing, just VMEM/store pressure.
        prefs, vmem_mib = (128,), 96
    elif gen == "v7":
        # v7x: 2x256 MXU, but only 64 MiB physical VMEM -> cap scoped limit.
        prefs, vmem_mib = (256, 128), 44
    elif gen == "v6":
        # v6e: 2x256 MXU, 128 MiB VMEM.
        prefs, vmem_mib = (256, 128), 96
    else:
        prefs, vmem_mib = (256, 128), 64
    ct = cout
    for t in prefs:
        if cout % t == 0 and cout >= t:
            ct = t
            break
    return ct, vmem_mib * 1024 * 1024


# ---------------------------------------------------------------------------
# Kernels
# ---------------------------------------------------------------------------
def _conv3_in_lrelu_kernel(x_ref, w_ref, o_ref, xp_ref, pat_ref, *, pool):
    """spectral_norm Conv2d(Cin,Cout,3,1,1) + InstanceNorm2d(affine=False)
    + LeakyReLU(0.1) [+ AvgPool2d(2,2)] for ONE sample and ONE Cout tile.

    x_ref  : (1, H, W, Cin)      bf16 activation
    w_ref  : (9*Cin, Ct)         bf16 weights, rows ordered (kh, kw, cin)
    o_ref  : (1, S_out, Ct)      bf16 output (S_out = H*W, or H*W/4 when pooling)
    xp_ref : (H+2, W+2, Cin)     bf16 persistent scratch: zero-padded halo
    pat_ref: (H*W, 9*Cin)        bf16 persistent scratch: im2col patch matrix

    Conv bias is intentionally omitted: a per-channel constant added before an
    affine-free InstanceNorm is exactly cancelled by the mean subtraction.
    """
    _, H, W, Cin = x_ref.shape
    Ct = o_ref.shape[-1]

    # Build halo + im2col ONCE per sample (Cout tile 0); reused by every tile.
    @pl.when(pl.program_id(1) == 0)
    def _build_patches():
        # Zero only the 1-pixel border (4 thin strips), not the whole scratch.
        zrow = jnp.zeros((1, W + 2, Cin), xp_ref.dtype)
        zcol = jnp.zeros((H + 2, 1, Cin), xp_ref.dtype)
        xp_ref[0:1, :, :] = zrow
        xp_ref[H + 1:H + 2, :, :] = zrow
        xp_ref[:, 0:1, :] = zcol
        xp_ref[:, W + 1:W + 2, :] = zcol
        xp_ref[1:H + 1, 1:W + 1, :] = x_ref[0]
        xp = xp_ref[...]
        # im2col: each of the 9 shifted taps goes straight into the patch
        # scratch (no big concat temporary). Column order (kh, kw, cin)
        # matches the weight row order.
        # TODO(synk): kw=1/2 shifts are sublane-misaligned copies; for
        # production channel counts lay out the halo as (H+2, (W+2)*Cin) so a
        # kw shift is a whole-vreg lane-block move.
        for kh in range(3):
            for kw in range(3):
                idx = kh * 3 + kw
                pat_ref[:, idx * Cin:(idx + 1) * Cin] = (
                    xp[kh:kh + H, kw:kw + W, :].reshape(H * W, Cin))

    # One big-K bf16 matmul per Cout tile (f32 accumulation on the MXU).
    acc = jnp.dot(pat_ref[...], w_ref[...], preferred_element_type=jnp.float32)

    # InstanceNorm2d(affine=False): two-pass stats (mean, then centered sum of
    # squares). `centered` is reused for normalization, so no extra acc*acc
    # buffer and better conditioning than E[x^2]-E[x]^2.
    inv_n = 1.0 / (H * W)
    mean = jnp.sum(acc, axis=0, keepdims=True) * inv_n
    centered = acc - mean
    var = jnp.sum(centered * centered, axis=0, keepdims=True) * inv_n
    y = centered * jax.lax.rsqrt(var + _EPS_IN)
    y = jnp.where(y >= 0, y, _LRELU_SLOPE * y)           # LeakyReLU(0.1)

    if pool:  # AvgPool2d(2,2): cheap VPU pair-sums, no dense pooling matrix.
        y = y.reshape(H, W // 2, 2, Ct)
        y = y[:, :, 0, :] + y[:, :, 1, :]                 # pair-sum along W
        y = y.reshape(H // 2, 2, W // 2, Ct)
        y = (y[:, 0] + y[:, 1]) * 0.25                    # pair-sum along H
        y = y.reshape((H // 2) * (W // 2), Ct)

    o_ref[...] = y[None].astype(o_ref.dtype)


def _conv4s2_head_kernel(x_ref, w_ref, b_ref, o_ref):
    """spectral_norm Conv2d(Cin, 1, kernel=4, stride=2, pad=0), one sample.

    x_ref : (1, Hin, Win, Cin)  bf16
    w_ref : (16*Cin, 1)         bf16 weights, rows ordered (kh, kw, cin)
    b_ref : (1,)                f32 bias (SMEM)
    o_ref : (1, Ho*Wo, 1)       f32

    Taps gathered via a parity-split reshape (x5[a,r,b,s,c] = x[2a+r,2b+s,c]).
    """
    _, Hin, Win, Cin = x_ref.shape
    Ho, Wo = Hin // 2 - 1, Win // 2 - 1

    x5 = x_ref[0].reshape(Hin // 2, 2, Win // 2, 2, Cin)
    taps = []
    for kh in range(4):
        ah, rh = kh // 2, kh % 2
        for kw in range(4):
            aw, rw = kw // 2, kw % 2
            taps.append(x5[ah:ah + Ho, rh, aw:aw + Wo, rw, :])   # (Ho, Wo, Cin)
    patches = jnp.concatenate(taps, axis=-1).reshape(Ho * Wo, 16 * Cin)

    # TODO(synk): N=1 output column under-fills the MXU and stores are masked;
    # if this ever matters in profiles do it as a VPU multiply + lane reduce.
    out = jnp.dot(patches, w_ref[...], preferred_element_type=jnp.float32)
    o_ref[...] = (out + b_ref[0])[None]


# ---------------------------------------------------------------------------
# pallas_call wrappers
# ---------------------------------------------------------------------------
def down_conv_block_call(x_nhwc, w_flat, *, pool):
    """DownConvBlock forward: SN-conv3x3 + InstanceNorm + LeakyReLU [+ AvgPool]."""
    N, H, W, Cin = x_nhwc.shape
    Cout = w_flat.shape[-1]
    if pool:
        assert H % 2 == 0 and W % 2 == 0
    ct, vmem_limit = _tile_and_vmem(Cout)
    s_out = (H // 2) * (W // 2) if pool else H * W
    kernel = functools.partial(_conv3_in_lrelu_kernel, pool=pool)

    return pl.pallas_call(
        kernel,
        out_shape=jax.ShapeDtypeStruct((N, s_out, Cout), jnp.bfloat16),
        grid=(N, Cout // ct),
        in_specs=[
            pl.BlockSpec((1, H, W, Cin), lambda n, c: (n, 0, 0, 0)),
            pl.BlockSpec((9 * Cin, ct), lambda n, c: (0, c)),
        ],
        out_specs=pl.BlockSpec((1, s_out, ct), lambda n, c: (n, 0, c)),
        scratch_shapes=[
            pltpu.VMEM((H + 2, W + 2, Cin), jnp.bfloat16),   # zero-halo activation
            pltpu.VMEM((H * W, 9 * Cin), jnp.bfloat16),      # im2col patch matrix
        ],
        compiler_params=pltpu.CompilerParams(
            # Cout axis must be "arbitrary": the c==0-guarded halo/im2col build
            # would never run on the second core if that axis were sharded.
            # Megacore sharding comes from the batch axis.
            dimension_semantics=("parallel", "arbitrary"),
            vmem_limit_bytes=vmem_limit,
        ),
    )(x_nhwc.astype(jnp.bfloat16), w_flat.astype(jnp.bfloat16))


def conv4x4_s2_head_call(x_nhwc, w_flat, b):
    """Final spectral-norm Conv2d(Cin, 1, 4, stride=2, pad=0)."""
    N, Hin, Win, Cin = x_nhwc.shape
    assert Hin % 2 == 0 and Win % 2 == 0
    Ho, Wo = (Hin - 4) // 2 + 1, (Win - 4) // 2 + 1
    b1 = jnp.asarray(b, jnp.float32).reshape(1)

    return pl.pallas_call(
        _conv4s2_head_kernel,
        out_shape=jax.ShapeDtypeStruct((N, Ho * Wo, 1), jnp.float32),
        grid=(N,),
        in_specs=[
            pl.BlockSpec((1, Hin, Win, Cin), lambda n: (n, 0, 0, 0)),
            pl.BlockSpec((16 * Cin, 1), lambda n: (0, 0)),
            pl.BlockSpec(memory_space=pltpu.MemorySpace.SMEM),   # scalar bias
        ],
        out_specs=pl.BlockSpec((1, Ho * Wo, 1), lambda n: (n, 0, 0)),
        compiler_params=pltpu.CompilerParams(dimension_semantics=("parallel",)),
    )(x_nhwc.astype(jnp.bfloat16), w_flat.astype(jnp.bfloat16), b1)


# ---------------------------------------------------------------------------
# Parameter setup (deterministic, synthetic) + spectral norm (power iteration)
# ---------------------------------------------------------------------------
def _spectral_normalize(w_oihw, key, n_iter=1, eps=1e-12):
    """PyTorch-style spectral_norm: divide weight by power-iteration sigma."""
    cout = w_oihw.shape[0]
    wm = w_oihw.reshape(cout, -1)
    u = jax.random.normal(key, (cout,), jnp.float32)
    u = u / (jnp.linalg.norm(u) + eps)
    v = jnp.zeros((wm.shape[1],), jnp.float32)
    for _ in range(n_iter):
        v = wm.T @ u
        v = v / (jnp.linalg.norm(v) + eps)
        u = wm @ v
        u = u / (jnp.linalg.norm(u) + eps)
    sigma = u @ (wm @ v)
    return w_oihw / sigma


def _conv_params(key, cout, cin, kh, kw):
    """Conv2d-style init (uniform +-1/sqrt(fan_in)), spectral norm; -> HWIO, bias."""
    kw_key, kb_key, ku_key = jax.random.split(key, 3)
    fan_in = cin * kh * kw
    bound = 1.0 / np.sqrt(fan_in)
    w = jax.random.uniform(kw_key, (cout, cin, kh, kw), jnp.float32, -bound, bound)
    b = jax.random.uniform(kb_key, (cout,), jnp.float32, -bound, bound)
    w = _spectral_normalize(w, ku_key)
    w_hwio = jnp.transpose(w, (2, 3, 1, 0))     # (kh, kw, cin, cout)
    return w_hwio, b


# ---------------------------------------------------------------------------
# Modules
# ---------------------------------------------------------------------------
class DownConvBlockPallas:
    """Pallas port of DownConvBlock(in_ch, out_ch, norm_layer=nn.InstanceNorm2d, down).

    spectral_norm(Conv2d(in, out, 3, 1, 1, bias=True)) + InstanceNorm2d +
    LeakyReLU(0.1) [+ AvgPool2d(2,2)].  The conv bias is dropped because the
    affine-free InstanceNorm mean subtraction cancels it exactly (zero change).
    """

    def __init__(self, in_channel, out_channel, down=True, key=None):
        if key is None:
            key = jax.random.PRNGKey(1)
        w_hwio, _unused_bias = _conv_params(key, out_channel, in_channel, 3, 3)
        self.w = w_hwio.reshape(9 * in_channel, out_channel).astype(jnp.bfloat16)
        self.out_channel = out_channel
        self.down = down

    def __call__(self, x_nchw):
        x = jnp.transpose(x_nchw, (0, 2, 3, 1)).astype(jnp.bfloat16)   # NCHW -> NHWC
        N, H, W, _ = x.shape
        h = down_conv_block_call(x, self.w, pool=self.down)
        Ho, Wo = (H // 2, W // 2) if self.down else (H, W)
        return jnp.transpose(h.reshape(N, Ho, Wo, self.out_channel), (0, 3, 1, 2))


class DiscriminatorPallas:
    """Discriminator built from DownConvBlocks (norm_layer=nn.InstanceNorm2d):
    Block(nfc -> nfc//2, no down) -> Block(nfc//2 -> nfc//4, down)
    -> spectral_norm Conv2d(nfc//4, 1, 4, stride=2, pad=0)."""

    def __init__(self, nfc=512, key=None):
        if key is None:
            key = jax.random.PRNGKey(42)
        k1, k2, k3 = jax.random.split(key, 3)
        self.nfc = nfc
        w1, _ = _conv_params(k1, nfc // 2, nfc, 3, 3)        # bias dropped (IN cancels)
        self.w1 = w1.reshape(9 * nfc, nfc // 2).astype(jnp.bfloat16)
        w2, _ = _conv_params(k2, nfc // 4, nfc // 2, 3, 3)
        self.w2 = w2.reshape(9 * (nfc // 2), nfc // 4).astype(jnp.bfloat16)
        w3, b3 = _conv_params(k3, 1, nfc // 4, 4, 4)
        self.w3 = w3.reshape(16 * (nfc // 4), 1).astype(jnp.bfloat16)
        self.b3 = b3                                          # head bias kept (no norm)

    def __call__(self, x_nchw):
        x = jnp.transpose(x_nchw, (0, 2, 3, 1)).astype(jnp.bfloat16)   # NCHW -> NHWC
        N, H, W, _ = x.shape
        h1 = down_conv_block_call(x, self.w1, pool=False).reshape(N, H, W, -1)
        h2 = down_conv_block_call(h1, self.w2, pool=True).reshape(N, H // 2, W // 2, -1)
        out = conv4x4_s2_head_call(h2, self.w3, self.b3)      # (N, Ho*Wo, 1) f32
        # matches PyTorch out.view(-1): NCHW flatten with C=1 == NHWC flatten
        return out.reshape(-1)


if __name__ == "__main__":
    key = jax.random.PRNGKey(0)
    k_in, k_par, k_blk = jax.random.split(key, 3)

    nfc = 32                   # small stand-in for the default 512
    N, H, W = 2, 16, 16        # spatial 16 -> pool 8 -> final 4x4/s2 conv gives 3x3
    x = jax.random.normal(k_in, (N, nfc, H, W), jnp.float32)   # NCHW like PyTorch

    # Standalone DownConvBlock (the module under test).
    blk = DownConvBlockPallas(nfc, nfc // 2, down=True, key=k_blk)
    yb = blk(x)
    jax.block_until_ready(yb)
    assert yb.shape == (N, nfc // 2, H // 2, W // 2), yb.shape
    assert bool(jnp.all(jnp.isfinite(yb.astype(jnp.float32))))

    # Small discriminator built from DownConvBlocks (exercises both pool variants + head).
    disc = DiscriminatorPallas(nfc=nfc, key=k_par)
    out = disc(x)
    jax.block_until_ready(out)
    assert out.shape == (N * 3 * 3,), out.shape
    assert bool(jnp.all(jnp.isfinite(out)))
    print("KERNEL_OK")
</pallas_src>

<mosaic_0001>
module attributes {stable_mosaic.version = 11 : i64} {
  func.func @_conv3_in_lrelu_kernel(%arg0: i32, %arg1: i32, %arg2: memref<1x16x16x32xbf16, #tpu.memory_space<vmem>>, %arg3: memref<288x16xbf16, #tpu.memory_space<vmem>>, %arg4: memref<1x64x16xbf16, #tpu.memory_space<vmem>>, %arg5: memref<18x18x32xbf16, #tpu.memory_space<vmem>>, %arg6: memref<256x288xbf16, #tpu.memory_space<vmem>>) attributes {dimension_semantics = [#tpu.dimension_semantics<parallel>, #tpu.dimension_semantics<arbitrary>], iteration_bounds = array<i64: 2, 1>, scalar_prefetch = 0 : i64, scratch_operands = 2 : i64, tpu.core_type = #tpu.core_type<tc>, window_params = [{transform_indices = @transform_0, window_bounds = array<i64: 1, 16, 16, 32>}, {transform_indices = @transform_1, window_bounds = array<i64: 288, 16>}, {transform_indices = @transform_2, window_bounds = array<i64: 1, 64, 16>}]} {
    %c0_i32 = arith.constant 0 : i32
    %0 = arith.cmpi eq, %arg1, %c0_i32 : i32
    %1 = arith.extui %0 : i1 to i32
    %c0_i32_0 = arith.constant 0 : i32
    %2 = arith.cmpi ne, %1, %c0_i32_0 : i32
    scf.if %2 {
      %cst_15 = arith.constant 0.000000e+00 : bf16
      %45 = vector.broadcast %cst_15 : bf16 to vector<1x18x32xbf16>
      %cst_16 = arith.constant 0.000000e+00 : bf16
      %46 = vector.broadcast %cst_16 : bf16 to vector<18x1x32xbf16>
      %c0_17 = arith.constant 0 : index
      %c0_18 = arith.constant 0 : index
      %c0_19 = arith.constant 0 : index
      %47 = vector.load %arg5[%c0_17, %c0_18, %c0_19] : memref<18x18x32xbf16, #tpu.memory_space<vmem>>, vector<1x18x32xbf16>
      tpu.vector_store %arg5[%c0_17, %c0_18, %c0_19], %45 {strides = array<i32>} : memref<18x18x32xbf16, #tpu.memory_space<vmem>>, vector<1x18x32xbf16>,
      %c17 = arith.constant 17 : index
      %c0_20 = arith.constant 0 : index
      %c0_21 = arith.constant 0 : index
      %48 = vector.load %arg5[%c17, %c0_20, %c0_21] : memref<18x18x32xbf16, #tpu.memory_space<vmem>>, vector<1x18x32xbf16>
      tpu.vector_store %arg5[%c17, %c0_20, %c0_21], %45 {strides = array<i32>} : memref<18x18x32xbf16, #tpu.memory_space<vmem>>, vector<1x18x32xbf16>,
      %c0_22 = arith.constant 0 : index
      %c0_23 = arith.constant 0 : index
      %c0_24 = arith.constant 0 : index
      %49 = vector.load %arg5[%c0_22, %c0_23, %c0_24] : memref<18x18x32xbf16, #tpu.memory_space<vmem>>, vector<18x1x32xbf16>
      tpu.vector_store %arg5[%c0_22, %c0_23, %c0_24], %46 {strides = array<i32>} : memref<18x18x32xbf16, #tpu.memory_space<vmem>>, vector<18x1x32xbf16>,
      %c0_25 = arith.constant 0 : index
      %c17_26 = arith.constant 17 : index
      %c0_27 = arith.constant 0 : index
      %50 = vector.load %arg5[%c0_25, %c17_26, %c0_27] : memref<18x18x32xbf16, #tpu.memory_space<vmem>>, vector<18x1x32xbf16>
      tpu.vector_store %arg5[%c0_25, %c17_26, %c0_27], %46 {strides = array<i32>} : memref<18x18x32xbf16, #tpu.memory_space<vmem>>, vector<18x1x32xbf16>,
      %c0_28 = arith.constant 0 : index
      %c0_29 = arith.constant 0 : index
      %c0_30 = arith.constant 0 : index
      %c0_31 = arith.constant 0 : index
      %51 = vector.load %arg2[%c0_28, %c0_29, %c0_30, %c0_31] : memref<1x16x16x32xbf16, #tpu.memory_space<vmem>>, vector<1x16x16x32xbf16>
      %52 = vector.shape_cast %51 : vector<1x16x16x32xbf16> to vector<16x16x32xbf16>
      %c1 = arith.constant 1 : index
      %c1_32 = arith.constant 1 : index
      %c0_33 = arith.constant 0 : index
      %53 = vector.load %arg5[%c1, %c1_32, %c0_33] : memref<18x18x32xbf16, #tpu.memory_space<vmem>>, vector<16x16x32xbf16>
      tpu.vector_store %arg5[%c1, %c1_32, %c0_33], %52 {strides = array<i32>} : memref<18x18x32xbf16, #tpu.memory_space<vmem>>, vector<16x16x32xbf16>,
      %c0_34 = arith.constant 0 : index
      %c0_35 = arith.constant 0 : index
      %c0_36 = arith.constant 0 : index
      %54 = vector.load %arg5[%c0_34, %c0_35, %c0_36] : memref<18x18x32xbf16, #tpu.memory_space<vmem>>, vector<18x18x32xbf16>
      %55 = vector.extract_strided_slice %54 {offsets = [0, 0, 0], sizes = [16, 16, 32], strides = [1, 1, 1]} : vector<18x18x32xbf16> to vector<16x16x32xbf16>
      %56 = vector.shape_cast %55 : vector<16x16x32xbf16> to vector<256x32xbf16>
      %c0_37 = arith.constant 0 : index
      %c0_38 = arith.constant 0 : index
      %57 = vector.load %arg6[%c0_37, %c0_38] : memref<256x288xbf16, #tpu.memory_space<vmem>>, vector<256x32xbf16>
      tpu.vector_store %arg6[%c0_37, %c0_38], %56 {strides = array<i32>} : memref<256x288xbf16, #tpu.memory_space<vmem>>, vector<256x32xbf16>,
      %58 = vector.extract_strided_slice %54 {offsets = [0, 1, 0], sizes = [16, 16, 32], strides = [1, 1, 1]} : vector<18x18x32xbf16> to vector<16x16x32xbf16>
      %59 = vector.shape_cast %58 : vector<16x16x32xbf16> to vector<256x32xbf16>
      %c0_39 = arith.constant 0 : index
      %c32 = arith.constant 32 : index
      %60 = vector.load %arg6[%c0_39, %c32] : memref<256x288xbf16, #tpu.memory_space<vmem>>, vector<256x32xbf16>
      tpu.vector_store %arg6[%c0_39, %c32], %59 {strides = array<i32>} : memref<256x288xbf16, #tpu.memory_space<vmem>>, vector<256x32xbf16>,
      %61 = vector.extract_strided_slice %54 {offsets = [0, 2, 0], sizes = [16, 16, 32], strides = [1, 1, 1]} : vector<18x18x32xbf16> to vector<16x16x32xbf16>
      %62 = vector.shape_cast %61 : vector<16x16x32xbf16> to vector<256x32xbf16>
      %c0_40 = arith.constant 0 : index
      %c64 = arith.constant 64 : index
      %63 = vector.load %arg6[%c0_40, %c64] : memref<256x288xbf16, #tpu.memory_space<vmem>>, vector<256x32xbf16>
      tpu.vector_store %arg6[%c0_40, %c64], %62 {strides = array<i32>} : memref<256x288xbf16, #tpu.memory_space<vmem>>, vector<256x32xbf16>,
      %64 = vector.extract_strided_slice %54 {offsets = [1, 0, 0], sizes = [16, 16, 32], strides = [1, 1, 1]} : vector<18x18x32xbf16> to vector<16x16x32xbf16>
      %65 = vector.shape_cast %64 : vector<16x16x32xbf16> to vector<256x32xbf16>
      %c0_41 = arith.constant 0 : index
      %c96 = arith.constant 96 : index
      %66 = vector.load %arg6[%c0_41, %c96] : memref<256x288xbf16, #tpu.memory_space<vmem>>, vector<256x32xbf16>
      tpu.vector_store %arg6[%c0_41, %c96], %65 {strides = array<i32>} : memref<256x288xbf16, #tpu.memory_space<vmem>>, vector<256x32xbf16>,
      %67 = vector.extract_strided_slice %54 {offsets = [1, 1, 0], sizes = [16, 16, 32], strides = [1, 1, 1]} : vector<18x18x32xbf16> to vector<16x16x32xbf16>
      %68 = vector.shape_cast %67 : vector<16x16x32xbf16> to vector<256x32xbf16>
      %c0_42 = arith.constant 0 : index
      %c128 = arith.constant 128 : index
      %69 = vector.load %arg6[%c0_42, %c128] : memref<256x288xbf16, #tpu.memory_space<vmem>>, vector<256x32xbf16>
      tpu.vector_store %arg6[%c0_42, %c128], %68 {strides = array<i32>} : memref<256x288xbf16, #tpu.memory_space<vmem>>, vector<256x32xbf16>,
      %70 = vector.extract_strided_slice %54 {offsets = [1, 2, 0], sizes = [16, 16, 32], strides = [1, 1, 1]} : vector<18x18x32xbf16> to vector<16x16x32xbf16>
      %71 = vector.shape_cast %70 : vector<16x16x32xbf16> to vector<256x32xbf16>
      %c0_43 = arith.constant 0 : index
      %c160 = arith.constant 160 : index
      %72 = vector.load %arg6[%c0_43, %c160] : memref<256x288xbf16, #tpu.memory_space<vmem>>, vector<256x32xbf16>
      tpu.vector_store %arg6[%c0_43, %c160], %71 {strides = array<i32>} : memref<256x288xbf16, #tpu.memory_space<vmem>>, vector<256x32xbf16>,
      %73 = vector.extract_strided_slice %54 {offsets = [2, 0, 0], sizes = [16, 16, 32], strides = [1, 1, 1]} : vector<18x18x32xbf16> to vector<16x16x32xbf16>
      %74 = vector.shape_cast %73 : vector<16x16x32xbf16> to vector<256x32xbf16>
      %c0_44 = arith.constant 0 : index
      %c192 = arith.constant 192 : index
      %75 = vector.load %arg6[%c0_44, %c192] : memref<256x288xbf16, #tpu.memory_space<vmem>>, vector<256x32xbf16>
      tpu.vector_store %arg6[%c0_44, %c192], %74 {strides = array<i32>} : memref<256x288xbf16, #tpu.memory_space<vmem>>, vector<256x32xbf16>,
      %76 = vector.extract_strided_slice %54 {offsets = [2, 1, 0], sizes = [16, 16, 32], strides = [1, 1, 1]} : vector<18x18x32xbf16> to vector<16x16x32xbf16>
      %77 = vector.shape_cast %76 : vector<16x16x32xbf16> to vector<256x32xbf16>
      %c0_45 = arith.constant 0 : index
      %c224 = arith.constant 224 : index
      %78 = vector.load %arg6[%c0_45, %c224] : memref<256x288xbf16, #tpu.memory_space<vmem>>, vector<256x32xbf16>
      tpu.vector_store %arg6[%c0_45, %c224], %77 {strides = array<i32>} : memref<256x288xbf16, #tpu.memory_space<vmem>>, vector<256x32xbf16>,
      %79 = vector.extract_strided_slice %54 {offsets = [2, 2, 0], sizes = [16, 16, 32], strides = [1, 1, 1]} : vector<18x18x32xbf16> to vector<16x16x32xbf16>
      %80 = vector.shape_cast %79 : vector<16x16x32xbf16> to vector<256x32xbf16>
      %c0_46 = arith.constant 0 : index
      %c256 = arith.constant 256 : index
      %81 = vector.load %arg6[%c0_46, %c256] : memref<256x288xbf16, #tpu.memory_space<vmem>>, vector<256x32xbf16>
      tpu.vector_store %arg6[%c0_46, %c256], %80 {strides = array<i32>} : memref<256x288xbf16, #tpu.memory_space<vmem>>, vector<256x32xbf16>,
    } else {
    }
    %c0 = arith.constant 0 : index
    %c0_1 = arith.constant 0 : index
    %3 = vector.load %arg6[%c0, %c0_1] : memref<256x288xbf16, #tpu.memory_space<vmem>>, vector<256x288xbf16>
    %c0_2 = arith.constant 0 : index
    %c0_3 = arith.constant 0 : index
    %4 = vector.load %arg3[%c0_2, %c0_3] : memref<288x16xbf16, #tpu.memory_space<vmem>>, vector<288x16xbf16>
    %cst = arith.constant dense<0.000000e+00> : vector<256x16xf32>
    %5 = tpu.matmul %3, %4, %cst {dimension_numbers = #tpu.dot_dimension_numbers<[1], [0], [0], [1], [0, 0, 1, 1], [], []>} : vector<256x288xbf16>, vector<288x16xbf16>, vector<256x16xf32> -> vector<256x16xf32>
    %cst_4 = arith.constant dense<0.000000e+00> : vector<16xf32>
    %6 = vector.multi_reduction <add>, %5, %cst_4 [0] : vector<256x16xf32> to vector<16xf32>
    %7 = vector.shape_cast %6 : vector<16xf32> to vector<1x16xf32>
    %cst_5 = arith.constant 3.906250e-03 : f32
    %8 = vector.broadcast %cst_5 : f32 to vector<1x16xf32>
    %9 = arith.mulf %7, %8 : vector<1x16xf32>
    %10 = vector.broadcast %9 : vector<1x16xf32> to vector<256x16xf32>
    %11 = arith.subf %5, %10 : vector<256x16xf32>
    %12 = arith.mulf %11, %11 : vector<256x16xf32>
    %cst_6 = arith.constant dense<0.000000e+00> : vector<16xf32>
    %13 = vector.multi_reduction <add>, %12, %cst_6 [0] : vector<256x16xf32> to vector<16xf32>
    %14 = vector.shape_cast %13 : vector<16xf32> to vector<1x16xf32>
    %cst_7 = arith.constant 3.906250e-03 : f32
    %15 = vector.broadcast %cst_7 : f32 to vector<1x16xf32>
    %16 = arith.mulf %14, %15 : vector<1x16xf32>
    %cst_8 = arith.constant 9.99999974E-6 : f32
    %17 = vector.broadcast %cst_8 : f32 to vector<1x16xf32>
    %18 = arith.addf %16, %17 : vector<1x16xf32>
    %19 = math.rsqrt %18 : vector<1x16xf32>
    %20 = vector.broadcast %19 : vector<1x16xf32> to vector<256x16xf32>
    %21 = arith.mulf %11, %20 : vector<256x16xf32>
    %cst_9 = arith.constant 0.000000e+00 : f32
    %22 = vector.broadcast %cst_9 : f32 to vector<256x16xf32>
    %23 = arith.cmpf oge, %21, %22 : vector<256x16xf32>
    %cst_10 = arith.constant 1.000000e-01 : f32
    %24 = vector.broadcast %cst_10 : f32 to vector<256x16xf32>
    %25 = arith.mulf %24, %21 : vector<256x16xf32>
    %26 = arith.select %23, %21, %25 : vector<256x16xi1>, vector<256x16xf32>
    %27 = vector.shape_cast %26 : vector<256x16xf32> to vector<16x8x2x16xf32>
    %28 = vector.extract_strided_slice %27 {offsets = [0, 0, 0, 0], sizes = [16, 8, 1, 16], strides = [1, 1, 1, 1]} : vector<16x8x2x16xf32> to vector<16x8x1x16xf32>
    %29 = vector.shape_cast %28 : vector<16x8x1x16xf32> to vector<16x8x16xf32>
    %30 = vector.extract_strided_slice %27 {offsets = [0, 0, 1, 0], sizes = [16, 8, 1, 16], strides = [1, 1, 1, 1]} : vector<16x8x2x16xf32> to vector<16x8x1x16xf32>
    %31 = vector.shape_cast %30 : vector<16x8x1x16xf32> to vector<16x8x16xf32>
    %32 = arith.addf %29, %31 : vector<16x8x16xf32>
    %33 = vector.shape_cast %32 : vector<16x8x16xf32> to vector<8x2x8x16xf32>
    %34 = vector.extract_strided_slice %33 {offsets = [0, 0, 0, 0], sizes = [8, 1, 8, 16], strides = [1, 1, 1, 1]} : vector<8x2x8x16xf32> to vector<8x1x8x16xf32>
    %35 = vector.shape_cast %34 : vector<8x1x8x16xf32> to vector<8x8x16xf32>
    %36 = vector.extract_strided_slice %33 {offsets = [0, 1, 0, 0], sizes = [8, 1, 8, 16], strides = [1, 1, 1, 1]} : vector<8x2x8x16xf32> to vector<8x1x8x16xf32>
    %37 = vector.shape_cast %36 : vector<8x1x8x16xf32> to vector<8x8x16xf32>
    %38 = arith.addf %35, %37 : vector<8x8x16xf32>
    %cst_11 = arith.constant 2.500000e-01 : f32
    %39 = vector.broadcast %cst_11 : f32 to vector<8x8x16xf32>
    %40 = arith.mulf %38, %39 : vector<8x8x16xf32>
    %41 = vector.shape_cast %40 : vector<8x8x16xf32> to vector<64x16xf32>
    %42 = vector.shape_cast %41 : vector<64x16xf32> to vector<1x64x16xf32>
    %43 = arith.truncf %42 : vector<1x64x16xf32> to vector<1x64x16xbf16>
    %c0_12 = arith.constant 0 : index
    %c0_13 = arith.constant 0 : index
    %c0_14 = arith.constant 0 : index
    %44 = vector.load %arg4[%c0_12, %c0_13, %c0_14] : memref<1x64x16xbf16, #tpu.memory_space<vmem>>, vector<1x64x16xbf16>
    tpu.vector_store %arg4[%c0_12, %c0_13, %c0_14], %43 {strides = array<i32>} : memref<1x64x16xbf16, #tpu.memory_space<vmem>>, vector<1x64x16xbf16>,
    return
  }
  func.func @transform_0(%arg0: i32, %arg1: i32) -> (i32, i32, i32, i32) {
    %c0_i32 = arith.constant 0 : i32
    %c0_i32_0 = arith.constant 0 : i32
    %c0_i32_1 = arith.constant 0 : i32
    %c0_i32_2 = arith.constant 0 : i32
    return %arg0, %c0_i32, %c0_i32_0, %c0_i32_1 : i32, i32, i32, i32
  }
  func.func @transform_1(%arg0: i32, %arg1: i32) -> (i32, i32) {
    %c0_i32 = arith.constant 0 : i32
    %c0_i32_0 = arith.constant 0 : i32
    return %c0_i32, %arg1 : i32, i32
  }
  func.func @transform_2(%arg0: i32, %arg1: i32) -> (i32, i32, i32) {
    %c0_i32 = arith.constant 0 : i32
    %c0_i32_0 = arith.constant 0 : i32
    return %arg0, %c0_i32, %arg1 : i32, i32, i32
  }
}

</mosaic_0001>

<llo_original>
// kernel: tpu_custom_call.1
$region0: #{tpu_custom_call.1}
  #allocation0 [shape = 'u32[]', space=smem, size = 0x4, offset = 0x4, fixed_abs, tag = 'smem constant byte address 0x4 - core index']
  #allocation1 [shape = 'u32[144,128]{1,0:T(1,128)}', space=vmem, size = 0x12000, scoped, tag = 'internal scratch']
  #allocation2 [shape = 'bf16[18,18,32]{2,1,0:T(8,128)(2,1)}', space=vmem, size = 0x1b000, scoped, tag = 'scratch operand']
  #allocation3 [shape = 'bf16[256,288]{1,0:T(16,128)(2,1)}', space=vmem, size = 0x30000, scoped, tag = 'scratch operand']
  %s0 = inlined_call_operand.hbm [shape: bf16[2,16,16,32], index: 0, kind: input, shape index: {}]
  %s1 = inlined_call_operand.hbm [shape: bf16[288,16], index: 1, kind: input, shape index: {}]
  %s2 = inlined_call_operand.hbm [shape: bf16[2,64,16], index: 2, kind: output, shape index: {}]
  %s3 = sld [smem:[#allocation0]]
  $region53: #{tpu_custom_call.1} parent=0
    _
  %s5 = ssub.s32 1, %s3
  %s6 = scalar_select 0, %s5, %s3
  $region1: #{tpu_custom_call.1} parent=0
    #allocation4 [shape = 'u8[131072]{0}', space=vmem, size = 0x20000, scoped, tag = 'input window, operand 0']
    #allocation5 [shape = 's32[2]{0}', space=sflag, size = 0x8, scoped, tag = 'scoped memory for tpu_custom_call.1']
    #allocation6 [shape = 's32[2]{0}', space=sflag, size = 0x8, scoped, tag = 'scoped memory for tpu_custom_call.1']
    #allocation7 [shape = 'u8[73728]{0}', space=vmem, size = 0x12000, scoped, tag = 'input window, operand 1, single buffered']
    #allocation8 [shape = 's32[1]{0}', space=sflag, size = 0x4, scoped, tag = 'scoped memory for tpu_custom_call.1']
    #allocation9 [shape = 'u8[32768]{0}', space=vmem, size = 0x8000, scoped, tag = 'output window, operand 0']
    %7 = vsyncpa [#allocation5], 0
    %s8 = scalar_lea.sflag [#allocation5], 1
    %9 = vsyncpa %s8, 0
    %10 = vsyncpa [#allocation8], 0
    %11 = vsyncpa [#allocation6], 0
    %s12 = scalar_lea.sflag [#allocation6], 1
    %13 = vsyncpa %s12, 0
    loop: start=0, step=1, limit=4
    $region2: #{tpu_custom_call.1} parent=1 // loop_pre_header
      _
    $region3: #{tpu_custom_call.1} parent=1 // loop_header
      %s15 = sphi 0, %s19
      %p16 = scmp.ge.s32.totalorder %s15, 4
      %s22 = sphi 0, %s34
      %s23 = sphi 0, %s30
      %s24 = sphi 0, %s22
      %s25 = sphi 0, %s23
      %s26 = sphi 0, %s24
      %s27 = sphi 0, %s25
      %s37 = sphi 0, %s39
      %s40 = sphi 0, %s37
      %s41 = sphi 0, %s40
      %s57 = sphi 0, %s41
      %s63 = sphi 0, %s65
      %s66 = sphi 0, %s63
      %s67 = sphi 0, %s66
      %s83 = sphi 0, %s67
      %s91 = sphi 0, %s93
      %s94 = sphi 0, %s91
      %s95 = sphi 0, %s94
      %s111 = sphi 0, %s95
    $region4: #{tpu_custom_call.1} parent=1 // loop_header_branch
      %18 = sbr.rel (%p16) target = $region8
    $region5: #{tpu_custom_call.1} parent=1 // loop_body
      %s20 = ssub.s32 %s15, 1
      %s21 = ssub.s32 %s15, 2
      %s28 = sadd.s32 1, %s23
      %p29 = scmp.ge.s32.totalorder %s28, 1
      %s30 = scalar_select %p29, 0, %s28
      %s31 = sadd.s32 1, %s22
      %s32 = scalar_select %p29, %s31, %s22
      %p33 = scmp.ge.s32.totalorder %s32, 2
      %s34 = scalar_select %p33, 0, %s32
      %s35 = ssub.s32 %s22, %s34
      %p36 = scmp.eq.s32.totalorder %s35, 0
      %s38 = sadd.s32 %s37, 1
      %s39 = scalar_select %p36, %s37, %s38
      %p42 = pneg %p36
      %p43 = scmp.eq.s32.totalorder %s15, 1
      %p44 = por %p42, %p43
      %p45 = scmp.ne.s32.totalorder %s37, %s40
      %p46 = scmp.eq.s32.totalorder %s15, 0
      %p47 = por %p45, %p46
      %p48 = scmp.ne.s32.totalorder %s37, %s40
      %p49 = scmp.eq.s32.totalorder %s20, 1
      %p50 = por %p48, %p49
      %p51 = scmp.ne.s32.totalorder %s40, %s41
      %p52 = scmp.eq.s32.totalorder %s20, 0
      %p53 = por %p51, %p52
      %p54 = scmp.ne.s32.totalorder %s40, %s41
      %p55 = scmp.eq.s32.totalorder %s21, 1
      %p56 = por %p54, %p55
      %p58 = scmp.ne.s32.totalorder %s41, %s57
      %p59 = scmp.eq.s32.totalorder %s21, 0
      %p60 = por %p58, %p59
      %s61 = ssub.s32 %s23, %s30
      %p62 = scmp.eq.s32.totalorder %s61, 0
      %s64 = sadd.s32 %s63, 1
      %s65 = scalar_select %p62, %s63, %s64
      %p68 = pneg %p62
      %p69 = scmp.eq.s32.totalorder %s15, 1
      %p70 = por %p68, %p69
      %p71 = scmp.ne.s32.totalorder %s63, %s66
      %p72 = scmp.eq.s32.totalorder %s15, 0
      %p73 = por %p71, %p72
      %p74 = scmp.ne.s32.totalorder %s63, %s66
      %p75 = scmp.eq.s32.totalorder %s20, 1
      %p76 = por %p74, %p75
      %p77 = scmp.ne.s32.totalorder %s66, %s67
      %p78 = scmp.eq.s32.totalorder %s20, 0
      %p79 = por %p77, %p78
      %p80 = scmp.ne.s32.totalorder %s66, %s67
      %p81 = scmp.eq.s32.totalorder %s21, 1
      %p82 = por %p80, %p81
      %p84 = scmp.ne.s32.totalorder %s67, %s83
      %p85 = scmp.eq.s32.totalorder %s21, 0
      %p86 = por %p84, %p85
      %s87 = ssub.s32 %s22, %s34
      %s88 = ssub.s32 %s23, %s30
      %s89 = sor.u32 %s87, %s88
      %p90 = scmp.eq.s32.totalorder %s89, 0
      %s92 = sadd.s32 %s91, 1
      %s93 = scalar_select %p90, %s91, %s92
      %p96 = pneg %p90
      %p97 = scmp.eq.s32.totalorder %s15, 1
      %p98 = por %p96, %p97
      %p99 = scmp.ne.s32.totalorder %s91, %s94
      %p100 = scmp.eq.s32.totalorder %s15, 0
      %p101 = por %p99, %p100
      %p102 = scmp.ne.s32.totalorder %s91, %s94
      %p103 = scmp.eq.s32.totalorder %s20, 1
      %p104 = por %p102, %p103
      %p105 = scmp.ne.s32.totalorder %s94, %s95
      %p106 = scmp.eq.s32.totalorder %s20, 0
      %p107 = por %p105, %p106
      %p108 = scmp.ne.s32.totalorder %s94, %s95
      %p109 = scmp.eq.s32.totalorder %s21, 1
      %p110 = por %p108, %p109
      %p112 = scmp.ne.s32.totalorder %s95, %s111
      %p113 = scmp.eq.s32.totalorder %s21, 0
      %p114 = por %p112, %p113
      %p115 = scmp.le.s32.totalorder 1, %s15
      %p116 = scmp.lt.s32.totalorder %s15, 3
      %p117 = pnand %p115, %p116
      %p118 = pneg %p117
      // Predicated region
      $region9: #{tpu_custom_call.1} parent=5 // pred_check
        _
      $region10: #{tpu_custom_call.1} parent=5 // pred_check_branch
        %120 = sbr.rel (%p117) target = $region12
      $region11: #{tpu_custom_call.1} parent=5 // pred_region
        %s121 = ssub.s32 %s15, 1
        // Predicated region
        $region13: #{tpu_custom_call.1} parent=11 // pred_check
          %p122 = pneg %p79
        $region14: #{tpu_custom_call.1} parent=11 // pred_check_branch
          %124 = sbr.rel (%p122) target = $region16
        $region15: #{tpu_custom_call.1} parent=11 // pred_region
          %s126 = ssub.s32 2304, 2304
          %127 = vsyncadd [#allocation8], %s126
          %s128 = smul.addr %s25, 64
          %s129 = scalar_lea.hbm %s1, %s128
          %s130 = sshll.u32 [#allocation7], 4
          %s131 = int_to_ptr.vmem [resolvable:$true] %s130
          %136 = dma.hbm_to_vmem [thread:$0]  %s129, 2304, %s131, [#allocation8], 64, 64, 4
        $region16: #{tpu_custom_call.1} parent=11 // pred_fallthru
          _
      $region12: #{tpu_custom_call.1} parent=5 // pred_fallthru
        _
      %p137 = scmp.lt.s32.totalorder %s15, 2
      // Predicated region
      $region17: #{tpu_custom_call.1} parent=5 // pred_check
        %p138 = pneg %p137
      $region18: #{tpu_custom_call.1} parent=5 // pred_check_branch
        %140 = sbr.rel (%p138) target = $region20
      $region19: #{tpu_custom_call.1} parent=5 // pred_region
        // Predicated region
        $region21: #{tpu_custom_call.1} parent=19 // pred_check
          %p141 = pneg %p47
        $region22: #{tpu_custom_call.1} parent=19 // pred_check_branch
          %143 = sbr.rel (%p141) target = $region24
        $region23: #{tpu_custom_call.1} parent=19 // pred_region
          %s144 = sand.u32 %s37, 1
          %s145 = scalar_lea.sflag [#allocation5], %s144
          %s146 = sand.u32 %s37, 1
          %s147 = smul.addr %s146, 128
          %s148 = scalar_lea.vmem [#allocation4], %s147
          %s150 = ssub.s32 2048, 2048
          %151 = vsyncadd %s145, %s150
          %s152 = smul.addr %s22, 32
          %s153 = smul.addr %s152, 64
          %s154 = scalar_lea.hbm %s0, %s153
          %s155 = sshll.u32 %s148, 4
          %s156 = int_to_ptr.vmem [resolvable:$true] %s155
          %161 = dma.hbm_to_vmem [thread:$0]  %s154, 2048, %s156, %s145, 64, 64, 4
        $region24: #{tpu_custom_call.1} parent=19 // pred_fallthru
          _
      $region20: #{tpu_custom_call.1} parent=5 // pred_fallthru
        _
      %p162 = scmp.le.s32.totalorder 1, %s15
      %p163 = scmp.lt.s32.totalorder %s15, 3
      %p164 = pnand %p162, %p163
      %p165 = pneg %p164
      // Predicated region
      $region25: #{tpu_custom_call.1} parent=5 // pred_check
        _
      $region26: #{tpu_custom_call.1} parent=5 // pred_check_branch
        %167 = sbr.rel (%p164) target = $region28
      $region27: #{tpu_custom_call.1} parent=5 // pred_region
        %s168 = ssub.s32 %s15, 1
        %s169 = sand.u32 %s40, 1
        %s170 = scalar_lea.sflag [#allocation5], %s169
        %s171 = sand.u32 %s40, 1
        %s172 = smul.addr %s171, 128
        %s173 = scalar_lea.vmem [#allocation4], %s172
        // Predicated region
        $region29: #{tpu_custom_call.1} parent=27 // pred_check
          %p174 = pneg %p53
        $region30: #{tpu_custom_call.1} parent=27 // pred_check_branch
          %176 = sbr.rel (%p174) target = $region32
        $region31: #{tpu_custom_call.1} parent=27 // pred_region
          %177 = dma.done %s170, 2048
        $region32: #{tpu_custom_call.1} parent=27 // pred_fallthru
          _
        // Predicated region
        $region33: #{tpu_custom_call.1} parent=27 // pred_check
          %p178 = pneg %p79
        $region34: #{tpu_custom_call.1} parent=27 // pred_check_branch
          %180 = sbr.rel (%p178) target = $region36
        $region35: #{tpu_custom_call.1} parent=27 // pred_region
          %181 = dma.done [#allocation8], 2304
        $region36: #{tpu_custom_call.1} parent=27 // pred_fallthru
          _
        %s182 = sand.u32 %s40, 1
        %s183 = scalar_lea.sflag [#allocation5], %s182
        %s184 = sand.u32 %s40, 1
        %s185 = smul.addr %s184, 128
        %s186 = scalar_lea.vmem [#allocation4], %s185
        %p187 = pneg %p53
        %p188 = pneg %p50
        %p189 = pneg %p79
        %p190 = pneg %p76
        %p191 = pneg %p107
        %p192 = pneg %p104
        %s193 = sand.u32 %s94, 1
        %s194 = scalar_lea.sflag [#allocation6], %s193
        %s195 = sand.u32 %s94, 1
        %s196 = smul.addr %s195, 32
        %s197 = scalar_lea.vmem [#allocation9], %s196
        %p199 = scmp.eq.s32.totalorder %s25, 0
        // Predicated region
        $region37: #{tpu_custom_call.1} parent=27 // pred_check
          %p200 = pneg %p199
        $region38: #{tpu_custom_call.1} parent=27 // pred_check_branch
          %202 = sbr.rel (%p200) target = $region40
        $region39: #{tpu_custom_call.1} parent=27 // pred_region
          %vm203 = vcmask 257024
          %204 = vst.msk [vmem:[#allocation2] sm:$0xf] %vm203, 0
          %205 = vst.msk [vmem:[#allocation2 + $0x4] sm:$0xf] %vm203, 0
          %vm206 = vcmask 253952
          %207 = vst.msk [vmem:[#allocation2 + $0x8] sm:$0x1] %vm206, 0
          %s208 = scalar_lea.vmem [#allocation2], 204
          %209 = vst.msk [vmem:[%s208] sm:$0xf] %vm203, 0
          %210 = vst.msk [vmem:[%s208 + $0x4] sm:$0xf] %vm203, 0
          %211 = vst.msk [vmem:[%s208 + $0x8] sm:$0x1] %vm206, 0
          %vm212 = vcmask 253952
          %vm213 = vsmask.f32 256
          %vm214 = vmand %vm212, %vm213
          %v215 = vld [vmem:[#allocation2] sm:$0x1]
          %v216 = vsel %vm214, 0, %v215
          %217 = vst [vmem:[#allocation2] sm:$0x1] %v216
          %v218 = vld [vmem:[#allocation2 + $0xc] sm:$0x1]
          %v219 = vsel %vm214, 0, %v218
          %220 = vst [vmem:[#allocation2 + $0xc] sm:$0x1] %v219
          %v221 = vld [vmem:[#allocation2 + $0x18] sm:$0x1]
          %v222 = vsel %vm214, 0, %v221
          %223 = vst [vmem:[#allocation2 + $0x18] sm:$0x1] %v222
          %v224 = vld [vmem:[#allocation2 + $0x24] sm:$0x1]
          %v225 = vsel %vm214, 0, %v224
          %226 = vst [vmem:[#allocation2 + $0x24] sm:$0x1] %v225
          %v227 = vld [vmem:[#allocation2 + $0x30] sm:$0x1]
          %v228 = vsel %vm214, 0, %v227
          %229 = vst [vmem:[#allocation2 + $0x30] sm:$0x1] %v228
          %v230 = vld [vmem:[#allocation2 + $0x3c] sm:$0x1]
          %v231 = vsel %vm214, 0, %v230
          %232 = vst [vmem:[#allocation2 + $0x3c] sm:$0x1] %v231
          %v233 = vld [vmem:[#allocation2 + $0x48] sm:$0x1]
          %v234 = vsel %vm214, 0, %v233
          %235 = vst [vmem:[#allocation2 + $0x48] sm:$0x1] %v234
          %v236 = vld [vmem:[#allocation2 + $0x54] sm:$0x1]
          %v237 = vsel %vm214, 0, %v236
          %238 = vst [vmem:[#allocation2 + $0x54] sm:$0x1] %v237
          %v239 = vld [vmem:[#allocation2 + $0x60] sm:$0x1]
          %v240 = vsel %vm214, 0, %v239
          %241 = vst [vmem:[#allocation2 + $0x60] sm:$0x1] %v240
          %v242 = vld [vmem:[#allocation2 + $0x6c] sm:$0x1]
          %v243 = vsel %vm214, 0, %v242
          %244 = vst [vmem:[#allocation2 + $0x6c] sm:$0x1] %v243
          %v245 = vld [vmem:[#allocation2 + $0x78] sm:$0x1]
          %v246 = vsel %vm214, 0, %v245
          %247 = vst [vmem:[#allocation2 + $0x78] sm:$0x1] %v246
          %v248 = vld [vmem:[#allocation2 + $0x84] sm:$0x1]
          %v249 = vsel %vm214, 0, %v248
          %250 = vst [vmem:[#allocation2 + $0x84] sm:$0x1] %v249
          %v251 = vld [vmem:[#allocation2 + $0x90] sm:$0x1]
          %v252 = vsel %vm214, 0, %v251
          %253 = vst [vmem:[#allocation2 + $0x90] sm:$0x1] %v252
          %v254 = vld [vmem:[#allocation2 + $0x9c] sm:$0x1]
          %v255 = vsel %vm214, 0, %v254
          %256 = vst [vmem:[#allocation2 + $0x9c] sm:$0x1] %v255
          %v257 = vld [vmem:[#allocation2 + $0xa8] sm:$0x1]
          %v258 = vsel %vm214, 0, %v257
          %259 = vst [vmem:[#allocation2 + $0xa8] sm:$0x1] %v258
          %v260 = vld [vmem:[#allocation2 + $0xb4] sm:$0x1]
          %v261 = vsel %vm214, 0, %v260
          %262 = vst [vmem:[#allocation2 + $0xb4] sm:$0x1] %v261
          %v263 = vld [vmem:[#allocation2 + $0xc0] sm:$0x1]
          %v264 = vsel %vm214, 0, %v263
          %265 = vst [vmem:[#allocation2 + $0xc0] sm:$0x1] %v264
          %v266 = vld [vmem:[#allocation2 + $0xcc] sm:$0x1]
          %v267 = vsel %vm214, 0, %v266
          %268 = vst [vmem:[#allocation2 + $0xcc] sm:$0x1] %v267
          %vm269 = vsmask.f32 7938
          %vm270 = vmand %vm212, %vm269
          %v271 = vld [vmem:[#allocation2 + $0x8] sm:$0x1]
          %v272 = vsel %vm270, 0, %v271
          %273 = vst [vmem:[#allocation2 + $0x8] sm:$0x1] %v272
          %v274 = vld [vmem:[#allocation2 + $0x14] sm:$0x1]
          %v275 = vsel %vm270, 0, %v274
          %276 = vst [vmem:[#allocation2 + $0x14] sm:$0x1] %v275
          %v277 = vld [vmem:[#allocation2 + $0x20] sm:$0x1]
          %v278 = vsel %vm270, 0, %v277
          %279 = vst [vmem:[#allocation2 + $0x20] sm:$0x1] %v278
          %v280 = vld [vmem:[#allocation2 + $0x2c] sm:$0x1]
          %v281 = vsel %vm270, 0, %v280
          %282 = vst [vmem:[#allocation2 + $0x2c] sm:$0x1] %v281
          %v283 = vld [vmem:[#allocation2 + $0x38] sm:$0x1]
          %v284 = vsel %vm270, 0, %v283
          %285 = vst [vmem:[#allocation2 + $0x38] sm:$0x1] %v284
          %v286 = vld [vmem:[#allocation2 + $0x44] sm:$0x1]
          %v287 = vsel %vm270, 0, %v286
          %288 = vst [vmem:[#allocation2 + $0x44] sm:$0x1] %v287
          %v289 = vld [vmem:[#allocation2 + $0x50] sm:$0x1]
          %v290 = vsel %vm270, 0, %v289
          %291 = vst [vmem:[#allocation2 + $0x50] sm:$0x1] %v290
          %v292 = vld [vmem:[#allocation2 + $0x5c] sm:$0x1]
          %v293 = vsel %vm270, 0, %v292
          %294 = vst [vmem:[#allocation2 + $0x5c] sm:$0x1] %v293
          %v295 = vld [vmem:[#allocation2 + $0x68] sm:$0x1]
          %v296 = vsel %vm270, 0, %v295
          %297 = vst [vmem:[#allocation2 + $0x68] sm:$0x1] %v296
          %v298 = vld [vmem:[#allocation2 + $0x74] sm:$0x1]
          %v299 = vsel %vm270, 0, %v298
          %300 = vst [vmem:[#allocation2 + $0x74] sm:$0x1] %v299
          %v301 = vld [vmem:[#allocation2 + $0x80] sm:$0x1]
          %v302 = vsel %vm270, 0, %v301
          %303 = vst [vmem:[#allocation2 + $0x80] sm:$0x1] %v302
          %v304 = vld [vmem:[#allocation2 + $0x8c] sm:$0x1]
          %v305 = vsel %vm270, 0, %v304
          %306 = vst [vmem:[#allocation2 + $0x8c] sm:$0x1] %v305
          %v307 = vld [vmem:[#allocation2 + $0x98] sm:$0x1]
          %v308 = vsel %vm270, 0, %v307
          %309 = vst [vmem:[#allocation2 + $0x98] sm:$0x1] %v308
          %v310 = vld [vmem:[#allocation2 + $0xa4] sm:$0x1]
          %v311 = vsel %vm270, 0, %v310
          %312 = vst [vmem:[#allocation2 + $0xa4] sm:$0x1] %v311
          %v313 = vld [vmem:[#allocation2 + $0xb0] sm:$0x1]
          %v314 = vsel %vm270, 0, %v313
          %315 = vst [vmem:[#allocation2 + $0xb0] sm:$0x1] %v314
          %v316 = vld [vmem:[#allocation2 + $0xbc] sm:$0x1]
          %v317 = vsel %vm270, 0, %v316
          %318 = vst [vmem:[#allocation2 + $0xbc] sm:$0x1] %v317
          %v319 = vld [vmem:[#allocation2 + $0xc8] sm:$0x1]
          %v320 = vsel %vm270, 0, %v319
          %321 = vst [vmem:[#allocation2 + $0xc8] sm:$0x1] %v320
          %v322 = vld [vmem:[#allocation2 + $0xd4] sm:$0x1]
          %v323 = vsel %vm270, 0, %v322
          %324 = vst [vmem:[#allocation2 + $0xd4] sm:$0x1] %v323
          %v325 = vld [vmem:[%s173] sm:$0xf]
          %v326 = vld [vmem:[%s173 + $0x4] sm:$0xf]
          %v327 = vld [vmem:[%s173 + $0x8] sm:$0xf]
          %v328 = vld [vmem:[%s173 + $0xc] sm:$0xf]
          %v329 = vld [vmem:[%s173 + $0x10] sm:$0xf]
          %v330 = vld [vmem:[%s173 + $0x14] sm:$0xf]
          %v331 = vld [vmem:[%s173 + $0x18] sm:$0xf]
          %v332 = vld [vmem:[%s173 + $0x1c] sm:$0xf]
          %v333 = vld [vmem:[%s173 + $0x20] sm:$0xf]
          %v334 = vld [vmem:[%s173 + $0x24] sm:$0xf]
          %v335 = vld [vmem:[%s173 + $0x28] sm:$0xf]
          %v336 = vld [vmem:[%s173 + $0x2c] sm:$0xf]
          %v337 = vld [vmem:[%s173 + $0x30] sm:$0xf]
          %v338 = vld [vmem:[%s173 + $0x34] sm:$0xf]
          %v339 = vld [vmem:[%s173 + $0x38] sm:$0xf]
          %v340 = vld [vmem:[%s173 + $0x3c] sm:$0xf]
          %v341 = vld [vmem:[%s173 + $0x40] sm:$0xf]
          %v342 = vld [vmem:[%s173 + $0x44] sm:$0xf]
          %v343 = vld [vmem:[%s173 + $0x48] sm:$0xf]
          %v344 = vld [vmem:[%s173 + $0x4c] sm:$0xf]
          %v345 = vld [vmem:[%s173 + $0x50] sm:$0xf]
          %v346 = vld [vmem:[%s173 + $0x54] sm:$0xf]
          %v347 = vld [vmem:[%s173 + $0x58] sm:$0xf]
          %v348 = vld [vmem:[%s173 + $0x5c] sm:$0xf]
          %v349 = vld [vmem:[%s173 + $0x60] sm:$0xf]
          %v350 = vld [vmem:[%s173 + $0x64] sm:$0xf]
          %v351 = vld [vmem:[%s173 + $0x68] sm:$0xf]
          %v352 = vld [vmem:[%s173 + $0x6c] sm:$0xf]
          %v353 = vld [vmem:[%s173 + $0x70] sm:$0xf]
          %v354 = vld [vmem:[%s173 + $0x74] sm:$0xf]
          %v355 = vld [vmem:[%s173 + $0x78] sm:$0xf]
          %v356 = vld [vmem:[%s173 + $0x7c] sm:$0xf]
          %vm357 = vsmask.f32 4368
          %vm358 = vmor %vm213, %vm357
          %v360 = vshrl.u32 %v325, 16
          %v362 = vrot.slane %v360, 7
          %v363 = vshll.u32 %v325, 16
          %v365 = vor.u32 %v362, %v363
          %v366 = vrot.slane %v362, 4
          %v368 = vshrl.u32 %v326, 16
          %v370 = vrot.slane %v368, 7
          %v371 = vshll.u32 %v326, 16
          %v373 = vor.u32 %v370, %v371
          %v374 = vsel %vm358, %v366, %v373
          %v375 = vrot.slane %v370, 4
          %v377 = vshrl.u32 %v327, 16
          %v379 = vrot.slane %v377, 7
          %v380 = vshll.u32 %v327, 16
          %v382 = vor.u32 %v379, %v380
          %v383 = vrot.slane %v379, 4
          %v385 = vshrl.u32 %v328, 16
          %v387 = vrot.slane %v385, 7
          %v388 = vshll.u32 %v328, 16
          %v390 = vor.u32 %v387, %v388
          %v391 = vsel %vm358, %v383, %v390
          %v392 = vrot.slane %v387, 4
          %v394 = vshrl.u32 %v329, 16
          %v396 = vrot.slane %v394, 7
          %v397 = vshll.u32 %v329, 16
          %v399 = vor.u32 %v396, %v397
          %v400 = vrot.slane %v396, 4
          %v402 = vshrl.u32 %v330, 16
          %v404 = vrot.slane %v402, 7
          %v405 = vshll.u32 %v330, 16
          %v407 = vor.u32 %v404, %v405
          %v408 = vsel %vm358, %v400, %v407
          %v409 = vrot.slane %v404, 4
          %v411 = vshrl.u32 %v331, 16
          %v413 = vrot.slane %v411, 7
          %v414 = vshll.u32 %v331, 16
          %v416 = vor.u32 %v413, %v414
          %v417 = vrot.slane %v413, 4
          %v419 = vshrl.u32 %v332, 16
          %v421 = vrot.slane %v419, 7
          %v422 = vshll.u32 %v332, 16
          %v424 = vor.u32 %v421, %v422
          %v425 = vsel %vm358, %v417, %v424
          %v426 = vrot.slane %v421, 4
          %v428 = vshrl.u32 %v333, 16
          %v430 = vrot.slane %v428, 7
          %v431 = vshll.u32 %v333, 16
          %v433 = vor.u32 %v430, %v431
          %v434 = vrot.slane %v430, 4
          %v436 = vshrl.u32 %v334, 16
          %v438 = vrot.slane %v436, 7
          %v439 = vshll.u32 %v334, 16
          %v441 = vor.u32 %v438, %v439
          %v442 = vsel %vm358, %v434, %v441
          %v443 = vrot.slane %v438, 4
          %v445 = vshrl.u32 %v335, 16
          %v447 = vrot.slane %v445, 7
          %v448 = vshll.u32 %v335, 16
          %v450 = vor.u32 %v447, %v448
          %v451 = vrot.slane %v447, 4
          %v453 = vshrl.u32 %v336, 16
          %v455 = vrot.slane %v453, 7
          %v456 = vshll.u32 %v336, 16
          %v458 = vor.u32 %v455, %v456
          %v459 = vsel %vm358, %v451, %v458
          %v460 = vrot.slane %v455, 4
          %v462 = vshrl.u32 %v337, 16
          %v464 = vrot.slane %v462, 7
          %v465 = vshll.u32 %v337, 16
          %v467 = vor.u32 %v464, %v465
          %v468 = vrot.slane %v464, 4
          %v470 = vshrl.u32 %v338, 16
          %v472 = vrot.slane %v470, 7
          %v473 = vshll.u32 %v338, 16
          %v475 = vor.u32 %v472, %v473
          %v476 = vsel %vm358, %v468, %v475
          %v477 = vrot.slane %v472, 4
          %v479 = vshrl.u32 %v339, 16
          %v481 = vrot.slane %v479, 7
          %v482 = vshll.u32 %v339, 16
          %v484 = vor.u32 %v481, %v482
          %v485 = vrot.slane %v481, 4
          %v487 = vshrl.u32 %v340, 16
          %v489 = vrot.slane %v487, 7
          %v490 = vshll.u32 %v340, 16
          %v492 = vor.u32 %v489, %v490
          %v493 = vsel %vm358, %v485, %v492
          %v494 = vrot.slane %v489, 4
          %v496 = vshrl.u32 %v341, 16
          %v498 = vrot.slane %v496, 7
          %v499 = vshll.u32 %v341, 16
          %v501 = vor.u32 %v498, %v499
          %v502 = vrot.slane %v498, 4
          %v504 = vshrl.u32 %v342, 16
          %v506 = vrot.slane %v504, 7
          %v507 = vshll.u32 %v342, 16
          %v509 = vor.u32 %v506, %v507
          %v510 = vsel %vm358, %v502, %v509
          %v511 = vrot.slane %v506, 4
          %v513 = vshrl.u32 %v343, 16
          %v515 = vrot.slane %v513, 7
          %v516 = vshll.u32 %v343, 16
          %v518 = vor.u32 %v515, %v516
          %v519 = vrot.slane %v515, 4
          %v521 = vshrl.u32 %v344, 16
          %v523 = vrot.slane %v521, 7
          %v524 = vshll.u32 %v344, 16
          %v526 = vor.u32 %v523, %v524
          %v527 = vsel %vm358, %v519, %v526
          %v528 = vrot.slane %v523, 4
          %v530 = vshrl.u32 %v345, 16
          %v532 = vrot.slane %v530, 7
          %v533 = vshll.u32 %v345, 16
          %v535 = vor.u32 %v532, %v533
          %v536 = vrot.slane %v532, 4
          %v538 = vshrl.u32 %v346, 16
          %v540 = vrot.slane %v538, 7
          %v541 = vshll.u32 %v346, 16
          %v543 = vor.u32 %v540, %v541
          %v544 = vsel %vm358, %v536, %v543
          %v545 = vrot.slane %v540, 4
          %v547 = vshrl.u32 %v347, 16
          %v549 = vrot.slane %v547, 7
          %v550 = vshll.u32 %v347, 16
          %v552 = vor.u32 %v549, %v550
          %v553 = vrot.slane %v549, 4
          %v555 = vshrl.u32 %v348, 16
          %v557 = vrot.slane %v555, 7
          %v558 = vshll.u32 %v348, 16
          %v560 = vor.u32 %v557, %v558
          %v561 = vsel %vm358, %v553, %v560
          %v562 = vrot.slane %v557, 4
          %v564 = vshrl.u32 %v349, 16
          %v566 = vrot.slane %v564, 7
          %v567 = vshll.u32 %v349, 16
          %v569 = vor.u32 %v566, %v567
          %v570 = vrot.slane %v566, 4
          %v572 = vshrl.u32 %v350, 16
          %v574 = vrot.slane %v572, 7
          %v575 = vshll.u32 %v350, 16
          %v577 = vor.u32 %v574, %v575
          %v578 = vsel %vm358, %v570, %v577
          %v579 = vrot.slane %v574, 4
          %v581 = vshrl.u32 %v351, 16
          %v583 = vrot.slane %v581, 7
          %v584 = vshll.u32 %v351, 16
          %v586 = vor.u32 %v583, %v584
          %v587 = vrot.slane %v583, 4
          %v589 = vshrl.u32 %v352, 16
          %v591 = vrot.slane %v589, 7
          %v592 = vshll.u32 %v352, 16
          %v594 = vor.u32 %v591, %v592
          %v595 = vsel %vm358, %v587, %v594
          %v596 = vrot.slane %v591, 4
          %v598 = vshrl.u32 %v353, 16
          %v600 = vrot.slane %v598, 7
          %v601 = vshll.u32 %v353, 16
          %v603 = vor.u32 %v600, %v601
          %v604 = vrot.slane %v600, 4
          %v606 = vshrl.u32 %v354, 16
          %v608 = vrot.slane %v606, 7
          %v609 = vshll.u32 %v354, 16
          %v611 = vor.u32 %v608, %v609
          %v612 = vsel %vm358, %v604, %v611
          %v613 = vrot.slane %v608, 4
          %v615 = vshrl.u32 %v355, 16
          %v617 = vrot.slane %v615, 7
          %v618 = vshll.u32 %v355, 16
          %v620 = vor.u32 %v617, %v618
          %v621 = vrot.slane %v617, 4
          %v623 = vshrl.u32 %v356, 16
          %v625 = vrot.slane %v623, 7
          %v626 = vshll.u32 %v356, 16
          %v628 = vor.u32 %v625, %v626
          %v629 = vsel %vm358, %v621, %v628
          %v630 = vrot.slane %v625, 4
          %s679 = scalar_lea.vmem [#allocation2], 12
          %vm680 = vcmask 257024
          %vm681 = vmand %vm680, %vm269
          %v682 = vld [vmem:[%s679] sm:$0xf]
          %v683 = vsel %vm681, %v365, %v682
          %684 = vst [vmem:[%s679] sm:$0xf] %v683
          %685 = vst.msk [vmem:[%s679 + $0x4] sm:$0xf] %vm203, %v374
          %v686 = vld [vmem:[%s679 + $0x8] sm:$0x1]
          %v687 = vsel %vm214, %v375, %v686
          %688 = vst [vmem:[%s679 + $0x8] sm:$0x1] %v687
          %v689 = vld [vmem:[%s679 + $0xc] sm:$0xf]
          %v690 = vsel %vm681, %v382, %v689
          %691 = vst [vmem:[%s679 + $0xc] sm:$0xf] %v690
          %692 = vst.msk [vmem:[%s679 + $0x10] sm:$0xf] %vm203, %v391
          %v693 = vld [vmem:[%s679 + $0x14] sm:$0x1]
          %v694 = vsel %vm214, %v392, %v693
          %695 = vst [vmem:[%s679 + $0x14] sm:$0x1] %v694
          %v696 = vld [vmem:[%s679 + $0x18] sm:$0xf]
          %v697 = vsel %vm681, %v399, %v696
          %698 = vst [vmem:[%s679 + $0x18] sm:$0xf] %v697
          %699 = vst.msk [vmem:[%s679 + $0x1c] sm:$0xf] %vm203, %v408
          %v700 = vld [vmem:[%s679 + $0x20] sm:$0x1]
          %v701 = vsel %vm214, %v409, %v700
          %702 = vst [vmem:[%s679 + $0x20] sm:$0x1] %v701
          %v703 = vld [vmem:[%s679 + $0x24] sm:$0xf]
          %v704 = vsel %vm681, %v416, %v703
          %705 = vst [vmem:[%s679 + $0x24] sm:$0xf] %v704
          %706 = vst.msk [vmem:[%s679 + $0x28] sm:$0xf] %vm203, %v425
          %v707 = vld [vmem:[%s679 + $0x2c] sm:$0x1]
          %v708 = vsel %vm214, %v426, %v707
          %709 = vst [vmem:[%s679 + $0x2c] sm:$0x1] %v708
          %v710 = vld [vmem:[%s679 + $0x30] sm:$0xf]
          %v711 = vsel %vm681, %v433, %v710
          %712 = vst [vmem:[%s679 + $0x30] sm:$0xf] %v711
          %713 = vst.msk [vmem:[%s679 + $0x34] sm:$0xf] %vm203, %v442
          %v714 = vld [vmem:[%s679 + $0x38] sm:$0x1]
          %v715 = vsel %vm214, %v443, %v714
          %716 = vst [vmem:[%s679 + $0x38] sm:$0x1] %v715
          %v717 = vld [vmem:[%s679 + $0x3c] sm:$0xf]
          %v718 = vsel %vm681, %v450, %v717
          %719 = vst [vmem:[%s679 + $0x3c] sm:$0xf] %v718
          %720 = vst.msk [vmem:[%s679 + $0x40] sm:$0xf] %vm203, %v459
          %v721 = vld [vmem:[%s679 + $0x44] sm:$0x1]
          %v722 = vsel %vm214, %v460, %v721
          %723 = vst [vmem:[%s679 + $0x44] sm:$0x1] %v722
          %v724 = vld [vmem:[%s679 + $0x48] sm:$0xf]
          %v725 = vsel %vm681, %v467, %v724
          %726 = vst [vmem:[%s679 + $0x48] sm:$0xf] %v725
          %727 = vst.msk [vmem:[%s679 + $0x4c] sm:$0xf] %vm203, %v476
          %v728 = vld [vmem:[%s679 + $0x50] sm:$0x1]
          %v729 = vsel %vm214, %v477, %v728
          %730 = vst [vmem:[%s679 + $0x50] sm:$0x1] %v729
          %v731 = vld [vmem:[%s679 + $0x54] sm:$0xf]
          %v732 = vsel %vm681, %v484, %v731
          %733 = vst [vmem:[%s679 + $0x54] sm:$0xf] %v732
          %734 = vst.msk [vmem:[%s679 + $0x58] sm:$0xf] %vm203, %v493
          %v735 = vld [vmem:[%s679 + $0x5c] sm:$0x1]
          %v736 = vsel %vm214, %v494, %v735
          %737 = vst [vmem:[%s679 + $0x5c] sm:$0x1] %v736
          %v738 = vld [vmem:[%s679 + $0x60] sm:$0xf]
          %v739 = vsel %vm681, %v501, %v738
          %740 = vst [vmem:[%s679 + $0x60] sm:$0xf] %v739
          %741 = vst.msk [vmem:[%s679 + $0x64] sm:$0xf] %vm203, %v510
          %v742 = vld [vmem:[%s679 + $0x68] sm:$0x1]
          %v743 = vsel %vm214, %v511, %v742
          %744 = vst [vmem:[%s679 + $0x68] sm:$0x1] %v743
          %v745 = vld [vmem:[%s679 + $0x6c] sm:$0xf]
          %v746 = vsel %vm681, %v518, %v745
          %747 = vst [vmem:[%s679 + $0x6c] sm:$0xf] %v746
          %748 = vst.msk [vmem:[%s679 + $0x70] sm:$0xf] %vm203, %v527
          %v749 = vld [vmem:[%s679 + $0x74] sm:$0x1]
          %v750 = vsel %vm214, %v528, %v749
          %751 = vst [vmem:[%s679 + $0x74] sm:$0x1] %v750
          %v752 = vld [vmem:[%s679 + $0x78] sm:$0xf]
          %v753 = vsel %vm681, %v535, %v752
          %754 = vst [vmem:[%s679 + $0x78] sm:$0xf] %v753
          %755 = vst.msk [vmem:[%s679 + $0x7c] sm:$0xf] %vm203, %v544
          %v756 = vld [vmem:[%s679 + $0x80] sm:$0x1]
          %v757 = vsel %vm214, %v545, %v756
          %758 = vst [vmem:[%s679 + $0x80] sm:$0x1] %v757
          %v759 = vld [vmem:[%s679 + $0x84] sm:$0xf]
          %v760 = vsel %vm681, %v552, %v759
          %761 = vst [vmem:[%s679 + $0x84] sm:$0xf] %v760
          %762 = vst.msk [vmem:[%s679 + $0x88] sm:$0xf] %vm203, %v561
          %v763 = vld [vmem:[%s679 + $0x8c] sm:$0x1]
          %v764 = vsel %vm214, %v562, %v763
          %765 = vst [vmem:[%s679 + $0x8c] sm:$0x1] %v764
          %v766 = vld [vmem:[%s679 + $0x90] sm:$0xf]
          %v767 = vsel %vm681, %v569, %v766
          %768 = vst [vmem:[%s679 + $0x90] sm:$0xf] %v767
          %769 = vst.msk [vmem:[%s679 + $0x94] sm:$0xf] %vm203, %v578
          %v770 = vld [vmem:[%s679 + $0x98] sm:$0x1]
          %v771 = vsel %vm214, %v579, %v770
          %772 = vst [vmem:[%s679 + $0x98] sm:$0x1] %v771
          %v773 = vld [vmem:[%s679 + $0x9c] sm:$0xf]
          %v774 = vsel %vm681, %v586, %v773
          %775 = vst [vmem:[%s679 + $0x9c] sm:$0xf] %v774
          %776 = vst.msk [vmem:[%s679 + $0xa0] sm:$0xf] %vm203, %v595
          %v777 = vld [vmem:[%s679 + $0xa4] sm:$0x1]
          %v778 = vsel %vm214, %v596, %v777
          %779 = vst [vmem:[%s679 + $0xa4] sm:$0x1] %v778
          %v780 = vld [vmem:[%s679 + $0xa8] sm:$0xf]
          %v781 = vsel %vm681, %v603, %v780
          %782 = vst [vmem:[%s679 + $0xa8] sm:$0xf] %v781
          %783 = vst.msk [vmem:[%s679 + $0xac] sm:$0xf] %vm203, %v612
          %v784 = vld [vmem:[%s679 + $0xb0] sm:$0x1]
          %v785 = vsel %vm214, %v613, %v784
          %786 = vst [vmem:[%s679 + $0xb0] sm:$0x1] %v785
          %v787 = vld [vmem:[%s679 + $0xb4] sm:$0xf]
          %v788 = vsel %vm681, %v620, %v787
          %789 = vst [vmem:[%s679 + $0xb4] sm:$0xf] %v788
          %790 = vst.msk [vmem:[%s679 + $0xb8] sm:$0xf] %vm203, %v629
          %v791 = vld [vmem:[%s679 + $0xbc] sm:$0x1]
          %v792 = vsel %vm214, %v630, %v791
          %793 = vst [vmem:[%s679 + $0xbc] sm:$0x1] %v792
          %v794 = vld [vmem:[#allocation2] sm:$0xf]
          %v795 = vld [vmem:[#allocation2 + $0x4] sm:$0xf]
          %v796 = vld [vmem:[#allocation2 + $0x8] sm:$0x1]
          %v797 = vld [vmem:[#allocation2 + $0xc] sm:$0xf]
          %v798 = vld [vmem:[#allocation2 + $0x10] sm:$0xf]
          %v799 = vld [vmem:[#allocation2 + $0x14] sm:$0x1]
          %v800 = vld [vmem:[#allocation2 + $0x18] sm:$0xf]
          %v801 = vld [vmem:[#allocation2 + $0x1c] sm:$0xf]
          %v802 = vld [vmem:[#allocation2 + $0x20] sm:$0x1]
          %v803 = vld [vmem:[#allocation2 + $0x24] sm:$0xf]
          %v804 = vld [vmem:[#allocation2 + $0x28] sm:$0xf]
          %v805 = vld [vmem:[#allocation2 + $0x2c] sm:$0x1]
          %v806 = vld [vmem:[#allocation2 + $0x30] sm:$0xf]
          %v807 = vld [vmem:[#allocation2 + $0x34] sm:$0xf]
          %v808 = vld [vmem:[#allocation2 + $0x38] sm:$0x1]
          %v809 = vld [vmem:[#allocation2 + $0x3c] sm:$0xf]
          %v810 = vld [vmem:[#allocation2 + $0x40] sm:$0xf]
          %v811 = vld [vmem:[#allocation2 + $0x44] sm:$0x1]
          %v812 = vld [vmem:[#allocation2 + $0x48] sm:$0xf]
          %v813 = vld [vmem:[#allocation2 + $0x4c] sm:$0xf]
          %v814 = vld [vmem:[#allocation2 + $0x50] sm:$0x1]
          %v815 = vld [vmem:[#allocation2 + $0x54] sm:$0xf]
          %v816 = vld [vmem:[#allocation2 + $0x58] sm:$0xf]
          %v817 = vld [vmem:[#allocation2 + $0x5c] sm:$0x1]
          %v818 = vld [vmem:[#allocation2 + $0x60] sm:$0xf]
          %v819 = vld [vmem:[#allocation2 + $0x64] sm:$0xf]
          %v820 = vld [vmem:[#allocation2 + $0x68] sm:$0x1]
          %v821 = vld [vmem:[#allocation2 + $0x6c] sm:$0xf]
          %v822 = vld [vmem:[#allocation2 + $0x70] sm:$0xf]
          %v823 = vld [vmem:[#allocation2 + $0x74] sm:$0x1]
          %v824 = vld [vmem:[#allocation2 + $0x78] sm:$0xf]
          %v825 = vld [vmem:[#allocation2 + $0x7c] sm:$0xf]
          %v826 = vld [vmem:[#allocation2 + $0x80] sm:$0x1]
          %v827 = vld [vmem:[#allocation2 + $0x84] sm:$0xf]
          %v828 = vld [vmem:[#allocation2 + $0x88] sm:$0xf]
          %v829 = vld [vmem:[#allocation2 + $0x8c] sm:$0x1]
          %v830 = vld [vmem:[#allocation2 + $0x90] sm:$0xf]
          %v831 = vld [vmem:[#allocation2 + $0x94] sm:$0xf]
          %v832 = vld [vmem:[#allocation2 + $0x98] sm:$0x1]
          %v833 = vld [vmem:[#allocation2 + $0x9c] sm:$0xf]
          %v834 = vld [vmem:[#allocation2 + $0xa0] sm:$0xf]
          %v835 = vld [vmem:[#allocation2 + $0xa4] sm:$0x1]
          %v836 = vld [vmem:[#allocation2 + $0xa8] sm:$0xf]
          %v837 = vld [vmem:[#allocation2 + $0xac] sm:$0xf]
          %v838 = vld [vmem:[#allocation2 + $0xb0] sm:$0x1]
          %v839 = vld [vmem:[#allocation2 + $0xb4] sm:$0xf]
          %v840 = vld [vmem:[#allocation2 + $0xb8] sm:$0xf]
          %v841 = vld [vmem:[#allocation2 + $0xbc] sm:$0x1]
          %v842 = vld [vmem:[#allocation2 + $0xc0] sm:$0xf]
          %v843 = vld [vmem:[#allocation2 + $0xc4] sm:$0xf]
          %v844 = vld [vmem:[#allocation2 + $0xc8] sm:$0x1]
          %v845 = vld [vmem:[#allocation2 + $0xcc] sm:$0xf]
          %v846 = vld [vmem:[#allocation2 + $0xd0] sm:$0xf]
          %v847 = vld [vmem:[#allocation2 + $0xd4] sm:$0x1]
          %v880 = vunpack.c.l.b16 %v794
          %v881 = vunpack.c.l.b16 %v795
          %v882 = vunpack.c.l.b16 %v797
          %v883 = vunpack.c.l.b16 %v798
          %v884 = vunpack.c.l.b16 %v800
          %v885 = vunpack.c.l.b16 %v801
          %v886 = vunpack.c.l.b16 %v803
          %v887 = vunpack.c.l.b16 %v804
          %v888 = vunpack.c.l.b16 %v806
          %v889 = vunpack.c.l.b16 %v807
          %v890 = vunpack.c.l.b16 %v809
          %v891 = vunpack.c.l.b16 %v810
          %v892 = vunpack.c.l.b16 %v812
          %v893 = vunpack.c.l.b16 %v813
          %v894 = vunpack.c.l.b16 %v815
          %v895 = vunpack.c.l.b16 %v816
          %v896 = vunpack.c.l.b16 %v818
          %v897 = vunpack.c.l.b16 %v819
          %v898 = vunpack.c.l.b16 %v821
          %v899 = vunpack.c.l.b16 %v822
          %v900 = vunpack.c.l.b16 %v824
          %v901 = vunpack.c.l.b16 %v825
          %v902 = vunpack.c.l.b16 %v827
          %v903 = vunpack.c.l.b16 %v828
          %v904 = vunpack.c.l.b16 %v830
          %v905 = vunpack.c.l.b16 %v831
          %v906 = vunpack.c.l.b16 %v833
          %v907 = vunpack.c.l.b16 %v834
          %v908 = vunpack.c.l.b16 %v836
          %v909 = vunpack.c.l.b16 %v837
          %v910 = vunpack.c.l.b16 %v839
          %v911 = vunpack.c.l.b16 %v840
          %v912 = vpack.c.b16 %v881, %v880
          %v913 = vpack.c.b16 %v883, %v882
          %v914 = vpack.c.b16 %v885, %v884
          %v915 = vpack.c.b16 %v887, %v886
          %v916 = vpack.c.b16 %v889, %v888
          %v917 = vpack.c.b16 %v891, %v890
          %v918 = vpack.c.b16 %v893, %v892
          %v919 = vpack.c.b16 %v895, %v894
          %v920 = vpack.c.b16 %v897, %v896
          %v921 = vpack.c.b16 %v899, %v898
          %v922 = vpack.c.b16 %v901, %v900
          %v923 = vpack.c.b16 %v903, %v902
          %v924 = vpack.c.b16 %v905, %v904
          %v925 = vpack.c.b16 %v907, %v906
          %v926 = vpack.c.b16 %v909, %v908
          %v927 = vpack.c.b16 %v911, %v910
          %vm944 = vcmask 261120
          %945 = vst.msk [vmem:[#allocation3] sm:$0xff] %vm944, %v912
          %946 = vst.msk [vmem:[#allocation3 + $0x18] sm:$0xff] %vm944, %v913
          %947 = vst.msk [vmem:[#allocation3 + $0x30] sm:$0xff] %vm944, %v914
          %948 = vst.msk [vmem:[#allocation3 + $0x48] sm:$0xff] %vm944, %v915
          %949 = vst.msk [vmem:[#allocation3 + $0x60] sm:$0xff] %vm944, %v916
          %950 = vst.msk [vmem:[#allocation3 + $0x78] sm:$0xff] %vm944, %v917
          %951 = vst.msk [vmem:[#allocation3 + $0x90] sm:$0xff] %vm944, %v918
          %952 = vst.msk [vmem:[#allocation3 + $0xa8] sm:$0xff] %vm944, %v919
          %953 = vst.msk [vmem:[#allocation3 + $0xc0] sm:$0xff] %vm944, %v920
          %954 = vst.msk [vmem:[#allocation3 + $0xd8] sm:$0xff] %vm944, %v921
          %955 = vst.msk [vmem:[#allocation3 + $0xf0] sm:$0xff] %vm944, %v922
          %956 = vst.msk [vmem:[#allocation3 + $0x108] sm:$0xff] %vm944, %v923
          %957 = vst.msk [vmem:[#allocation3 + $0x120] sm:$0xff] %vm944, %v924
          %958 = vst.msk [vmem:[#allocation3 + $0x138] sm:$0xff] %vm944, %v925
          %959 = vst.msk [vmem:[#allocation3 + $0x150] sm:$0xff] %vm944, %v926
          %960 = vst.msk [vmem:[#allocation3 + $0x168] sm:$0xff] %vm944, %v927
          %vm961 = vsmask.f32 3328
          %vm962 = vsmask.f32 7440
          %vm963 = vmor %vm961, %vm962
          %v965 = vshrl.u32 %v794, 16
          %v967 = vrot.slane %v965, 4
          %v968 = vshll.u32 %v794, 16
          %v970 = vrot.slane %v968, 5
          %v971 = vor.u32 %v967, %v970
          %v972 = vrot.slane %v971, 4
          %v974 = vshll.u32 %v795, 16
          %v976 = vrot.slane %v974, 5
          %v977 = vsel %vm963, %v972, %v976
          %v978 = vshrl.u32 %v795, 16
          %v980 = vrot.slane %v978, 4
          %v981 = vor.u32 %v980, %v976
          %v982 = vrot.slane %v981, 4
          %v984 = vshll.u32 %v796, 16
          %v986 = vrot.slane %v984, 5
          %v987 = vsel %vm963, %v982, %v986
          %v989 = vshrl.u32 %v797, 16
          %v991 = vrot.slane %v989, 4
          %v992 = vshll.u32 %v797, 16
          %v994 = vrot.slane %v992, 5
          %v995 = vor.u32 %v991, %v994
          %v996 = vrot.slane %v995, 4
          %v998 = vshll.u32 %v798, 16
          %v1000 = vrot.slane %v998, 5
          %v1001 = vsel %vm963, %v996, %v1000
          %v1002 = vshrl.u32 %v798, 16
          %v1004 = vrot.slane %v1002, 4
          %v1005 = vor.u32 %v1004, %v1000
          %v1006 = vrot.slane %v1005, 4
          %v1008 = vshll.u32 %v799, 16
          %v1010 = vrot.slane %v1008, 5
          %v1011 = vsel %vm963, %v1006, %v1010
          %v1013 = vshrl.u32 %v800, 16
          %v1015 = vrot.slane %v1013, 4
          %v1016 = vshll.u32 %v800, 16
          %v1018 = vrot.slane %v1016, 5
          %v1019 = vor.u32 %v1015, %v1018
          %v1020 = vrot.slane %v1019, 4
          %v1022 = vshll.u32 %v801, 16
          %v1024 = vrot.slane %v1022, 5
          %v1025 = vsel %vm963, %v1020, %v1024
          %v1026 = vshrl.u32 %v801, 16
          %v1028 = vrot.slane %v1026, 4
          %v1029 = vor.u32 %v1028, %v1024
          %v1030 = vrot.slane %v1029, 4
          %v1032 = vshll.u32 %v802, 16
          %v1034 = vrot.slane %v1032, 5
          %v1035 = vsel %vm963, %v1030, %v1034
          %v1037 = vshrl.u32 %v803, 16
          %v1039 = vrot.slane %v1037, 4
          %v1040 = vshll.u32 %v803, 16
          %v1042 = vrot.slane %v1040, 5
          %v1043 = vor.u32 %v1039, %v1042
          %v1044 = vrot.slane %v1043, 4
          %v1046 = vshll.u32 %v804, 16
          %v1048 = vrot.slane %v1046, 5
          %v1049 = vsel %vm963, %v1044, %v1048
          %v1050 = vshrl.u32 %v804, 16
          %v1052 = vrot.slane %v1050, 4
          %v1053 = vor.u32 %v1052, %v1048
          %v1054 = vrot.slane %v1053, 4
          %v1056 = vshll.u32 %v805, 16
          %v1058 = vrot.slane %v1056, 5
          %v1059 = vsel %vm963, %v1054, %v1058
          %v1061 = vshrl.u32 %v806, 16
          %v1063 = vrot.slane %v1061, 4
          %v1064 = vshll.u32 %v806, 16
          %v1066 = vrot.slane %v1064, 5
          %v1067 = vor.u32 %v1063, %v1066
          %v1068 = vrot.slane %v1067, 4
          %v1070 = vshll.u32 %v807, 16
          %v1072 = vrot.slane %v1070, 5
          %v1073 = vsel %vm963, %v1068, %v1072
          %v1074 = vshrl.u32 %v807, 16
          %v1076 = vrot.slane %v1074, 4
          %v1077 = vor.u32 %v1076, %v1072
          %v1078 = vrot.slane %v1077, 4
          %v1080 = vshll.u32 %v808, 16
          %v1082 = vrot.slane %v1080, 5
          %v1083 = vsel %vm963, %v1078, %v1082
          %v1085 = vshrl.u32 %v809, 16
          %v1087 = vrot.slane %v1085, 4
          %v1088 = vshll.u32 %v809, 16
          %v1090 = vrot.slane %v1088, 5
          %v1091 = vor.u32 %v1087, %v1090
          %v1092 = vrot.slane %v1091, 4
          %v1094 = vshll.u32 %v810, 16
          %v1096 = vrot.slane %v1094, 5
          %v1097 = vsel %vm963, %v1092, %v1096
          %v1098 = vshrl.u32 %v810, 16
          %v1100 = vrot.slane %v1098, 4
          %v1101 = vor.u32 %v1100, %v1096
          %v1102 = vrot.slane %v1101, 4
          %v1104 = vshll.u32 %v811, 16
          %v1106 = vrot.slane %v1104, 5
          %v1107 = vsel %vm963, %v1102, %v1106
          %v1109 = vshrl.u32 %v812, 16
          %v1111 = vrot.slane %v1109, 4
          %v1112 = vshll.u32 %v812, 16
          %v1114 = vrot.slane %v1112, 5
          %v1115 = vor.u32 %v1111, %v1114
          %v1116 = vrot.slane %v1115, 4
          %v1118 = vshll.u32 %v813, 16
          %v1120 = vrot.slane %v1118, 5
          %v1121 = vsel %vm963, %v1116, %v1120
          %v1122 = vshrl.u32 %v813, 16
          %v1124 = vrot.slane %v1122, 4
          %v1125 = vor.u32 %v1124, %v1120
          %v1126 = vrot.slane %v1125, 4
          %v1128 = vshll.u32 %v814, 16
          %v1130 = vrot.slane %v1128, 5
          %v1131 = vsel %vm963, %v1126, %v1130
          %v1133 = vshrl.u32 %v815, 16
          %v1135 = vrot.slane %v1133, 4
          %v1136 = vshll.u32 %v815, 16
          %v1138 = vrot.slane %v1136, 5
          %v1139 = vor.u32 %v1135, %v1138
          %v1140 = vrot.slane %v1139, 4
          %v1142 = vshll.u32 %v816, 16
          %v1144 = vrot.slane %v1142, 5
          %v1145 = vsel %vm963, %v1140, %v1144
          %v1146 = vshrl.u32 %v816, 16
          %v1148 = vrot.slane %v1146, 4
          %v1149 = vor.u32 %v1148, %v1144
          %v1150 = vrot.slane %v1149, 4
          %v1152 = vshll.u32 %v817, 16
          %v1154 = vrot.slane %v1152, 5
          %v1155 = vsel %vm963, %v1150, %v1154
          %v1157 = vshrl.u32 %v818, 16
          %v1159 = vrot.slane %v1157, 4
          %v1160 = vshll.u32 %v818, 16
          %v1162 = vrot.slane %v1160, 5
          %v1163 = vor.u32 %v1159, %v1162
          %v1164 = vrot.slane %v1163, 4
          %v1166 = vshll.u32 %v819, 16
          %v1168 = vrot.slane %v1166, 5
          %v1169 = vsel %vm963, %v1164, %v1168
          %v1170 = vshrl.u32 %v819, 16
          %v1172 = vrot.slane %v1170, 4
          %v1173 = vor.u32 %v1172, %v1168
          %v1174 = vrot.slane %v1173, 4
          %v1176 = vshll.u32 %v820, 16
          %v1178 = vrot.slane %v1176, 5
          %v1179 = vsel %vm963, %v1174, %v1178
          %v1181 = vshrl.u32 %v821, 16
          %v1183 = vrot.slane %v1181, 4
          %v1184 = vshll.u32 %v821, 16
          %v1186 = vrot.slane %v1184, 5
          %v1187 = vor.u32 %v1183, %v1186
          %v1188 = vrot.slane %v1187, 4
          %v1190 = vshll.u32 %v822, 16
          %v1192 = vrot.slane %v1190, 5
          %v1193 = vsel %vm963, %v1188, %v1192
          %v1194 = vshrl.u32 %v822, 16
          %v1196 = vrot.slane %v1194, 4
          %v1197 = vor.u32 %v1196, %v1192
          %v1198 = vrot.slane %v1197, 4
          %v1200 = vshll.u32 %v823, 16
          %v1202 = vrot.slane %v1200, 5
          %v1203 = vsel %vm963, %v1198, %v1202
          %v1205 = vshrl.u32 %v824, 16
          %v1207 = vrot.slane %v1205, 4
          %v1208 = vshll.u32 %v824, 16
          %v1210 = vrot.slane %v1208, 5
          %v1211 = vor.u32 %v1207, %v1210
          %v1212 = vrot.slane %v1211, 4
          %v1214 = vshll.u32 %v825, 16
          %v1216 = vrot.slane %v1214, 5
          %v1217 = vsel %vm963, %v1212, %v1216
          %v1218 = vshrl.u32 %v825, 16
          %v1220 = vrot.slane %v1218, 4
          %v1221 = vor.u32 %v1220, %v1216
          %v1222 = vrot.slane %v1221, 4
          %v1224 = vshll.u32 %v826, 16
          %v1226 = vrot.slane %v1224, 5
          %v1227 = vsel %vm963, %v1222, %v1226
          %v1229 = vshrl.u32 %v827, 16
          %v1231 = vrot.slane %v1229, 4
          %v1232 = vshll.u32 %v827, 16
          %v1234 = vrot.slane %v1232, 5
          %v1235 = vor.u32 %v1231, %v1234
          %v1236 = vrot.slane %v1235, 4
          %v1238 = vshll.u32 %v828, 16
          %v1240 = vrot.slane %v1238, 5
          %v1241 = vsel %vm963, %v1236, %v1240
          %v1242 = vshrl.u32 %v828, 16
          %v1244 = vrot.slane %v1242, 4
          %v1245 = vor.u32 %v1244, %v1240
          %v1246 = vrot.slane %v1245, 4
          %v1248 = vshll.u32 %v829, 16
          %v1250 = vrot.slane %v1248, 5
          %v1251 = vsel %vm963, %v1246, %v1250
          %v1253 = vshrl.u32 %v830, 16
          %v1255 = vrot.slane %v1253, 4
          %v1256 = vshll.u32 %v830, 16
          %v1258 = vrot.slane %v1256, 5
          %v1259 = vor.u32 %v1255, %v1258
          %v1260 = vrot.slane %v1259, 4
          %v1262 = vshll.u32 %v831, 16
          %v1264 = vrot.slane %v1262, 5
          %v1265 = vsel %vm963, %v1260, %v1264
          %v1266 = vshrl.u32 %v831, 16
          %v1268 = vrot.slane %v1266, 4
          %v1269 = vor.u32 %v1268, %v1264
          %v1270 = vrot.slane %v1269, 4
          %v1272 = vshll.u32 %v832, 16
          %v1274 = vrot.slane %v1272, 5
          %v1275 = vsel %vm963, %v1270, %v1274
          %v1277 = vshrl.u32 %v833, 16
          %v1279 = vrot.slane %v1277, 4
          %v1280 = vshll.u32 %v833, 16
          %v1282 = vrot.slane %v1280, 5
          %v1283 = vor.u32 %v1279, %v1282
          %v1284 = vrot.slane %v1283, 4
          %v1286 = vshll.u32 %v834, 16
          %v1288 = vrot.slane %v1286, 5
          %v1289 = vsel %vm963, %v1284, %v1288
          %v1290 = vshrl.u32 %v834, 16
          %v1292 = vrot.slane %v1290, 4
          %v1293 = vor.u32 %v1292, %v1288
          %v1294 = vrot.slane %v1293, 4
          %v1296 = vshll.u32 %v835, 16
          %v1298 = vrot.slane %v1296, 5
          %v1299 = vsel %vm963, %v1294, %v1298
          %v1301 = vshrl.u32 %v836, 16
          %v1303 = vrot.slane %v1301, 4
          %v1304 = vshll.u32 %v836, 16
          %v1306 = vrot.slane %v1304, 5
          %v1307 = vor.u32 %v1303, %v1306
          %v1308 = vrot.slane %v1307, 4
          %v1310 = vshll.u32 %v837, 16
          %v1312 = vrot.slane %v1310, 5
          %v1313 = vsel %vm963, %v1308, %v1312
          %v1314 = vshrl.u32 %v837, 16
          %v1316 = vrot.slane %v1314, 4
          %v1317 = vor.u32 %v1316, %v1312
          %v1318 = vrot.slane %v1317, 4
          %v1320 = vshll.u32 %v838, 16
          %v1322 = vrot.slane %v1320, 5
          %v1323 = vsel %vm963, %v1318, %v1322
          %v1325 = vshrl.u32 %v839, 16
          %v1327 = vrot.slane %v1325, 4
          %v1328 = vshll.u32 %v839, 16
          %v1330 = vrot.slane %v1328, 5
          %v1331 = vor.u32 %v1327, %v1330
          %v1332 = vrot.slane %v1331, 4
          %v1334 = vshll.u32 %v840, 16
          %v1336 = vrot.slane %v1334, 5
          %v1337 = vsel %vm963, %v1332, %v1336
          %v1338 = vshrl.u32 %v840, 16
          %v1340 = vrot.slane %v1338, 4
          %v1341 = vor.u32 %v1340, %v1336
          %v1342 = vrot.slane %v1341, 4
          %v1344 = vshll.u32 %v841, 16
          %v1346 = vrot.slane %v1344, 5
          %v1347 = vsel %vm963, %v1342, %v1346
          %v1348 = vunpack.c.l.b16 %v977
          %v1349 = vunpack.c.l.b16 %v987
          %v1350 = vunpack.c.l.b16 %v1001
          %v1351 = vunpack.c.l.b16 %v1011
          %v1352 = vunpack.c.l.b16 %v1025
          %v1353 = vunpack.c.l.b16 %v1035
          %v1354 = vunpack.c.l.b16 %v1049
          %v1355 = vunpack.c.l.b16 %v1059
          %v1356 = vunpack.c.l.b16 %v1073
          %v1357 = vunpack.c.l.b16 %v1083
          %v1358 = vunpack.c.l.b16 %v1097
          %v1359 = vunpack.c.l.b16 %v1107
          %v1360 = vunpack.c.l.b16 %v1121
          %v1361 = vunpack.c.l.b16 %v1131
          %v1362 = vunpack.c.l.b16 %v1145
          %v1363 = vunpack.c.l.b16 %v1155
          %v1364 = vunpack.c.l.b16 %v1169
          %v1365 = vunpack.c.l.b16 %v1179
          %v1366 = vunpack.c.l.b16 %v1193
          %v1367 = vunpack.c.l.b16 %v1203
          %v1368 = vunpack.c.l.b16 %v1217
          %v1369 = vunpack.c.l.b16 %v1227
          %v1370 = vunpack.c.l.b16 %v1241
          %v1371 = vunpack.c.l.b16 %v1251
          %v1372 = vunpack.c.l.b16 %v1265
          %v1373 = vunpack.c.l.b16 %v1275
          %v1374 = vunpack.c.l.b16 %v1289
          %v1375 = vunpack.c.l.b16 %v1299
          %v1376 = vunpack.c.l.b16 %v1313
          %v1377 = vunpack.c.l.b16 %v1323
          %v1378 = vunpack.c.l.b16 %v1337
          %v1379 = vunpack.c.l.b16 %v1347
          %v1380 = vpack.c.b16 %v1349, %v1348
          %v1381 = vpack.c.b16 %v1351, %v1350
          %v1382 = vpack.c.b16 %v1353, %v1352
          %v1383 = vpack.c.b16 %v1355, %v1354
          %v1384 = vpack.c.b16 %v1357, %v1356
          %v1385 = vpack.c.b16 %v1359, %v1358
          %v1386 = vpack.c.b16 %v1361, %v1360
          %v1387 = vpack.c.b16 %v1363, %v1362
          %v1388 = vpack.c.b16 %v1365, %v1364
          %v1389 = vpack.c.b16 %v1367, %v1366
          %v1390 = vpack.c.b16 %v1369, %v1368
          %v1391 = vpack.c.b16 %v1371, %v1370
          %v1392 = vpack.c.b16 %v1373, %v1372
          %v1393 = vpack.c.b16 %v1375, %v1374
          %v1394 = vpack.c.b16 %v1377, %v1376
          %v1395 = vpack.c.b16 %v1379, %v1378
          %1396 = vrot.lane.b32.xlu0 %v1380, 32
          %v1397 = vpop.permute.xlu0 %1396
          %1398 = vrot.lane.b32.xlu0 %v1381, 32
          %v1399 = vpop.permute.xlu0 %1398
          %1400 = vrot.lane.b32.xlu0 %v1382, 32
          %v1401 = vpop.permute.xlu0 %1400
          %1402 = vrot.lane.b32.xlu0 %v1383, 32
          %v1403 = vpop.permute.xlu0 %1402
          %1404 = vrot.lane.b32.xlu0 %v1384, 32
          %v1405 = vpop.permute.xlu0 %1404
          %1406 = vrot.lane.b32.xlu0 %v1385, 32
          %v1407 = vpop.permute.xlu0 %1406
          %1408 = vrot.lane.b32.xlu0 %v1386, 32
          %v1409 = vpop.permute.xlu0 %1408
          %1410 = vrot.lane.b32.xlu0 %v1387, 32
          %v1411 = vpop.permute.xlu0 %1410
          %1412 = vrot.lane.b32.xlu0 %v1388, 32
          %v1413 = vpop.permute.xlu0 %1412
          %1414 = vrot.lane.b32.xlu0 %v1389, 32
          %v1415 = vpop.permute.xlu0 %1414
          %1416 = vrot.lane.b32.xlu0 %v1390, 32
          %v1417 = vpop.permute.xlu0 %1416
          %1418 = vrot.lane.b32.xlu0 %v1391, 32
          %v1419 = vpop.permute.xlu0 %1418
          %1420 = vrot.lane.b32.xlu0 %v1392, 32
          %v1421 = vpop.permute.xlu0 %1420
          %1422 = vrot.lane.b32.xlu0 %v1393, 32
          %v1423 = vpop.permute.xlu0 %1422
          %1424 = vrot.lane.b32.xlu0 %v1394, 32
          %v1425 = vpop.permute.xlu0 %1424
          %1426 = vrot.lane.b32.xlu0 %v1395, 32
          %v1427 = vpop.permute.xlu0 %1426
          %vm1444 = vcmask 523520
          %1445 = vst.msk [vmem:[#allocation3] sm:$0xff] %vm1444, %v1397
          %1446 = vst.msk [vmem:[#allocation3 + $0x18] sm:$0xff] %vm1444, %v1399
          %1447 = vst.msk [vmem:[#allocation3 + $0x30] sm:$0xff] %vm1444, %v1401
          %1448 = vst.msk [vmem:[#allocation3 + $0x48] sm:$0xff] %vm1444, %v1403
          %1449 = vst.msk [vmem:[#allocation3 + $0x60] sm:$0xff] %vm1444, %v1405
          %1450 = vst.msk [vmem:[#allocation3 + $0x78] sm:$0xff] %vm1444, %v1407
          %1451 = vst.msk [vmem:[#allocation3 + $0x90] sm:$0xff] %vm1444, %v1409
          %1452 = vst.msk [vmem:[#allocation3 + $0xa8] sm:$0xff] %vm1444, %v1411
          %1453 = vst.msk [vmem:[#allocation3 + $0xc0] sm:$0xff] %vm1444, %v1413
          %1454 = vst.msk [vmem:[#allocation3 + $0xd8] sm:$0xff] %vm1444, %v1415
          %1455 = vst.msk [vmem:[#allocation3 + $0xf0] sm:$0xff] %vm1444, %v1417
          %1456 = vst.msk [vmem:[#allocation3 + $0x108] sm:$0xff] %vm1444, %v1419
          %1457 = vst.msk [vmem:[#allocation3 + $0x120] sm:$0xff] %vm1444, %v1421
          %1458 = vst.msk [vmem:[#allocation3 + $0x138] sm:$0xff] %vm1444, %v1423
          %1459 = vst.msk [vmem:[#allocation3 + $0x150] sm:$0xff] %vm1444, %v1425
          %1460 = vst.msk [vmem:[#allocation3 + $0x168] sm:$0xff] %vm1444, %v1427
          %vm1477 = vcmask 1042432
          %vm1478 = vcmask 1046532
          %vm1479 = vmor %vm1477, %vm1478
          %v1480 = vrot.slane %v794, 5
          %v1481 = vrot.slane %v1480, 4
          %v1482 = vrot.slane %v795, 5
          %v1483 = vsel %vm1479, %v1481, %v1482
          %v1484 = vrot.slane %v1482, 4
          %v1485 = vrot.slane %v796, 5
          %v1486 = vsel %vm1479, %v1484, %v1485
          %v1487 = vrot.slane %v797, 5
          %v1488 = vrot.slane %v1487, 4
          %v1489 = vrot.slane %v798, 5
          %v1490 = vsel %vm1479, %v1488, %v1489
          %v1491 = vrot.slane %v1489, 4
          %v1492 = vrot.slane %v799, 5
          %v1493 = vsel %vm1479, %v1491, %v1492
          %v1494 = vrot.slane %v800, 5
          %v1495 = vrot.slane %v1494, 4
          %v1496 = vrot.slane %v801, 5
          %v1497 = vsel %vm1479, %v1495, %v1496
          %v1498 = vrot.slane %v1496, 4
          %v1499 = vrot.slane %v802, 5
          %v1500 = vsel %vm1479, %v1498, %v1499
          %v1501 = vrot.slane %v803, 5
          %v1502 = vrot.slane %v1501, 4
          %v1503 = vrot.slane %v804, 5
          %v1504 = vsel %vm1479, %v1502, %v1503
          %v1505 = vrot.slane %v1503, 4
          %v1506 = vrot.slane %v805, 5
          %v1507 = vsel %vm1479, %v1505, %v1506
          %v1508 = vrot.slane %v806, 5
          %v1509 = vrot.slane %v1508, 4
          %v1510 = vrot.slane %v807, 5
          %v1511 = vsel %vm1479, %v1509, %v1510
          %v1512 = vrot.slane %v1510, 4
          %v1513 = vrot.slane %v808, 5
          %v1514 = vsel %vm1479, %v1512, %v1513
          %v1515 = vrot.slane %v809, 5
          %v1516 = vrot.slane %v1515, 4
          %v1517 = vrot.slane %v810, 5
          %v1518 = vsel %vm1479, %v1516, %v1517
          %v1519 = vrot.slane %v1517, 4
          %v1520 = vrot.slane %v811, 5
          %v1521 = vsel %vm1479, %v1519, %v1520
          %v1522 = vrot.slane %v812, 5
          %v1523 = vrot.slane %v1522, 4
          %v1524 = vrot.slane %v813, 5
          %v1525 = vsel %vm1479, %v1523, %v1524
          %v1526 = vrot.slane %v1524, 4
          %v1527 = vrot.slane %v814, 5
          %v1528 = vsel %vm1479, %v1526, %v1527
          %v1529 = vrot.slane %v815, 5
          %v1530 = vrot.slane %v1529, 4
          %v1531 = vrot.slane %v816, 5
          %v1532 = vsel %vm1479, %v1530, %v1531
          %v1533 = vrot.slane %v1531, 4
          %v1534 = vrot.slane %v817, 5
          %v1535 = vsel %vm1479, %v1533, %v1534
          %v1536 = vrot.slane %v818, 5
          %v1537 = vrot.slane %v1536, 4
          %v1538 = vrot.slane %v819, 5
          %v1539 = vsel %vm1479, %v1537, %v1538
          %v1540 = vrot.slane %v1538, 4
          %v1541 = vrot.slane %v820, 5
          %v1542 = vsel %vm1479, %v1540, %v1541
          %v1543 = vrot.slane %v821, 5
          %v1544 = vrot.slane %v1543, 4
          %v1545 = vrot.slane %v822, 5
          %v1546 = vsel %vm1479, %v1544, %v1545
          %v1547 = vrot.slane %v1545, 4
          %v1548 = vrot.slane %v823, 5
          %v1549 = vsel %vm1479, %v1547, %v1548
          %v1550 = vrot.slane %v824, 5
          %v1551 = vrot.slane %v1550, 4
          %v1552 = vrot.slane %v825, 5
          %v1553 = vsel %vm1479, %v1551, %v1552
          %v1554 = vrot.slane %v1552, 4
          %v1555 = vrot.slane %v826, 5
          %v1556 = vsel %vm1479, %v1554, %v1555
          %v1557 = vrot.slane %v827, 5
          %v1558 = vrot.slane %v1557, 4
          %v1559 = vrot.slane %v828, 5
          %v1560 = vsel %vm1479, %v1558, %v1559
          %v1561 = vrot.slane %v1559, 4
          %v1562 = vrot.slane %v829, 5
          %v1563 = vsel %vm1479, %v1561, %v1562
          %v1564 = vrot.slane %v830, 5
          %v1565 = vrot.slane %v1564, 4
          %v1566 = vrot.slane %v831, 5
          %v1567 = vsel %vm1479, %v1565, %v1566
          %v1568 = vrot.slane %v1566, 4
          %v1569 = vrot.slane %v832, 5
          %v1570 = vsel %vm1479, %v1568, %v1569
          %v1571 = vrot.slane %v833, 5
          %v1572 = vrot.slane %v1571, 4
          %v1573 = vrot.slane %v834, 5
          %v1574 = vsel %vm1479, %v1572, %v1573
          %v1575 = vrot.slane %v1573, 4
          %v1576 = vrot.slane %v835, 5
          %v1577 = vsel %vm1479, %v1575, %v1576
          %v1578 = vrot.slane %v836, 5
          %v1579 = vrot.slane %v1578, 4
          %v1580 = vrot.slane %v837, 5
          %v1581 = vsel %vm1479, %v1579, %v1580
          %v1582 = vrot.slane %v1580, 4
          %v1583 = vrot.slane %v838, 5
          %v1584 = vsel %vm1479, %v1582, %v1583
          %v1585 = vrot.slane %v839, 5
          %v1586 = vrot.slane %v1585, 4
          %v1587 = vrot.slane %v840, 5
          %v1588 = vsel %vm1479, %v1586, %v1587
          %v1589 = vrot.slane %v1587, 4
          %v1590 = vrot.slane %v841, 5
          %v1591 = vsel %vm1479, %v1589, %v1590
          %v1592 = vunpack.c.l.b16 %v1483
          %v1593 = vunpack.c.l.b16 %v1486
          %v1594 = vunpack.c.l.b16 %v1490
          %v1595 = vunpack.c.l.b16 %v1493
          %v1596 = vunpack.c.l.b16 %v1497
          %v1597 = vunpack.c.l.b16 %v1500
          %v1598 = vunpack.c.l.b16 %v1504
          %v1599 = vunpack.c.l.b16 %v1507
          %v1600 = vunpack.c.l.b16 %v1511
          %v1601 = vunpack.c.l.b16 %v1514
          %v1602 = vunpack.c.l.b16 %v1518
          %v1603 = vunpack.c.l.b16 %v1521
          %v1604 = vunpack.c.l.b16 %v1525
          %v1605 = vunpack.c.l.b16 %v1528
          %v1606 = vunpack.c.l.b16 %v1532
          %v1607 = vunpack.c.l.b16 %v1535
          %v1608 = vunpack.c.l.b16 %v1539
          %v1609 = vunpack.c.l.b16 %v1542
          %v1610 = vunpack.c.l.b16 %v1546
          %v1611 = vunpack.c.l.b16 %v1549
          %v1612 = vunpack.c.l.b16 %v1553
          %v1613 = vunpack.c.l.b16 %v1556
          %v1614 = vunpack.c.l.b16 %v1560
          %v1615 = vunpack.c.l.b16 %v1563
          %v1616 = vunpack.c.l.b16 %v1567
          %v1617 = vunpack.c.l.b16 %v1570
          %v1618 = vunpack.c.l.b16 %v1574
          %v1619 = vunpack.c.l.b16 %v1577
          %v1620 = vunpack.c.l.b16 %v1581
          %v1621 = vunpack.c.l.b16 %v1584
          %v1622 = vunpack.c.l.b16 %v1588
          %v1623 = vunpack.c.l.b16 %v1591
          %v1624 = vpack.c.b16 %v1593, %v1592
          %v1625 = vpack.c.b16 %v1595, %v1594
          %v1626 = vpack.c.b16 %v1597, %v1596
          %v1627 = vpack.c.b16 %v1599, %v1598
          %v1628 = vpack.c.b16 %v1601, %v1600
          %v1629 = vpack.c.b16 %v1603, %v1602
          %v1630 = vpack.c.b16 %v1605, %v1604
          %v1631 = vpack.c.b16 %v1607, %v1606
          %v1632 = vpack.c.b16 %v1609, %v1608
          %v1633 = vpack.c.b16 %v1611, %v1610
          %v1634 = vpack.c.b16 %v1613, %v1612
          %v1635 = vpack.c.b16 %v1615, %v1614
          %v1636 = vpack.c.b16 %v1617, %v1616
          %v1637 = vpack.c.b16 %v1619, %v1618
          %v1638 = vpack.c.b16 %v1621, %v1620
          %v1639 = vpack.c.b16 %v1623, %v1622
          %1640 = vrot.lane.b32.xlu0 %v1624, 64
          %v1641 = vpop.permute.xlu0 %1640
          %1642 = vrot.lane.b32.xlu0 %v1625, 64
          %v1643 = vpop.permute.xlu0 %1642
          %1644 = vrot.lane.b32.xlu0 %v1626, 64
          %v1645 = vpop.permute.xlu0 %1644
          %1646 = vrot.lane.b32.xlu0 %v1627, 64
          %v1647 = vpop.permute.xlu0 %1646
          %1648 = vrot.lane.b32.xlu0 %v1628, 64
          %v1649 = vpop.permute.xlu0 %1648
          %1650 = vrot.lane.b32.xlu0 %v1629, 64
          %v1651 = vpop.permute.xlu0 %1650
          %1652 = vrot.lane.b32.xlu0 %v1630, 64
          %v1653 = vpop.permute.xlu0 %1652
          %1654 = vrot.lane.b32.xlu0 %v1631, 64
          %v1655 = vpop.permute.xlu0 %1654
          %1656 = vrot.lane.b32.xlu0 %v1632, 64
          %v1657 = vpop.permute.xlu0 %1656
          %1658 = vrot.lane.b32.xlu0 %v1633, 64
          %v1659 = vpop.permute.xlu0 %1658
          %1660 = vrot.lane.b32.xlu0 %v1634, 64
          %v1661 = vpop.permute.xlu0 %1660
          %1662 = vrot.lane.b32.xlu0 %v1635, 64
          %v1663 = vpop.permute.xlu0 %1662
          %1664 = vrot.lane.b32.xlu0 %v1636, 64
          %v1665 = vpop.permute.xlu0 %1664
          %1666 = vrot.lane.b32.xlu0 %v1637, 64
          %v1667 = vpop.permute.xlu0 %1666
          %1668 = vrot.lane.b32.xlu0 %v1638, 64
          %v1669 = vpop.permute.xlu0 %1668
          %1670 = vrot.lane.b32.xlu0 %v1639, 64
          %v1671 = vpop.permute.xlu0 %1670
          %vm1688 = vcmask 785920
          %1689 = vst.msk [vmem:[#allocation3] sm:$0xff] %vm1688, %v1641
          %1690 = vst.msk [vmem:[#allocation3 + $0x18] sm:$0xff] %vm1688, %v1643
          %1691 = vst.msk [vmem:[#allocation3 + $0x30] sm:$0xff] %vm1688, %v1645
          %1692 = vst.msk [vmem:[#allocation3 + $0x48] sm:$0xff] %vm1688, %v1647
          %1693 = vst.msk [vmem:[#allocation3 + $0x60] sm:$0xff] %vm1688, %v1649
          %1694 = vst.msk [vmem:[#allocation3 + $0x78] sm:$0xff] %vm1688, %v1651
          %1695 = vst.msk [vmem:[#allocation3 + $0x90] sm:$0xff] %vm1688, %v1653
          %1696 = vst.msk [vmem:[#allocation3 + $0xa8] sm:$0xff] %vm1688, %v1655
          %1697 = vst.msk [vmem:[#allocation3 + $0xc0] sm:$0xff] %vm1688, %v1657
          %1698 = vst.msk [vmem:[#allocation3 + $0xd8] sm:$0xff] %vm1688, %v1659
          %1699 = vst.msk [vmem:[#allocation3 + $0xf0] sm:$0xff] %vm1688, %v1661
          %1700 = vst.msk [vmem:[#allocation3 + $0x108] sm:$0xff] %vm1688, %v1663
          %1701 = vst.msk [vmem:[#allocation3 + $0x120] sm:$0xff] %vm1688, %v1665
          %1702 = vst.msk [vmem:[#allocation3 + $0x138] sm:$0xff] %vm1688, %v1667
          %1703 = vst.msk [vmem:[#allocation3 + $0x150] sm:$0xff] %vm1688, %v1669
          %1704 = vst.msk [vmem:[#allocation3 + $0x168] sm:$0xff] %vm1688, %v1671
          %v1707 = vunpack.c.l.b16 %v842
          %v1708 = vunpack.c.l.b16 %v843
          %v1709 = vpack.c.b16 %v1708, %v1707
          %1710 = vrot.lane.b32.xlu0 %v913, 96
          %v1711 = vpop.permute.xlu0 %1710
          %1712 = vrot.lane.b32.xlu0 %v914, 96
          %v1713 = vpop.permute.xlu0 %1712
          %1714 = vrot.lane.b32.xlu0 %v915, 96
          %v1715 = vpop.permute.xlu0 %1714
          %1716 = vrot.lane.b32.xlu0 %v916, 96
          %v1717 = vpop.permute.xlu0 %1716
          %1718 = vrot.lane.b32.xlu0 %v917, 96
          %v1719 = vpop.permute.xlu0 %1718
          %1720 = vrot.lane.b32.xlu0 %v918, 96
          %v1721 = vpop.permute.xlu0 %1720
          %1722 = vrot.lane.b32.xlu0 %v919, 96
          %v1723 = vpop.permute.xlu0 %1722
          %1724 = vrot.lane.b32.xlu0 %v920, 96
          %v1725 = vpop.permute.xlu0 %1724
          %1726 = vrot.lane.b32.xlu0 %v921, 96
          %v1727 = vpop.permute.xlu0 %1726
          %1728 = vrot.lane.b32.xlu0 %v922, 96
          %v1729 = vpop.permute.xlu0 %1728
          %1730 = vrot.lane.b32.xlu0 %v923, 96
          %v1731 = vpop.permute.xlu0 %1730
          %1732 = vrot.lane.b32.xlu0 %v924, 96
          %v1733 = vpop.permute.xlu0 %1732
          %1734 = vrot.lane.b32.xlu0 %v925, 96
          %v1735 = vpop.permute.xlu0 %1734
          %1736 = vrot.lane.b32.xlu0 %v926, 96
          %v1737 = vpop.permute.xlu0 %1736
          %1738 = vrot.lane.b32.xlu0 %v927, 96
          %v1739 = vpop.permute.xlu0 %1738
          %1740 = vrot.lane.b32.xlu0 %v1709, 96
          %v1741 = vpop.permute.xlu0 %1740
          %vm1758 = vcmask 1048320
          %1759 = vst.msk [vmem:[#allocation3] sm:$0xff] %vm1758, %v1711
          %1760 = vst.msk [vmem:[#allocation3 + $0x18] sm:$0xff] %vm1758, %v1713
          %1761 = vst.msk [vmem:[#allocation3 + $0x30] sm:$0xff] %vm1758, %v1715
          %1762 = vst.msk [vmem:[#allocation3 + $0x48] sm:$0xff] %vm1758, %v1717
          %1763 = vst.msk [vmem:[#allocation3 + $0x60] sm:$0xff] %vm1758, %v1719
          %1764 = vst.msk [vmem:[#allocation3 + $0x78] sm:$0xff] %vm1758, %v1721
          %1765 = vst.msk [vmem:[#allocation3 + $0x90] sm:$0xff] %vm1758, %v1723
          %1766 = vst.msk [vmem:[#allocation3 + $0xa8] sm:$0xff] %vm1758, %v1725
          %1767 = vst.msk [vmem:[#allocation3 + $0xc0] sm:$0xff] %vm1758, %v1727
          %1768 = vst.msk [vmem:[#allocation3 + $0xd8] sm:$0xff] %vm1758, %v1729
          %1769 = vst.msk [vmem:[#allocation3 + $0xf0] sm:$0xff] %vm1758, %v1731
          %1770 = vst.msk [vmem:[#allocation3 + $0x108] sm:$0xff] %vm1758, %v1733
          %1771 = vst.msk [vmem:[#allocation3 + $0x120] sm:$0xff] %vm1758, %v1735
          %1772 = vst.msk [vmem:[#allocation3 + $0x138] sm:$0xff] %vm1758, %v1737
          %1773 = vst.msk [vmem:[#allocation3 + $0x150] sm:$0xff] %vm1758, %v1739
          %1774 = vst.msk [vmem:[#allocation3 + $0x168] sm:$0xff] %vm1758, %v1741
          %v1776 = vshrl.u32 %v842, 16
          %v1778 = vrot.slane %v1776, 4
          %v1779 = vshll.u32 %v842, 16
          %v1781 = vrot.slane %v1779, 5
          %v1782 = vor.u32 %v1778, %v1781
          %v1783 = vrot.slane %v1782, 4
          %v1785 = vshll.u32 %v843, 16
          %v1787 = vrot.slane %v1785, 5
          %v1788 = vsel %vm963, %v1783, %v1787
          %v1789 = vshrl.u32 %v843, 16
          %v1791 = vrot.slane %v1789, 4
          %v1792 = vor.u32 %v1791, %v1787
          %v1793 = vrot.slane %v1792, 4
          %v1795 = vshll.u32 %v844, 16
          %v1797 = vrot.slane %v1795, 5
          %v1798 = vsel %vm963, %v1793, %v1797
          %v1799 = vunpack.c.l.b16 %v1788
          %v1800 = vunpack.c.l.b16 %v1798
          %v1801 = vpack.c.b16 %v1800, %v1799
          %1818 = vst.msk [vmem:[#allocation3 + $0x8] sm:$0xff] %vm944, %v1381
          %1819 = vst.msk [vmem:[#allocation3 + $0x20] sm:$0xff] %vm944, %v1382
          %1820 = vst.msk [vmem:[#allocation3 + $0x38] sm:$0xff] %vm944, %v1383
          %1821 = vst.msk [vmem:[#allocation3 + $0x50] sm:$0xff] %vm944, %v1384
          %1822 = vst.msk [vmem:[#allocation3 + $0x68] sm:$0xff] %vm944, %v1385
          %1823 = vst.msk [vmem:[#allocation3 + $0x80] sm:$0xff] %vm944, %v1386
          %1824 = vst.msk [vmem:[#allocation3 + $0x98] sm:$0xff] %vm944, %v1387
          %1825 = vst.msk [vmem:[#allocation3 + $0xb0] sm:$0xff] %vm944, %v1388
          %1826 = vst.msk [vmem:[#allocation3 + $0xc8] sm:$0xff] %vm944, %v1389
          %1827 = vst.msk [vmem:[#allocation3 + $0xe0] sm:$0xff] %vm944, %v1390
          %1828 = vst.msk [vmem:[#allocation3 + $0xf8] sm:$0xff] %vm944, %v1391
          %1829 = vst.msk [vmem:[#allocation3 + $0x110] sm:$0xff] %vm944, %v1392
          %1830 = vst.msk [vmem:[#allocation3 + $0x128] sm:$0xff] %vm944, %v1393
          %1831 = vst.msk [vmem:[#allocation3 + $0x140] sm:$0xff] %vm944, %v1394
          %1832 = vst.msk [vmem:[#allocation3 + $0x158] sm:$0xff] %vm944, %v1395
          %1833 = vst.msk [vmem:[#allocation3 + $0x170] sm:$0xff] %vm944, %v1801
          %v1835 = vrot.slane %v842, 5
          %v1836 = vrot.slane %v1835, 4
          %v1837 = vrot.slane %v843, 5
          %v1838 = vsel %vm1479, %v1836, %v1837
          %v1839 = vrot.slane %v1837, 4
          %v1840 = vrot.slane %v844, 5
          %v1841 = vsel %vm1479, %v1839, %v1840
          %v1842 = vunpack.c.l.b16 %v1838
          %v1843 = vunpack.c.l.b16 %v1841
          %v1844 = vpack.c.b16 %v1843, %v1842
          %1845 = vrot.lane.b32.xlu0 %v1625, 32
          %v1846 = vpop.permute.xlu0 %1845
          %1847 = vrot.lane.b32.xlu0 %v1626, 32
          %v1848 = vpop.permute.xlu0 %1847
          %1849 = vrot.lane.b32.xlu0 %v1627, 32
          %v1850 = vpop.permute.xlu0 %1849
          %1851 = vrot.lane.b32.xlu0 %v1628, 32
          %v1852 = vpop.permute.xlu0 %1851
          %1853 = vrot.lane.b32.xlu0 %v1629, 32
          %v1854 = vpop.permute.xlu0 %1853
          %1855 = vrot.lane.b32.xlu0 %v1630, 32
          %v1856 = vpop.permute.xlu0 %1855
          %1857 = vrot.lane.b32.xlu0 %v1631, 32
          %v1858 = vpop.permute.xlu0 %1857
          %1859 = vrot.lane.b32.xlu0 %v1632, 32
          %v1860 = vpop.permute.xlu0 %1859
          %1861 = vrot.lane.b32.xlu0 %v1633, 32
          %v1862 = vpop.permute.xlu0 %1861
          %1863 = vrot.lane.b32.xlu0 %v1634, 32
          %v1864 = vpop.permute.xlu0 %1863
          %1865 = vrot.lane.b32.xlu0 %v1635, 32
          %v1866 = vpop.permute.xlu0 %1865
          %1867 = vrot.lane.b32.xlu0 %v1636, 32
          %v1868 = vpop.permute.xlu0 %1867
          %1869 = vrot.lane.b32.xlu0 %v1637, 32
          %v1870 = vpop.permute.xlu0 %1869
          %1871 = vrot.lane.b32.xlu0 %v1638, 32
          %v1872 = vpop.permute.xlu0 %1871
          %1873 = vrot.lane.b32.xlu0 %v1639, 32
          %v1874 = vpop.permute.xlu0 %1873
          %1875 = vrot.lane.b32.xlu0 %v1844, 32
          %v1876 = vpop.permute.xlu0 %1875
          %1893 = vst.msk [vmem:[#allocation3 + $0x8] sm:$0xff] %vm1444, %v1846
          %1894 = vst.msk [vmem:[#allocation3 + $0x20] sm:$0xff] %vm1444, %v1848
          %1895 = vst.msk [vmem:[#allocation3 + $0x38] sm:$0xff] %vm1444, %v1850
          %1896 = vst.msk [vmem:[#allocation3 + $0x50] sm:$0xff] %vm1444, %v1852
          %1897 = vst.msk [vmem:[#allocation3 + $0x68] sm:$0xff] %vm1444, %v1854
          %1898 = vst.msk [vmem:[#allocation3 + $0x80] sm:$0xff] %vm1444, %v1856
          %1899 = vst.msk [vmem:[#allocation3 + $0x98] sm:$0xff] %vm1444, %v1858
          %1900 = vst.msk [vmem:[#allocation3 + $0xb0] sm:$0xff] %vm1444, %v1860
          %1901 = vst.msk [vmem:[#allocation3 + $0xc8] sm:$0xff] %vm1444, %v1862
          %1902 = vst.msk [vmem:[#allocation3 + $0xe0] sm:$0xff] %vm1444, %v1864
          %1903 = vst.msk [vmem:[#allocation3 + $0xf8] sm:$0xff] %vm1444, %v1866
          %1904 = vst.msk [vmem:[#allocation3 + $0x110] sm:$0xff] %vm1444, %v1868
          %1905 = vst.msk [vmem:[#allocation3 + $0x128] sm:$0xff] %vm1444, %v1870
          %1906 = vst.msk [vmem:[#allocation3 + $0x140] sm:$0xff] %vm1444, %v1872
          %1907 = vst.msk [vmem:[#allocation3 + $0x158] sm:$0xff] %vm1444, %v1874
          %1908 = vst.msk [vmem:[#allocation3 + $0x170] sm:$0xff] %vm1444, %v1876
          %v1911 = vunpack.c.l.b16 %v845
          %v1912 = vunpack.c.l.b16 %v846
          %v1913 = vpack.c.b16 %v1912, %v1911
          %1914 = vrot.lane.b32.xlu0 %v914, 64
          %v1915 = vpop.permute.xlu0 %1914
          %1916 = vrot.lane.b32.xlu0 %v915, 64
          %v1917 = vpop.permute.xlu0 %1916
          %1918 = vrot.lane.b32.xlu0 %v916, 64
          %v1919 = vpop.permute.xlu0 %1918
          %1920 = vrot.lane.b32.xlu0 %v917, 64
          %v1921 = vpop.permute.xlu0 %1920
          %1922 = vrot.lane.b32.xlu0 %v918, 64
          %v1923 = vpop.permute.xlu0 %1922
          %1924 = vrot.lane.b32.xlu0 %v919, 64
          %v1925 = vpop.permute.xlu0 %1924
          %1926 = vrot.lane.b32.xlu0 %v920, 64
          %v1927 = vpop.permute.xlu0 %1926
          %1928 = vrot.lane.b32.xlu0 %v921, 64
          %v1929 = vpop.permute.xlu0 %1928
          %1930 = vrot.lane.b32.xlu0 %v922, 64
          %v1931 = vpop.permute.xlu0 %1930
          %1932 = vrot.lane.b32.xlu0 %v923, 64
          %v1933 = vpop.permute.xlu0 %1932
          %1934 = vrot.lane.b32.xlu0 %v924, 64
          %v1935 = vpop.permute.xlu0 %1934
          %1936 = vrot.lane.b32.xlu0 %v925, 64
          %v1937 = vpop.permute.xlu0 %1936
          %1938 = vrot.lane.b32.xlu0 %v926, 64
          %v1939 = vpop.permute.xlu0 %1938
          %1940 = vrot.lane.b32.xlu0 %v927, 64
          %v1941 = vpop.permute.xlu0 %1940
          %1942 = vrot.lane.b32.xlu0 %v1709, 64
          %v1943 = vpop.permute.xlu0 %1942
          %1944 = vrot.lane.b32.xlu0 %v1913, 64
          %v1945 = vpop.permute.xlu0 %1944
          %1962 = vst.msk [vmem:[#allocation3 + $0x8] sm:$0xff] %vm1688, %v1915
          %1963 = vst.msk [vmem:[#allocation3 + $0x20] sm:$0xff] %vm1688, %v1917
          %1964 = vst.msk [vmem:[#allocation3 + $0x38] sm:$0xff] %vm1688, %v1919
          %1965 = vst.msk [vmem:[#allocation3 + $0x50] sm:$0xff] %vm1688, %v1921
          %1966 = vst.msk [vmem:[#allocation3 + $0x68] sm:$0xff] %vm1688, %v1923
          %1967 = vst.msk [vmem:[#allocation3 + $0x80] sm:$0xff] %vm1688, %v1925
          %1968 = vst.msk [vmem:[#allocation3 + $0x98] sm:$0xff] %vm1688, %v1927
          %1969 = vst.msk [vmem:[#allocation3 + $0xb0] sm:$0xff] %vm1688, %v1929
          %1970 = vst.msk [vmem:[#allocation3 + $0xc8] sm:$0xff] %vm1688, %v1931
          %1971 = vst.msk [vmem:[#allocation3 + $0xe0] sm:$0xff] %vm1688, %v1933
          %1972 = vst.msk [vmem:[#allocation3 + $0xf8] sm:$0xff] %vm1688, %v1935
          %1973 = vst.msk [vmem:[#allocation3 + $0x110] sm:$0xff] %vm1688, %v1937
          %1974 = vst.msk [vmem:[#allocation3 + $0x128] sm:$0xff] %vm1688, %v1939
          %1975 = vst.msk [vmem:[#allocation3 + $0x140] sm:$0xff] %vm1688, %v1941
          %1976 = vst.msk [vmem:[#allocation3 + $0x158] sm:$0xff] %vm1688, %v1943
          %1977 = vst.msk [vmem:[#allocation3 + $0x170] sm:$0xff] %vm1688, %v1945
          %v1979 = vshrl.u32 %v845, 16
          %v1981 = vrot.slane %v1979, 4
          %v1982 = vshll.u32 %v845, 16
          %v1984 = vrot.slane %v1982, 5
          %v1985 = vor.u32 %v1981, %v1984
          %v1986 = vrot.slane %v1985, 4
          %v1988 = vshll.u32 %v846, 16
          %v1990 = vrot.slane %v1988, 5
          %v1991 = vsel %vm963, %v1986, %v1990
          %v1992 = vshrl.u32 %v846, 16
          %v1994 = vrot.slane %v1992, 4
          %v1995 = vor.u32 %v1994, %v1990
          %v1996 = vrot.slane %v1995, 4
          %v1998 = vshll.u32 %v847, 16
          %v2000 = vrot.slane %v1998, 5
          %v2001 = vsel %vm963, %v1996, %v2000
          %v2002 = vunpack.c.l.b16 %v1991
          %v2003 = vunpack.c.l.b16 %v2001
          %v2004 = vpack.c.b16 %v2003, %v2002
          %2005 = vrot.lane.b32.xlu0 %v1382, 96
          %v2006 = vpop.permute.xlu0 %2005
          %2007 = vrot.lane.b32.xlu0 %v1383, 96
          %v2008 = vpop.permute.xlu0 %2007
          %2009 = vrot.lane.b32.xlu0 %v1384, 96
          %v2010 = vpop.permute.xlu0 %2009
          %2011 = vrot.lane.b32.xlu0 %v1385, 96
          %v2012 = vpop.permute.xlu0 %2011
          %2013 = vrot.lane.b32.xlu0 %v1386, 96
          %v2014 = vpop.permute.xlu0 %2013
          %2015 = vrot.lane.b32.xlu0 %v1387, 96
          %v2016 = vpop.permute.xlu0 %2015
          %2017 = vrot.lane.b32.xlu0 %v1388, 96
          %v2018 = vpop.permute.xlu0 %2017
          %2019 = vrot.lane.b32.xlu0 %v1389, 96
          %v2020 = vpop.permute.xlu0 %2019
          %2021 = vrot.lane.b32.xlu0 %v1390, 96
          %v2022 = vpop.permute.xlu0 %2021
          %2023 = vrot.lane.b32.xlu0 %v1391, 96
          %v2024 = vpop.permute.xlu0 %2023
          %2025 = vrot.lane.b32.xlu0 %v1392, 96
          %v2026 = vpop.permute.xlu0 %2025
          %2027 = vrot.lane.b32.xlu0 %v1393, 96
          %v2028 = vpop.permute.xlu0 %2027
          %2029 = vrot.lane.b32.xlu0 %v1394, 96
          %v2030 = vpop.permute.xlu0 %2029
          %2031 = vrot.lane.b32.xlu0 %v1395, 96
          %v2032 = vpop.permute.xlu0 %2031
          %2033 = vrot.lane.b32.xlu0 %v1801, 96
          %v2034 = vpop.permute.xlu0 %2033
          %2035 = vrot.lane.b32.xlu0 %v2004, 96
          %v2036 = vpop.permute.xlu0 %2035
          %2053 = vst.msk [vmem:[#allocation3 + $0x8] sm:$0xff] %vm1758, %v2006
          %2054 = vst.msk [vmem:[#allocation3 + $0x20] sm:$0xff] %vm1758, %v2008
          %2055 = vst.msk [vmem:[#allocation3 + $0x38] sm:$0xff] %vm1758, %v2010
          %2056 = vst.msk [vmem:[#allocation3 + $0x50] sm:$0xff] %vm1758, %v2012
          %2057 = vst.msk [vmem:[#allocation3 + $0x68] sm:$0xff] %vm1758, %v2014
          %2058 = vst.msk [vmem:[#allocation3 + $0x80] sm:$0xff] %vm1758, %v2016
          %2059 = vst.msk [vmem:[#allocation3 + $0x98] sm:$0xff] %vm1758, %v2018
          %2060 = vst.msk [vmem:[#allocation3 + $0xb0] sm:$0xff] %vm1758, %v2020
          %2061 = vst.msk [vmem:[#allocation3 + $0xc8] sm:$0xff] %vm1758, %v2022
          %2062 = vst.msk [vmem:[#allocation3 + $0xe0] sm:$0xff] %vm1758, %v2024
          %2063 = vst.msk [vmem:[#allocation3 + $0xf8] sm:$0xff] %vm1758, %v2026
          %2064 = vst.msk [vmem:[#allocation3 + $0x110] sm:$0xff] %vm1758, %v2028
          %2065 = vst.msk [vmem:[#allocation3 + $0x128] sm:$0xff] %vm1758, %v2030
          %2066 = vst.msk [vmem:[#allocation3 + $0x140] sm:$0xff] %vm1758, %v2032
          %2067 = vst.msk [vmem:[#allocation3 + $0x158] sm:$0xff] %vm1758, %v2034
          %2068 = vst.msk [vmem:[#allocation3 + $0x170] sm:$0xff] %vm1758, %v2036
          %v2070 = vrot.slane %v845, 5
          %v2071 = vrot.slane %v2070, 4
          %v2072 = vrot.slane %v846, 5
          %v2073 = vsel %vm1479, %v2071, %v2072
          %v2074 = vrot.slane %v2072, 4
          %v2075 = vrot.slane %v847, 5
          %v2076 = vsel %vm1479, %v2074, %v2075
          %v2077 = vunpack.c.l.b16 %v2073
          %v2078 = vunpack.c.l.b16 %v2076
          %v2079 = vpack.c.b16 %v2078, %v2077
          %2096 = vst.msk [vmem:[#allocation3 + $0x10] sm:$0xff] %vm944, %v1626
          %2097 = vst.msk [vmem:[#allocation3 + $0x28] sm:$0xff] %vm944, %v1627
          %2098 = vst.msk [vmem:[#allocation3 + $0x40] sm:$0xff] %vm944, %v1628
          %2099 = vst.msk [vmem:[#allocation3 + $0x58] sm:$0xff] %vm944, %v1629
          %2100 = vst.msk [vmem:[#allocation3 + $0x70] sm:$0xff] %vm944, %v1630
          %2101 = vst.msk [vmem:[#allocation3 + $0x88] sm:$0xff] %vm944, %v1631
          %2102 = vst.msk [vmem:[#allocation3 + $0xa0] sm:$0xff] %vm944, %v1632
          %2103 = vst.msk [vmem:[#allocation3 + $0xb8] sm:$0xff] %vm944, %v1633
          %2104 = vst.msk [vmem:[#allocation3 + $0xd0] sm:$0xff] %vm944, %v1634
          %2105 = vst.msk [vmem:[#allocation3 + $0xe8] sm:$0xff] %vm944, %v1635
          %2106 = vst.msk [vmem:[#allocation3 + $0x100] sm:$0xff] %vm944, %v1636
          %2107 = vst.msk [vmem:[#allocation3 + $0x118] sm:$0xff] %vm944, %v1637
          %2108 = vst.msk [vmem:[#allocation3 + $0x130] sm:$0xff] %vm944, %v1638
          %2109 = vst.msk [vmem:[#allocation3 + $0x148] sm:$0xff] %vm944, %v1639
          %2110 = vst.msk [vmem:[#allocation3 + $0x160] sm:$0xff] %vm944, %v1844
          %2111 = vst.msk [vmem:[#allocation3 + $0x178] sm:$0xff] %vm944, %v2079
        $region40: #{tpu_custom_call.1} parent=27 // pred_fallthru
          _
        %v2112 = vld [vmem:[#allocation3] sm:$0xff]
        %v2113 = vld [vmem:[#allocation3 + $0x8] sm:$0xff]
        %v2114 = vld [vmem:[#allocation3 + $0x10] sm:$0xff]
        %v2115 = vld [vmem:[#allocation3 + $0x18] sm:$0xff]
        %v2116 = vld [vmem:[#allocation3 + $0x20] sm:$0xff]
        %v2117 = vld [vmem:[#allocation3 + $0x28] sm:$0xff]
        %v2118 = vld [vmem:[#allocation3 + $0x30] sm:$0xff]
        %v2119 = vld [vmem:[#allocation3 + $0x38] sm:$0xff]
        %v2120 = vld [vmem:[#allocation3 + $0x40] sm:$0xff]
        %v2121 = vld [vmem:[#allocation3 + $0x48] sm:$0xff]
        %v2122 = vld [vmem:[#allocation3 + $0x50] sm:$0xff]
        %v2123 = vld [vmem:[#allocation3 + $0x58] sm:$0xff]
        %v2124 = vld [vmem:[#allocation3 + $0x60] sm:$0xff]
        %v2125 = vld [vmem:[#allocation3 + $0x68] sm:$0xff]
        %v2126 = vld [vmem:[#allocation3 + $0x70] sm:$0xff]
        %v2127 = vld [vmem:[#allocation3 + $0x78] sm:$0xff]
        %v2128 = vld [vmem:[#allocation3 + $0x80] sm:$0xff]
        %v2129 = vld [vmem:[#allocation3 + $0x88] sm:$0xff]
        %v2130 = vld [vmem:[#allocation3 + $0x90] sm:$0xff]
        %v2131 = vld [vmem:[#allocation3 + $0x98] sm:$0xff]
        %v2132 = vld [vmem:[#allocation3 + $0xa0] sm:$0xff]
        %v2133 = vld [vmem:[#allocation3 + $0xa8] sm:$0xff]
        %v2134 = vld [vmem:[#allocation3 + $0xb0] sm:$0xff]
        %v2135 = vld [vmem:[#allocation3 + $0xb8] sm:$0xff]
        %v2136 = vld [vmem:[#allocation3 + $0xc0] sm:$0xff]
        %v2137 = vld [vmem:[#allocation3 + $0xc8] sm:$0xff]
        %v2138 = vld [vmem:[#allocation3 + $0xd0] sm:$0xff]
        %v2139 = vld [vmem:[#allocation3 + $0xd8] sm:$0xff]
        %v2140 = vld [vmem:[#allocation3 + $0xe0] sm:$0xff]
        %v2141 = vld [vmem:[#allocation3 + $0xe8] sm:$0xff]
        %v2142 = vld [vmem:[#allocation3 + $0xf0] sm:$0xff]
        %v2143 = vld [vmem:[#allocation3 + $0xf8] sm:$0xff]
        %v2144 = vld [vmem:[#allocation3 + $0x100] sm:$0xff]
        %v2145 = vld [vmem:[#allocation3 + $0x108] sm:$0xff]
        %v2146 = vld [vmem:[#allocation3 + $0x110] sm:$0xff]
        %v2147 = vld [vmem:[#allocation3 + $0x118] sm:$0xff]
        %v2148 = vld [vmem:[#allocation3 + $0x120] sm:$0xff]
        %v2149 = vld [vmem:[#allocation3 + $0x128] sm:$0xff]
        %v2150 = vld [vmem:[#allocation3 + $0x130] sm:$0xff]
        %v2151 = vld [vmem:[#allocation3 + $0x138] sm:$0xff]
        %v2152 = vld [vmem:[#allocation3 + $0x140] sm:$0xff]
        %v2153 = vld [vmem:[#allocation3 + $0x148] sm:$0xff]
        %v2154 = vld [vmem:[#allocation3 + $0x150] sm:$0xff]
        %v2155 = vld [vmem:[#allocation3 + $0x158] sm:$0xff]
        %v2156 = vld [vmem:[#allocation3 + $0x160] sm:$0xff]
        %v2157 = vld [vmem:[#allocation3 + $0x168] sm:$0xff]
        %v2158 = vld [vmem:[#allocation3 + $0x170] sm:$0xff]
        %v2159 = vld [vmem:[#allocation3 + $0x178] sm:$0xff]
        %v2160 = vld [vmem:[#allocation7] sm:$0xf]
        %v2161 = vld [vmem:[#allocation7 + $0x4] sm:$0xf]
        %v2162 = vld [vmem:[#allocation7 + $0x8] sm:$0xf]
        %v2163 = vld [vmem:[#allocation7 + $0xc] sm:$0xf]
        %v2164 = vld [vmem:[#allocation7 + $0x10] sm:$0xf]
        %v2165 = vld [vmem:[#allocation7 + $0x14] sm:$0xf]
        %v2166 = vld [vmem:[#allocation7 + $0x18] sm:$0xf]
        %v2167 = vld [vmem:[#allocation7 + $0x1c] sm:$0xf]
        %v2168 = vld [vmem:[#allocation7 + $0x20] sm:$0xf]
        %v2169 = vld [vmem:[#allocation7 + $0x24] sm:$0xf]
        %v2170 = vld [vmem:[#allocation7 + $0x28] sm:$0xf]
        %v2171 = vld [vmem:[#allocation7 + $0x2c] sm:$0xf]
        %v2172 = vld [vmem:[#allocation7 + $0x30] sm:$0xf]
        %v2173 = vld [vmem:[#allocation7 + $0x34] sm:$0xf]
        %v2174 = vld [vmem:[#allocation7 + $0x38] sm:$0xf]
        %v2175 = vld [vmem:[#allocation7 + $0x3c] sm:$0xf]
        %v2176 = vld [vmem:[#allocation7 + $0x40] sm:$0xf]
        %v2177 = vld [vmem:[#allocation7 + $0x44] sm:$0xf]
        %v2178 = vld [vmem:[#allocation7 + $0x48] sm:$0xf]
        %v2179 = vld [vmem:[#allocation7 + $0x4c] sm:$0xf]
        %v2180 = vld [vmem:[#allocation7 + $0x50] sm:$0xf]
        %v2181 = vld [vmem:[#allocation7 + $0x54] sm:$0xf]
        %v2182 = vld [vmem:[#allocation7 + $0x58] sm:$0xf]
        %v2183 = vld [vmem:[#allocation7 + $0x5c] sm:$0xf]
        %v2184 = vld [vmem:[#allocation7 + $0x60] sm:$0xf]
        %v2185 = vld [vmem:[#allocation7 + $0x64] sm:$0xf]
        %v2186 = vld [vmem:[#allocation7 + $0x68] sm:$0xf]
        %v2187 = vld [vmem:[#allocation7 + $0x6c] sm:$0xf]
        %v2188 = vld [vmem:[#allocation7 + $0x70] sm:$0xf]
        %v2189 = vld [vmem:[#allocation7 + $0x74] sm:$0xf]
        %v2190 = vld [vmem:[#allocation7 + $0x78] sm:$0xf]
        %v2191 = vld [vmem:[#allocation7 + $0x7c] sm:$0xf]
        %v2192 = vld [vmem:[#allocation7 + $0x80] sm:$0xf]
        %v2193 = vld [vmem:[#allocation7 + $0x84] sm:$0xf]
        %v2194 = vld [vmem:[#allocation7 + $0x88] sm:$0xf]
        %v2195 = vld [vmem:[#allocation7 + $0x8c] sm:$0xf]
        %v2232 = vunpack.c.l.b16 %v2160
        %v2233 = vunpack.c.l.b16 %v2161
        %v2234 = vunpack.c.l.b16 %v2162
        %v2235 = vunpack.c.l.b16 %v2163
        %v2236 = vunpack.c.l.b16 %v2164
        %v2237 = vunpack.c.l.b16 %v2165
        %v2238 = vunpack.c.l.b16 %v2166
        %v2239 = vunpack.c.l.b16 %v2167
        %v2240 = vunpack.c.l.b16 %v2168
        %v2241 = vunpack.c.l.b16 %v2169
        %v2242 = vunpack.c.l.b16 %v2170
        %v2243 = vunpack.c.l.b16 %v2171
        %v2244 = vunpack.c.l.b16 %v2172
        %v2245 = vunpack.c.l.b16 %v2173
        %v2246 = vunpack.c.l.b16 %v2174
        %v2247 = vunpack.c.l.b16 %v2175
        %v2248 = vunpack.c.l.b16 %v2176
        %v2249 = vunpack.c.l.b16 %v2177
        %v2250 = vunpack.c.l.b16 %v2178
        %v2251 = vunpack.c.l.b16 %v2179
        %v2252 = vunpack.c.l.b16 %v2180
        %v2253 = vunpack.c.l.b16 %v2181
        %v2254 = vunpack.c.l.b16 %v2182
        %v2255 = vunpack.c.l.b16 %v2183
        %v2256 = vunpack.c.l.b16 %v2184
        %v2257 = vunpack.c.l.b16 %v2185
        %v2258 = vunpack.c.l.b16 %v2186
        %v2259 = vunpack.c.l.b16 %v2187
        %v2260 = vunpack.c.l.b16 %v2188
        %v2261 = vunpack.c.l.b16 %v2189
        %v2262 = vunpack.c.l.b16 %v2190
        %v2263 = vunpack.c.l.b16 %v2191
        %v2264 = vunpack.c.l.b16 %v2192
        %v2265 = vunpack.c.l.b16 %v2193
        %v2266 = vunpack.c.l.b16 %v2194
        %v2267 = vunpack.c.l.b16 %v2195
        %v2268 = vpack.c.b16 %v2233, %v2232
        %v2269 = vpack.c.b16 %v2235, %v2234
        %v2270 = vpack.c.b16 %v2237, %v2236
        %v2271 = vpack.c.b16 %v2239, %v2238
        %v2272 = vpack.c.b16 %v2241, %v2240
        %v2273 = vpack.c.b16 %v2243, %v2242
        %v2274 = vpack.c.b16 %v2245, %v2244
        %v2275 = vpack.c.b16 %v2247, %v2246
        %v2276 = vpack.c.b16 %v2249, %v2248
        %v2277 = vpack.c.b16 %v2251, %v2250
        %v2278 = vpack.c.b16 %v2253, %v2252
        %v2279 = vpack.c.b16 %v2255, %v2254
        %v2280 = vpack.c.b16 %v2257, %v2256
        %v2281 = vpack.c.b16 %v2259, %v2258
        %v2282 = vpack.c.b16 %v2261, %v2260
        %v2283 = vpack.c.b16 %v2263, %v2262
        %v2284 = vpack.c.b16 %v2265, %v2264
        %v2285 = vpack.c.b16 %v2267, %v2266
        %vm2304 = vcmask 261120
        %v2306 = vsel %vm2304, %v2114, 0
        %v2309 = vsel %vm2304, %v2117, 0
        %v2312 = vsel %vm2304, %v2120, 0
        %v2315 = vsel %vm2304, %v2123, 0
        %v2318 = vsel %vm2304, %v2126, 0
        %v2321 = vsel %vm2304, %v2129, 0
        %v2324 = vsel %vm2304, %v2132, 0
        %v2327 = vsel %vm2304, %v2135, 0
        %v2330 = vsel %vm2304, %v2138, 0
        %v2333 = vsel %vm2304, %v2141, 0
        %v2336 = vsel %vm2304, %v2144, 0
        %v2339 = vsel %vm2304, %v2147, 0
        %v2342 = vsel %vm2304, %v2150, 0
        %v2345 = vsel %vm2304, %v2153, 0
        %v2348 = vsel %vm2304, %v2156, 0
        %v2351 = vsel %vm2304, %v2159, 0
        %2353 = vmatprep.subr.bf16.mxu0 0
        %2354 = vmatpush1.bf16.msra.mxu0 %v2268
        %2355 = vmatprep.subr.bf16.mxu0 0
        %2356 = vmatpush1.bf16.msra.mxu0 %v2269
        %2357 = vmatprep.subr.bf16.mxu0 0
        %2358 = vmatpush1.bf16.msra.mxu0 %v2270
        %2359 = vmatprep.subr.bf16.mxu0 0
        %2360 = vmatpush1.bf16.msra.mxu0 %v2271
        %2361 = vmatprep.subr.bf16.mxu0 0
        %2362 = vmatpush1.bf16.msra.mxu0 %v2272
        %2363 = vmatprep.subr.bf16.mxu0 0
        %2364 = vmatpush1.bf16.msra.mxu0 %v2273
        %2365 = vmatprep.subr.bf16.mxu0 0
        %2366 = vmatpush1.bf16.msra.mxu0 %v2274
        %2367 = vmatprep.subr.bf16.mxu0 0
        %2368 = vmatpush1.bf16.msra.mxu0 %v2275
        %2369 = vmatprep.subr.bf16.mxu0 0
        %2370 = vmatpush1.bf16.msra.mxu0 %v2276
        %2371 = vmatprep.subr.bf16.mxu0 0
        %2372 = vmatpush1.bf16.msra.mxu0 %v2277
        %2373 = vmatprep.subr.bf16.mxu0 0
        %2374 = vmatpush1.bf16.msra.mxu0 %v2278
        %2375 = vmatprep.subr.bf16.mxu0 0
        %2376 = vmatpush1.bf16.msra.mxu0 %v2279
        %2377 = vmatprep.subr.bf16.mxu0 0
        %2378 = vmatpush1.bf16.msra.mxu0 %v2280
        %2379 = vmatprep.subr.bf16.mxu0 0
        %2380 = vmatpush1.bf16.msra.mxu0 %v2281
        %2381 = vmatprep.subr.bf16.mxu0 0
        %2382 = vmatpush1.bf16.msra.mxu0 %v2282
        %2383 = vmatprep.subr.bf16.mxu0 0
        %2384 = vmatpush1.bf16.msra.mxu0 %v2283
        %2385 = vmatprep.mubr.bf16.mxu0 %v2113
        %2386 = vmatmul.mubr.bf16.gmra.mrb[0].mxu0 %v2112
        %v2387 = vpop.f32.mrb[0].mxu0
        %v2388 = vadd.f32 0.0, %v2387
        %v2389 = vpop.f32.mrb[0].mxu0
        %v2390 = vpop.f32.mrb[0].mxu0
        %v2391 = vadd.f32 0.0, %v2390
        %v2392 = vpop.f32.mrb[0].mxu0
        %2393 = vmatprep.mubr.bf16.mxu0 %v2116
        %2394 = vmatmul.mubr.bf16.gmra.mrb[0].mxu0 %v2115
        %v2395 = vpop.f32.mrb[0].mxu0
        %v2396 = vadd.f32 0.0, %v2395
        %v2397 = vpop.f32.mrb[0].mxu0
        %v2398 = vpop.f32.mrb[0].mxu0
        %v2399 = vadd.f32 0.0, %v2398
        %v2400 = vpop.f32.mrb[0].mxu0
        %2401 = vmatprep.mubr.bf16.mxu0 %v2119
        %2402 = vmatmul.mubr.bf16.gmra.mrb[0].mxu0 %v2118
        %v2403 = vpop.f32.mrb[0].mxu0
        %v2404 = vadd.f32 0.0, %v2403
        %v2405 = vpop.f32.mrb[0].mxu0
        %v2406 = vpop.f32.mrb[0].mxu0
        %v2407 = vadd.f32 0.0, %v2406
        %v2408 = vpop.f32.mrb[0].mxu0
        %2409 = vmatprep.mubr.bf16.mxu0 %v2122
        %2410 = vmatmul.mubr.bf16.gmra.mrb[0].mxu0 %v2121
        %v2411 = vpop.f32.mrb[0].mxu0
        %v2412 = vadd.f32 0.0, %v2411
        %v2413 = vpop.f32.mrb[0].mxu0
        %v2414 = vpop.f32.mrb[0].mxu0
        %v2415 = vadd.f32 0.0, %v2414
        %v2416 = vpop.f32.mrb[0].mxu0
        %2417 = vmatprep.mubr.bf16.mxu0 %v2125
        %2418 = vmatmul.mubr.bf16.gmra.mrb[0].mxu0 %v2124
        %v2419 = vpop.f32.mrb[0].mxu0
        %v2420 = vadd.f32 0.0, %v2419
        %v2421 = vpop.f32.mrb[0].mxu0
        %v2422 = vpop.f32.mrb[0].mxu0
        %v2423 = vadd.f32 0.0, %v2422
        %v2424 = vpop.f32.mrb[0].mxu0
        %2425 = vmatprep.mubr.bf16.mxu0 %v2128
        %2426 = vmatmul.mubr.bf16.gmra.mrb[0].mxu0 %v2127
        %v2427 = vpop.f32.mrb[0].mxu0
        %v2428 = vadd.f32 0.0, %v2427
        %v2429 = vpop.f32.mrb[0].mxu0
        %v2430 = vpop.f32.mrb[0].mxu0
        %v2431 = vadd.f32 0.0, %v2430
        %v2432 = vpop.f32.mrb[0].mxu0
        %2433 = vmatprep.mubr.bf16.mxu0 %v2131
        %2434 = vmatmul.mubr.bf16.gmra.mrb[0].mxu0 %v2130
        %v2435 = vpop.f32.mrb[0].mxu0
        %v2436 = vadd.f32 0.0, %v2435
        %v2437 = vpop.f32.mrb[0].mxu0
        %v2438 = vpop.f32.mrb[0].mxu0
        %v2439 = vadd.f32 0.0, %v2438
        %v2440 = vpop.f32.mrb[0].mxu0
        %2441 = vmatprep.mubr.bf16.mxu0 %v2134
        %2442 = vmatmul.mubr.bf16.gmra.mrb[0].mxu0 %v2133
        %v2443 = vpop.f32.mrb[0].mxu0
        %v2444 = vadd.f32 0.0, %v2443
        %v2445 = vpop.f32.mrb[0].mxu0
        %v2446 = vpop.f32.mrb[0].mxu0
        %v2447 = vadd.f32 0.0, %v2446
        %v2448 = vpop.f32.mrb[0].mxu0
        %2449 = vmatprep.mubr.bf16.mxu0 %v2137
        %2450 = vmatmul.mubr.bf16.gmra.mrb[0].mxu0 %v2136
        %v2451 = vpop.f32.mrb[0].mxu0
        %v2452 = vadd.f32 0.0, %v2451
        %v2453 = vpop.f32.mrb[0].mxu0
        %v2454 = vpop.f32.mrb[0].mxu0
        %v2455 = vadd.f32 0.0, %v2454
        %v2456 = vpop.f32.mrb[0].mxu0
        %2457 = vmatprep.mubr.bf16.mxu0 %v2140
        %2458 = vmatmul.mubr.bf16.gmra.mrb[0].mxu0 %v2139
        %v2459 = vpop.f32.mrb[0].mxu0
        %v2460 = vadd.f32 0.0, %v2459
        %v2461 = vpop.f32.mrb[0].mxu0
        %v2462 = vpop.f32.mrb[0].mxu0
        %v2463 = vadd.f32 0.0, %v2462
        %v2464 = vpop.f32.mrb[0].mxu0
        %2465 = vmatprep.mubr.bf16.mxu0 %v2143
        %2466 = vmatmul.mubr.bf16.gmra.mrb[0].mxu0 %v2142
        %v2467 = vpop.f32.mrb[0].mxu0
        %v2468 = vadd.f32 0.0, %v2467
        %v2469 = vpop.f32.mrb[0].mxu0
        %v2470 = vpop.f32.mrb[0].mxu0
        %v2471 = vadd.f32 0.0, %v2470
        %v2472 = vpop.f32.mrb[0].mxu0
        %2473 = vmatprep.mubr.bf16.mxu0 %v2146
        %2474 = vmatmul.mubr.bf16.gmra.mrb[0].mxu0 %v2145
        %v2475 = vpop.f32.mrb[0].mxu0
        %v2476 = vadd.f32 0.0, %v2475
        %v2477 = vpop.f32.mrb[0].mxu0
        %v2478 = vpop.f32.mrb[0].mxu0
        %v2479 = vadd.f32 0.0, %v2478
        %v2480 = vpop.f32.mrb[0].mxu0
        %2481 = vmatprep.mubr.bf16.mxu0 %v2149
        %2482 = vmatmul.mubr.bf16.gmra.mrb[0].mxu0 %v2148
        %v2483 = vpop.f32.mrb[0].mxu0
        %v2484 = vadd.f32 0.0, %v2483
        %v2485 = vpop.f32.mrb[0].mxu0
        %v2486 = vpop.f32.mrb[0].mxu0
        %v2487 = vadd.f32 0.0, %v2486
        %v2488 = vpop.f32.mrb[0].mxu0
        %2489 = vmatprep.mubr.bf16.mxu0 %v2152
        %2490 = vmatmul.mubr.bf16.gmra.mrb[0].mxu0 %v2151
        %v2491 = vpop.f32.mrb[0].mxu0
        %v2492 = vadd.f32 0.0, %v2491
        %v2493 = vpop.f32.mrb[0].mxu0
        %v2494 = vpop.f32.mrb[0].mxu0
        %v2495 = vadd.f32 0.0, %v2494
        %v2496 = vpop.f32.mrb[0].mxu0
        %2497 = vmatprep.mubr.bf16.mxu0 %v2155
        %2498 = vmatmul.mubr.bf16.gmra.mrb[0].mxu0 %v2154
        %v2499 = vpop.f32.mrb[0].mxu0
        %v2500 = vadd.f32 0.0, %v2499
        %v2501 = vpop.f32.mrb[0].mxu0
        %v2502 = vpop.f32.mrb[0].mxu0
        %v2503 = vadd.f32 0.0, %v2502
        %v2504 = vpop.f32.mrb[0].mxu0
        %2505 = vmatprep.mubr.bf16.mxu0 %v2158
        %2506 = vmatmul.mubr.bf16.gmra.mrb[0].mxu0 %v2157
        %v2507 = vpop.f32.mrb[0].mxu0
        %v2508 = vadd.f32 0.0, %v2507
        %v2509 = vpop.f32.mrb[0].mxu0
        %v2510 = vpop.f32.mrb[0].mxu0
        %v2511 = vadd.f32 0.0, %v2510
        %v2512 = vpop.f32.mrb[0].mxu0
        %2513 = vdwg.mxu0
        %2514 = vmatprep.subr.bf16.mxu0 0
        %2515 = vmatpush1.bf16.msra.mxu0 %v2284
        %2516 = vmatprep.subr.bf16.mxu0 0
        %2517 = vmatpush1.bf16.msra.mxu0 %v2285
        %2518 = vmatprep.subr.bf16.mxu0 0
        %2519 = vmatpush1.bf16.msra.mxu0 0
        %2520 = vmatprep.subr.bf16.mxu0 0
        %2521 = vmatpush1.bf16.msra.mxu0 0
        %2522 = vmatprep.subr.bf16.mxu0 0
        %2523 = vmatpush1.bf16.msra.mxu0 0
        %2524 = vmatprep.subr.bf16.mxu0 0
        %2525 = vmatpush1.bf16.msra.mxu0 0
        %2526 = vmatprep.subr.bf16.mxu0 0
        %2527 = vmatpush1.bf16.msra.mxu0 0
        %2528 = vmatprep.subr.bf16.mxu0 0
        %2529 = vmatpush1.bf16.msra.mxu0 0
        %2530 = vmatprep.subr.bf16.mxu0 0
        %2531 = vmatpush1.bf16.msra.mxu0 0
        %2532 = vmatprep.subr.bf16.mxu0 0
        %2533 = vmatpush1.bf16.msra.mxu0 0
        %2534 = vmatprep.subr.bf16.mxu0 0
        %2535 = vmatpush1.bf16.msra.mxu0 0
        %2536 = vmatprep.subr.bf16.mxu0 0
        %2537 = vmatpush1.bf16.msra.mxu0 0
        %2538 = vmatprep.subr.bf16.mxu0 0
        %2539 = vmatpush1.bf16.msra.mxu0 0
        %2540 = vmatprep.subr.bf16.mxu0 0
        %2541 = vmatpush1.bf16.msra.mxu0 0
        %2542 = vmatprep.subr.bf16.mxu0 0
        %2543 = vmatpush1.bf16.msra.mxu0 0
        %2544 = vmatprep.subr.bf16.mxu0 0
        %2545 = vmatpush1.bf16.msra.mxu0 0
        %2546 = vmatprep.mubr.bf16.mxu0 0
        %2547 = vmatmul.mubr.bf16.gmra.mrb[0].mxu0 %v2306
        %v2548 = vpop.f32.mrb[0].mxu0
        %v2549 = vadd.f32 %v2388, %v2548
        %v2550 = vpop.f32.mrb[0].mxu0
        %v2551 = vpop.f32.mrb[0].mxu0
        %v2552 = vadd.f32 %v2391, %v2551
        %v2553 = vpop.f32.mrb[0].mxu0
        %2554 = vmatprep.mubr.bf16.mxu0 0
        %2555 = vmatmul.mubr.bf16.gmra.mrb[0].mxu0 %v2309
        %v2556 = vpop.f32.mrb[0].mxu0
        %v2557 = vadd.f32 %v2396, %v2556
        %v2558 = vpop.f32.mrb[0].mxu0
        %v2559 = vpop.f32.mrb[0].mxu0
        %v2560 = vadd.f32 %v2399, %v2559
        %v2561 = vpop.f32.mrb[0].mxu0
        %2562 = vmatprep.mubr.bf16.mxu0 0
        %2563 = vmatmul.mubr.bf16.gmra.mrb[0].mxu0 %v2312
        %v2564 = vpop.f32.mrb[0].mxu0
        %v2565 = vadd.f32 %v2404, %v2564
        %v2566 = vpop.f32.mrb[0].mxu0
        %v2567 = vpop.f32.mrb[0].mxu0
        %v2568 = vadd.f32 %v2407, %v2567
        %v2569 = vpop.f32.mrb[0].mxu0
        %2570 = vmatprep.mubr.bf16.mxu0 0
        %2571 = vmatmul.mubr.bf16.gmra.mrb[0].mxu0 %v2315
        %v2572 = vpop.f32.mrb[0].mxu0
        %v2573 = vadd.f32 %v2412, %v2572
        %v2574 = vpop.f32.mrb[0].mxu0
        %v2575 = vpop.f32.mrb[0].mxu0
        %v2576 = vadd.f32 %v2415, %v2575
        %v2577 = vpop.f32.mrb[0].mxu0
        %2578 = vmatprep.mubr.bf16.mxu0 0
        %2579 = vmatmul.mubr.bf16.gmra.mrb[0].mxu0 %v2318
        %v2580 = vpop.f32.mrb[0].mxu0
        %v2581 = vadd.f32 %v2420, %v2580
        %v2582 = vpop.f32.mrb[0].mxu0
        %v2583 = vpop.f32.mrb[0].mxu0
        %v2584 = vadd.f32 %v2423, %v2583
        %v2585 = vpop.f32.mrb[0].mxu0
        %2586 = vmatprep.mubr.bf16.mxu0 0
        %2587 = vmatmul.mubr.bf16.gmra.mrb[0].mxu0 %v2321
        %v2588 = vpop.f32.mrb[0].mxu0
        %v2589 = vadd.f32 %v2428, %v2588
        %v2590 = vpop.f32.mrb[0].mxu0
        %v2591 = vpop.f32.mrb[0].mxu0
        %v2592 = vadd.f32 %v2431, %v2591
        %v2593 = vpop.f32.mrb[0].mxu0
        %2594 = vmatprep.mubr.bf16.mxu0 0
        %2595 = vmatmul.mubr.bf16.gmra.mrb[0].mxu0 %v2324
        %v2596 = vpop.f32.mrb[0].mxu0
        %v2597 = vadd.f32 %v2436, %v2596
        %v2598 = vpop.f32.mrb[0].mxu0
        %v2599 = vpop.f32.mrb[0].mxu0
        %v2600 = vadd.f32 %v2439, %v2599
        %v2601 = vpop.f32.mrb[0].mxu0
        %2602 = vmatprep.mubr.bf16.mxu0 0
        %2603 = vmatmul.mubr.bf16.gmra.mrb[0].mxu0 %v2327
        %v2604 = vpop.f32.mrb[0].mxu0
        %v2605 = vadd.f32 %v2444, %v2604
        %v2606 = vpop.f32.mrb[0].mxu0
        %v2607 = vpop.f32.mrb[0].mxu0
        %v2608 = vadd.f32 %v2447, %v2607
        %v2609 = vpop.f32.mrb[0].mxu0
        %2610 = vmatprep.mubr.bf16.mxu0 0
        %2611 = vmatmul.mubr.bf16.gmra.mrb[0].mxu0 %v2330
        %v2612 = vpop.f32.mrb[0].mxu0
        %v2613 = vadd.f32 %v2452, %v2612
        %v2614 = vpop.f32.mrb[0].mxu0
        %v2615 = vpop.f32.mrb[0].mxu0
        %v2616 = vadd.f32 %v2455, %v2615
        %v2617 = vpop.f32.mrb[0].mxu0
        %2618 = vmatprep.mubr.bf16.mxu0 0
        %2619 = vmatmul.mubr.bf16.gmra.mrb[0].mxu0 %v2333
        %v2620 = vpop.f32.mrb[0].mxu0
        %v2621 = vadd.f32 %v2460, %v2620
        %v2622 = vpop.f32.mrb[0].mxu0
        %v2623 = vpop.f32.mrb[0].mxu0
        %v2624 = vadd.f32 %v2463, %v2623
        %v2625 = vpop.f32.mrb[0].mxu0
        %2626 = vmatprep.mubr.bf16.mxu0 0
        %2627 = vmatmul.mubr.bf16.gmra.mrb[0].mxu0 %v2336
        %v2628 = vpop.f32.mrb[0].mxu0
        %v2629 = vadd.f32 %v2468, %v2628
        %v2630 = vpop.f32.mrb[0].mxu0
        %v2631 = vpop.f32.mrb[0].mxu0
        %v2632 = vadd.f32 %v2471, %v2631
        %v2633 = vpop.f32.mrb[0].mxu0
        %2634 = vmatprep.mubr.bf16.mxu0 0
        %2635 = vmatmul.mubr.bf16.gmra.mrb[0].mxu0 %v2339
        %v2636 = vpop.f32.mrb[0].mxu0
        %v2637 = vadd.f32 %v2476, %v2636
        %v2638 = vpop.f32.mrb[0].mxu0
        %v2639 = vpop.f32.mrb[0].mxu0
        %v2640 = vadd.f32 %v2479, %v2639
        %v2641 = vpop.f32.mrb[0].mxu0
        %2642 = vmatprep.mubr.bf16.mxu0 0
        %2643 = vmatmul.mubr.bf16.gmra.mrb[0].mxu0 %v2342
        %v2644 = vpop.f32.mrb[0].mxu0
        %v2645 = vadd.f32 %v2484, %v2644
        %v2646 = vpop.f32.mrb[0].mxu0
        %v2647 = vpop.f32.mrb[0].mxu0
        %v2648 = vadd.f32 %v2487, %v2647
        %v2649 = vpop.f32.mrb[0].mxu0
        %2650 = vmatprep.mubr.bf16.mxu0 0
        %2651 = vmatmul.mubr.bf16.gmra.mrb[0].mxu0 %v2345
        %v2652 = vpop.f32.mrb[0].mxu0
        %v2653 = vadd.f32 %v2492, %v2652
        %v2654 = vpop.f32.mrb[0].mxu0
        %v2655 = vpop.f32.mrb[0].mxu0
        %v2656 = vadd.f32 %v2495, %v2655
        %v2657 = vpop.f32.mrb[0].mxu0
        %2658 = vmatprep.mubr.bf16.mxu0 0
        %2659 = vmatmul.mubr.bf16.gmra.mrb[0].mxu0 %v2348
        %v2660 = vpop.f32.mrb[0].mxu0
        %v2661 = vadd.f32 %v2500, %v2660
        %v2662 = vpop.f32.mrb[0].mxu0
        %v2663 = vpop.f32.mrb[0].mxu0
        %v2664 = vadd.f32 %v2503, %v2663
        %v2665 = vpop.f32.mrb[0].mxu0
        %2666 = vmatprep.mubr.bf16.mxu0 0
        %2667 = vmatmul.mubr.bf16.gmra.mrb[0].mxu0 %v2351
        %v2668 = vpop.f32.mrb[0].mxu0
        %v2669 = vadd.f32 %v2508, %v2668
        %v2670 = vpop.f32.mrb[0].mxu0
        %v2671 = vpop.f32.mrb[0].mxu0
        %v2672 = vadd.f32 %v2511, %v2671
        %v2673 = vpop.f32.mrb[0].mxu0
        %2674 = vdwg.mxu0
        %vm2675 = vcmask 130048
        %v2676 = vsel %vm2675, %v2549, 0.0
        %v2677 = vsel %vm2675, %v2552, 0.0
        %v2678 = vadd.f32 %v2676, %v2677
        %v2679 = vsel %vm2675, %v2557, 0.0
        %v2680 = vadd.f32 %v2678, %v2679
        %v2681 = vsel %vm2675, %v2560, 0.0
        %v2682 = vadd.f32 %v2680, %v2681
        %v2683 = vsel %vm2675, %v2565, 0.0
        %v2684 = vadd.f32 %v2682, %v2683
        %v2685 = vsel %vm2675, %v2568, 0.0
        %v2686 = vadd.f32 %v2684, %v2685
        %v2687 = vsel %vm2675, %v2573, 0.0
        %v2688 = vadd.f32 %v2686, %v2687
        %v2689 = vsel %vm2675, %v2576, 0.0
        %v2690 = vadd.f32 %v2688, %v2689
        %v2691 = vsel %vm2675, %v2581, 0.0
        %v2692 = vadd.f32 %v2690, %v2691
        %v2693 = vsel %vm2675, %v2584, 0.0
        %v2694 = vadd.f32 %v2692, %v2693
        %v2695 = vsel %vm2675, %v2589, 0.0
        %v2696 = vadd.f32 %v2694, %v2695
        %v2697 = vsel %vm2675, %v2592, 0.0
        %v2698 = vadd.f32 %v2696, %v2697
        %v2699 = vsel %vm2675, %v2597, 0.0
        %v2700 = vadd.f32 %v2698, %v2699
        %v2701 = vsel %vm2675, %v2600, 0.0
        %v2702 = vadd.f32 %v2700, %v2701
        %v2703 = vsel %vm2675, %v2605, 0.0
        %v2704 = vadd.f32 %v2702, %v2703
        %v2705 = vsel %vm2675, %v2608, 0.0
        %v2706 = vadd.f32 %v2704, %v2705
        %v2707 = vsel %vm2675, %v2613, 0.0
        %v2708 = vadd.f32 %v2706, %v2707
        %v2709 = vsel %vm2675, %v2616, 0.0
        %v2710 = vadd.f32 %v2708, %v2709
        %v2711 = vsel %vm2675, %v2621, 0.0
        %v2712 = vadd.f32 %v2710, %v2711
        %v2713 = vsel %vm2675, %v2624, 0.0
        %v2714 = vadd.f32 %v2712, %v2713
        %v2715 = vsel %vm2675, %v2629, 0.0
        %v2716 = vadd.f32 %v2714, %v2715
        %v2717 = vsel %vm2675, %v2632, 0.0
        %v2718 = vadd.f32 %v2716, %v2717
        %v2719 = vsel %vm2675, %v2637, 0.0
        %v2720 = vadd.f32 %v2718, %v2719
        %v2721 = vsel %vm2675, %v2640, 0.0
        %v2722 = vadd.f32 %v2720, %v2721
        %v2723 = vsel %vm2675, %v2645, 0.0
        %v2724 = vadd.f32 %v2722, %v2723
        %v2725 = vsel %vm2675, %v2648, 0.0
        %v2726 = vadd.f32 %v2724, %v2725
        %v2727 = vsel %vm2675, %v2653, 0.0
        %v2728 = vadd.f32 %v2726, %v2727
        %v2729 = vsel %vm2675, %v2656, 0.0
        %v2730 = vadd.f32 %v2728, %v2729
        %v2731 = vsel %vm2675, %v2661, 0.0
        %v2732 = vadd.f32 %v2730, %v2731
        %v2733 = vsel %vm2675, %v2664, 0.0
        %v2734 = vadd.f32 %v2732, %v2733
        %v2735 = vsel %vm2675, %v2669, 0.0
        %v2736 = vadd.f32 %v2734, %v2735
        %v2737 = vsel %vm2675, %v2672, 0.0
        %v2738 = vadd.f32 %v2736, %v2737
        %v2739 = vrot.slane %v2738, 4
        %v2740 = vadd.f32 %v2738, %v2739
        %v2741 = vrot.slane %v2740, 2
        %v2742 = vadd.f32 %v2740, %v2741
        %v2743 = vrot.slane %v2742, 1
        %v2744 = vadd.f32 %v2742, %v2743
        %v2745 = vmul.f32 %v2744, 0.00390625
        %v2746 = vsub.f32 %v2549, %v2745
        %v2747 = vsub.f32 %v2552, %v2745
        %v2748 = vsub.f32 %v2557, %v2745
        %v2749 = vsub.f32 %v2560, %v2745
        %v2750 = vsub.f32 %v2565, %v2745
        %v2751 = vsub.f32 %v2568, %v2745
        %v2752 = vsub.f32 %v2573, %v2745
        %v2753 = vsub.f32 %v2576, %v2745
        %v2754 = vsub.f32 %v2581, %v2745
        %v2755 = vsub.f32 %v2584, %v2745
        %v2756 = vsub.f32 %v2589, %v2745
        %v2757 = vsub.f32 %v2592, %v2745
        %v2758 = vsub.f32 %v2597, %v2745
        %v2759 = vsub.f32 %v2600, %v2745
        %v2760 = vsub.f32 %v2605, %v2745
        %v2761 = vsub.f32 %v2608, %v2745
        %v2762 = vsub.f32 %v2613, %v2745
        %v2763 = vsub.f32 %v2616, %v2745
        %v2764 = vsub.f32 %v2621, %v2745
        %v2765 = vsub.f32 %v2624, %v2745
        %v2766 = vsub.f32 %v2629, %v2745
        %v2767 = vsub.f32 %v2632, %v2745
        %v2768 = vsub.f32 %v2637, %v2745
        %v2769 = vsub.f32 %v2640, %v2745
        %v2770 = vsub.f32 %v2645, %v2745
        %v2771 = vsub.f32 %v2648, %v2745
        %v2772 = vsub.f32 %v2653, %v2745
        %v2773 = vsub.f32 %v2656, %v2745
        %v2774 = vsub.f32 %v2661, %v2745
        %v2775 = vsub.f32 %v2664, %v2745
        %v2776 = vsub.f32 %v2669, %v2745
        %v2777 = vsub.f32 %v2672, %v2745
        %v2778 = vmul.f32 %v2746, %v2746
        %v2779 = vmul.f32 %v2747, %v2747
        %v2780 = vmul.f32 %v2748, %v2748
        %v2781 = vmul.f32 %v2749, %v2749
        %v2782 = vmul.f32 %v2750, %v2750
        %v2783 = vmul.f32 %v2751, %v2751
        %v2784 = vmul.f32 %v2752, %v2752
        %v2785 = vmul.f32 %v2753, %v2753
        %v2786 = vmul.f32 %v2754, %v2754
        %v2787 = vmul.f32 %v2755, %v2755
        %v2788 = vmul.f32 %v2756, %v2756
        %v2789 = vmul.f32 %v2757, %v2757
        %v2790 = vmul.f32 %v2758, %v2758
        %v2791 = vmul.f32 %v2759, %v2759
        %v2792 = vmul.f32 %v2760, %v2760
        %v2793 = vmul.f32 %v2761, %v2761
        %v2794 = vmul.f32 %v2762, %v2762
        %v2795 = vmul.f32 %v2763, %v2763
        %v2796 = vmul.f32 %v2764, %v2764
        %v2797 = vmul.f32 %v2765, %v2765
        %v2798 = vmul.f32 %v2766, %v2766
        %v2799 = vmul.f32 %v2767, %v2767
        %v2800 = vmul.f32 %v2768, %v2768
        %v2801 = vmul.f32 %v2769, %v2769
        %v2802 = vmul.f32 %v2770, %v2770
        %v2803 = vmul.f32 %v2771, %v2771
        %v2804 = vmul.f32 %v2772, %v2772
        %v2805 = vmul.f32 %v2773, %v2773
        %v2806 = vmul.f32 %v2774, %v2774
        %v2807 = vmul.f32 %v2775, %v2775
        %v2808 = vmul.f32 %v2776, %v2776
        %v2809 = vmul.f32 %v2777, %v2777
        %v2810 = vsel %vm2675, %v2778, 0.0
        %v2811 = vsel %vm2675, %v2779, 0.0
        %v2812 = vadd.f32 %v2810, %v2811
        %v2813 = vsel %vm2675, %v2780, 0.0
        %v2814 = vadd.f32 %v2812, %v2813
        %v2815 = vsel %vm2675, %v2781, 0.0
        %v2816 = vadd.f32 %v2814, %v2815
        %v2817 = vsel %vm2675, %v2782, 0.0
        %v2818 = vadd.f32 %v2816, %v2817
        %v2819 = vsel %vm2675, %v2783, 0.0
        %v2820 = vadd.f32 %v2818, %v2819
        %v2821 = vsel %vm2675, %v2784, 0.0
        %v2822 = vadd.f32 %v2820, %v2821
        %v2823 = vsel %vm2675, %v2785, 0.0
        %v2824 = vadd.f32 %v2822, %v2823
        %v2825 = vsel %vm2675, %v2786, 0.0
        %v2826 = vadd.f32 %v2824, %v2825
        %v2827 = vsel %vm2675, %v2787, 0.0
        %v2828 = vadd.f32 %v2826, %v2827
        %v2829 = vsel %vm2675, %v2788, 0.0
        %v2830 = vadd.f32 %v2828, %v2829
        %v2831 = vsel %vm2675, %v2789, 0.0
        %v2832 = vadd.f32 %v2830, %v2831
        %v2833 = vsel %vm2675, %v2790, 0.0
        %v2834 = vadd.f32 %v2832, %v2833
        %v2835 = vsel %vm2675, %v2791, 0.0
        %v2836 = vadd.f32 %v2834, %v2835
        %v2837 = vsel %vm2675, %v2792, 0.0
        %v2838 = vadd.f32 %v2836, %v2837
        %v2839 = vsel %vm2675, %v2793, 0.0
        %v2840 = vadd.f32 %v2838, %v2839
        %v2841 = vsel %vm2675, %v2794, 0.0
        %v2842 = vadd.f32 %v2840, %v2841
        %v2843 = vsel %vm2675, %v2795, 0.0
        %v2844 = vadd.f32 %v2842, %v2843
        %v2845 = vsel %vm2675, %v2796, 0.0
        %v2846 = vadd.f32 %v2844, %v2845
        %v2847 = vsel %vm2675, %v2797, 0.0
        %v2848 = vadd.f32 %v2846, %v2847
        %v2849 = vsel %vm2675, %v2798, 0.0
        %v2850 = vadd.f32 %v2848, %v2849
        %v2851 = vsel %vm2675, %v2799, 0.0
        %v2852 = vadd.f32 %v2850, %v2851
        %v2853 = vsel %vm2675, %v2800, 0.0
        %v2854 = vadd.f32 %v2852, %v2853
        %v2855 = vsel %vm2675, %v2801, 0.0
        %v2856 = vadd.f32 %v2854, %v2855
        %v2857 = vsel %vm2675, %v2802, 0.0
        %v2858 = vadd.f32 %v2856, %v2857
        %v2859 = vsel %vm2675, %v2803, 0.0
        %v2860 = vadd.f32 %v2858, %v2859
        %v2861 = vsel %vm2675, %v2804, 0.0
        %v2862 = vadd.f32 %v2860, %v2861
        %v2863 = vsel %vm2675, %v2805, 0.0
        %v2864 = vadd.f32 %v2862, %v2863
        %v2865 = vsel %vm2675, %v2806, 0.0
        %v2866 = vadd.f32 %v2864, %v2865
        %v2867 = vsel %vm2675, %v2807, 0.0
        %v2868 = vadd.f32 %v2866, %v2867
        %v2869 = vsel %vm2675, %v2808, 0.0
        %v2870 = vadd.f32 %v2868, %v2869
        %v2871 = vsel %vm2675, %v2809, 0.0
        %v2872 = vadd.f32 %v2870, %v2871
        %v2873 = vrot.slane %v2872, 4
        %v2874 = vadd.f32 %v2872, %v2873
        %v2875 = vrot.slane %v2874, 2
        %v2876 = vadd.f32 %v2874, %v2875
        %v2877 = vrot.slane %v2876, 1
        %v2878 = vadd.f32 %v2876, %v2877
        %v2879 = vmul.f32 %v2878, 0.00390625
        %v2880 = vadd.f32 %v2879, 1e-05
        %v2881 = vrsqrt.pop %v2880
        %v2882 = vmul.f32 %v2746, %v2881
        %v2883 = vmul.f32 %v2747, %v2881
        %v2884 = vmul.f32 %v2748, %v2881
        %v2885 = vmul.f32 %v2749, %v2881
        %v2886 = vmul.f32 %v2750, %v2881
        %v2887 = vmul.f32 %v2751, %v2881
        %v2888 = vmul.f32 %v2752, %v2881
        %v2889 = vmul.f32 %v2753, %v2881
        %v2890 = vmul.f32 %v2754, %v2881
        %v2891 = vmul.f32 %v2755, %v2881
        %v2892 = vmul.f32 %v2756, %v2881
        %v2893 = vmul.f32 %v2757, %v2881
        %v2894 = vmul.f32 %v2758, %v2881
        %v2895 = vmul.f32 %v2759, %v2881
        %v2896 = vmul.f32 %v2760, %v2881
        %v2897 = vmul.f32 %v2761, %v2881
        %v2898 = vmul.f32 %v2762, %v2881
        %v2899 = vmul.f32 %v2763, %v2881
        %v2900 = vmul.f32 %v2764, %v2881
        %v2901 = vmul.f32 %v2765, %v2881
        %v2902 = vmul.f32 %v2766, %v2881
        %v2903 = vmul.f32 %v2767, %v2881
        %v2904 = vmul.f32 %v2768, %v2881
        %v2905 = vmul.f32 %v2769, %v2881
        %v2906 = vmul.f32 %v2770, %v2881
        %v2907 = vmul.f32 %v2771, %v2881
        %v2908 = vmul.f32 %v2772, %v2881
        %v2909 = vmul.f32 %v2773, %v2881
        %v2910 = vmul.f32 %v2774, %v2881
        %v2911 = vmul.f32 %v2775, %v2881
        %v2912 = vmul.f32 %v2776, %v2881
        %v2913 = vmul.f32 %v2777, %v2881
        %vm2914 = vcmp.ge.f32.partialorder %v2882, 0.0
        %vm2915 = vcmp.ge.f32.partialorder %v2883, 0.0
        %vm2916 = vcmp.ge.f32.partialorder %v2884, 0.0
        %vm2917 = vcmp.ge.f32.partialorder %v2885, 0.0
        %vm2918 = vcmp.ge.f32.partialorder %v2886, 0.0
        %vm2919 = vcmp.ge.f32.partialorder %v2887, 0.0
        %vm2920 = vcmp.ge.f32.partialorder %v2888, 0.0
        %vm2921 = vcmp.ge.f32.partialorder %v2889, 0.0
        %vm2922 = vcmp.ge.f32.partialorder %v2890, 0.0
        %vm2923 = vcmp.ge.f32.partialorder %v2891, 0.0
        %vm2924 = vcmp.ge.f32.partialorder %v2892, 0.0
        %vm2925 = vcmp.ge.f32.partialorder %v2893, 0.0
        %vm2926 = vcmp.ge.f32.partialorder %v2894, 0.0
        %vm2927 = vcmp.ge.f32.partialorder %v2895, 0.0
        %vm2928 = vcmp.ge.f32.partialorder %v2896, 0.0
        %vm2929 = vcmp.ge.f32.partialorder %v2897, 0.0
        %vm2930 = vcmp.ge.f32.partialorder %v2898, 0.0
        %vm2931 = vcmp.ge.f32.partialorder %v2899, 0.0
        %vm2932 = vcmp.ge.f32.partialorder %v2900, 0.0
        %vm2933 = vcmp.ge.f32.partialorder %v2901, 0.0
        %vm2934 = vcmp.ge.f32.partialorder %v2902, 0.0
        %vm2935 = vcmp.ge.f32.partialorder %v2903, 0.0
        %vm2936 = vcmp.ge.f32.partialorder %v2904, 0.0
        %vm2937 = vcmp.ge.f32.partialorder %v2905, 0.0
        %vm2938 = vcmp.ge.f32.partialorder %v2906, 0.0
        %vm2939 = vcmp.ge.f32.partialorder %v2907, 0.0
        %vm2940 = vcmp.ge.f32.partialorder %v2908, 0.0
        %vm2941 = vcmp.ge.f32.partialorder %v2909, 0.0
        %vm2942 = vcmp.ge.f32.partialorder %v2910, 0.0
        %vm2943 = vcmp.ge.f32.partialorder %v2911, 0.0
        %vm2944 = vcmp.ge.f32.partialorder %v2912, 0.0
        %vm2945 = vcmp.ge.f32.partialorder %v2913, 0.0
        %v2946 = vmul.f32 %v2882, 0.1
        %v2947 = vmul.f32 %v2883, 0.1
        %v2948 = vmul.f32 %v2884, 0.1
        %v2949 = vmul.f32 %v2885, 0.1
        %v2950 = vmul.f32 %v2886, 0.1
        %v2951 = vmul.f32 %v2887, 0.1
        %v2952 = vmul.f32 %v2888, 0.1
        %v2953 = vmul.f32 %v2889, 0.1
        %v2954 = vmul.f32 %v2890, 0.1
        %v2955 = vmul.f32 %v2891, 0.1
        %v2956 = vmul.f32 %v2892, 0.1
        %v2957 = vmul.f32 %v2893, 0.1
        %v2958 = vmul.f32 %v2894, 0.1
        %v2959 = vmul.f32 %v2895, 0.1
        %v2960 = vmul.f32 %v2896, 0.1
        %v2961 = vmul.f32 %v2897, 0.1
        %v2962 = vmul.f32 %v2898, 0.1
        %v2963 = vmul.f32 %v2899, 0.1
        %v2964 = vmul.f32 %v2900, 0.1
        %v2965 = vmul.f32 %v2901, 0.1
        %v2966 = vmul.f32 %v2902, 0.1
        %v2967 = vmul.f32 %v2903, 0.1
        %v2968 = vmul.f32 %v2904, 0.1
        %v2969 = vmul.f32 %v2905, 0.1
        %v2970 = vmul.f32 %v2906, 0.1
        %v2971 = vmul.f32 %v2907, 0.1
        %v2972 = vmul.f32 %v2908, 0.1
        %v2973 = vmul.f32 %v2909, 0.1
        %v2974 = vmul.f32 %v2910, 0.1
        %v2975 = vmul.f32 %v2911, 0.1
        %v2976 = vmul.f32 %v2912, 0.1
        %v2977 = vmul.f32 %v2913, 0.1
        %v2978 = vsel %vm2914, %v2882, %v2946
        %v2979 = vsel %vm2915, %v2883, %v2947
        %v2980 = vsel %vm2916, %v2884, %v2948
        %v2981 = vsel %vm2917, %v2885, %v2949
        %v2982 = vsel %vm2918, %v2886, %v2950
        %v2983 = vsel %vm2919, %v2887, %v2951
        %v2984 = vsel %vm2920, %v2888, %v2952
        %v2985 = vsel %vm2921, %v2889, %v2953
        %v2986 = vsel %vm2922, %v2890, %v2954
        %v2987 = vsel %vm2923, %v2891, %v2955
        %v2988 = vsel %vm2924, %v2892, %v2956
        %v2989 = vsel %vm2925, %v2893, %v2957
        %v2990 = vsel %vm2926, %v2894, %v2958
        %v2991 = vsel %vm2927, %v2895, %v2959
        %v2992 = vsel %vm2928, %v2896, %v2960
        %v2993 = vsel %vm2929, %v2897, %v2961
        %v2994 = vsel %vm2930, %v2898, %v2962
        %v2995 = vsel %vm2931, %v2899, %v2963
        %v2996 = vsel %vm2932, %v2900, %v2964
        %v2997 = vsel %vm2933, %v2901, %v2965
        %v2998 = vsel %vm2934, %v2902, %v2966
        %v2999 = vsel %vm2935, %v2903, %v2967
        %v3000 = vsel %vm2936, %v2904, %v2968
        %v3001 = vsel %vm2937, %v2905, %v2969
        %v3002 = vsel %vm2938, %v2906, %v2970
        %v3003 = vsel %vm2939, %v2907, %v2971
        %v3004 = vsel %vm2940, %v2908, %v2972
        %v3005 = vsel %vm2941, %v2909, %v2973
        %v3006 = vsel %vm2942, %v2910, %v2974
        %v3007 = vsel %vm2943, %v2911, %v2975
        %v3008 = vsel %vm2944, %v2912, %v2976
        %v3009 = vsel %vm2945, %v2913, %v2977
        %v3042 = vcombine.high %v2978, %v2978
        %v3044 = vunpack.c.l.s4 1983009808
        %v3045 = vunpack.c.0.s8 %v3044
        %v3046 = vlaneseq
        %v3047 = vshrl.u32 %v3046, 7
        %v3048 = vsub.s32 %v3045, %v3047
        %v3049 = vrot.slane %v2978, %v3048
        %v3051 = vunpack.c.l.s4 1983009808
        %v3052 = vunpack.c.0.s8 %v3051
        %v3053 = vlaneseq
        %v3054 = vshrl.u32 %v3053, 7
        %v3055 = vsub.s32 %v3052, %v3054
        %v3056 = vrot.slane %v3042, %v3055
        %v3057 = vcombine.high %v3049, %v3049
        %v3058 = vcombine.high %v3056, %v3056
        %v3059 = vcombine.high %v2979, %v2979
        %v3061 = vunpack.c.l.s4 1983009808
        %v3062 = vunpack.c.0.s8 %v3061
        %v3063 = vlaneseq
        %v3064 = vshrl.u32 %v3063, 7
        %v3065 = vsub.s32 %v3062, %v3064
        %v3066 = vrot.slane %v2979, %v3065
        %v3068 = vunpack.c.l.s4 1983009808
        %v3069 = vunpack.c.0.s8 %v3068
        %v3070 = vlaneseq
        %v3071 = vshrl.u32 %v3070, 7
        %v3072 = vsub.s32 %v3069, %v3071
        %v3073 = vrot.slane %v3059, %v3072
        %v3074 = vcombine.high %v3066, %v3066
        %v3075 = vcombine.high %v3073, %v3073
        %v3076 = vcombine.high %v2980, %v2980
        %v3078 = vunpack.c.l.s4 1983009808
        %v3079 = vunpack.c.0.s8 %v3078
        %v3080 = vlaneseq
        %v3081 = vshrl.u32 %v3080, 7
        %v3082 = vsub.s32 %v3079, %v3081
        %v3083 = vrot.slane %v2980, %v3082
        %v3085 = vunpack.c.l.s4 1983009808
        %v3086 = vunpack.c.0.s8 %v3085
        %v3087 = vlaneseq
        %v3088 = vshrl.u32 %v3087, 7
        %v3089 = vsub.s32 %v3086, %v3088
        %v3090 = vrot.slane %v3076, %v3089
        %v3091 = vcombine.high %v3083, %v3083
        %v3092 = vcombine.high %v3090, %v3090
        %v3093 = vcombine.high %v2981, %v2981
        %v3095 = vunpack.c.l.s4 1983009808
        %v3096 = vunpack.c.0.s8 %v3095
        %v3097 = vlaneseq
        %v3098 = vshrl.u32 %v3097, 7
        %v3099 = vsub.s32 %v3096, %v3098
        %v3100 = vrot.slane %v2981, %v3099
        %v3102 = vunpack.c.l.s4 1983009808
        %v3103 = vunpack.c.0.s8 %v3102
        %v3104 = vlaneseq
        %v3105 = vshrl.u32 %v3104, 7
        %v3106 = vsub.s32 %v3103, %v3105
        %v3107 = vrot.slane %v3093, %v3106
        %v3108 = vcombine.high %v3100, %v3100
        %v3109 = vcombine.high %v3107, %v3107
        %v3110 = vcombine.high %v2982, %v2982
        %v3112 = vunpack.c.l.s4 1983009808
        %v3113 = vunpack.c.0.s8 %v3112
        %v3114 = vlaneseq
        %v3115 = vshrl.u32 %v3114, 7
        %v3116 = vsub.s32 %v3113, %v3115
        %v3117 = vrot.slane %v2982, %v3116
        %v3119 = vunpack.c.l.s4 1983009808
        %v3120 = vunpack.c.0.s8 %v3119
        %v3121 = vlaneseq
        %v3122 = vshrl.u32 %v3121, 7
        %v3123 = vsub.s32 %v3120, %v3122
        %v3124 = vrot.slane %v3110, %v3123
        %v3125 = vcombine.high %v3117, %v3117
        %v3126 = vcombine.high %v3124, %v3124
        %v3127 = vcombine.high %v2983, %v2983
        %v3129 = vunpack.c.l.s4 1983009808
        %v3130 = vunpack.c.0.s8 %v3129
        %v3131 = vlaneseq
        %v3132 = vshrl.u32 %v3131, 7
        %v3133 = vsub.s32 %v3130, %v3132
        %v3134 = vrot.slane %v2983, %v3133
        %v3136 = vunpack.c.l.s4 1983009808
        %v3137 = vunpack.c.0.s8 %v3136
        %v3138 = vlaneseq
        %v3139 = vshrl.u32 %v3138, 7
        %v3140 = vsub.s32 %v3137, %v3139
        %v3141 = vrot.slane %v3127, %v3140
        %v3142 = vcombine.high %v3134, %v3134
        %v3143 = vcombine.high %v3141, %v3141
        %v3144 = vcombine.high %v2984, %v2984
        %v3146 = vunpack.c.l.s4 1983009808
        %v3147 = vunpack.c.0.s8 %v3146
        %v3148 = vlaneseq
        %v3149 = vshrl.u32 %v3148, 7
        %v3150 = vsub.s32 %v3147, %v3149
        %v3151 = vrot.slane %v2984, %v3150
        %v3153 = vunpack.c.l.s4 1983009808
        %v3154 = vunpack.c.0.s8 %v3153
        %v3155 = vlaneseq
        %v3156 = vshrl.u32 %v3155, 7
        %v3157 = vsub.s32 %v3154, %v3156
        %v3158 = vrot.slane %v3144, %v3157
        %v3159 = vcombine.high %v3151, %v3151
        %v3160 = vcombine.high %v3158, %v3158
        %v3161 = vcombine.high %v2985, %v2985
        %v3163 = vunpack.c.l.s4 1983009808
        %v3164 = vunpack.c.0.s8 %v3163
        %v3165 = vlaneseq
        %v3166 = vshrl.u32 %v3165, 7
        %v3167 = vsub.s32 %v3164, %v3166
        %v3168 = vrot.slane %v2985, %v3167
        %v3170 = vunpack.c.l.s4 1983009808
        %v3171 = vunpack.c.0.s8 %v3170
        %v3172 = vlaneseq
        %v3173 = vshrl.u32 %v3172, 7
        %v3174 = vsub.s32 %v3171, %v3173
        %v3175 = vrot.slane %v3161, %v3174
        %v3176 = vcombine.high %v3168, %v3168
        %v3177 = vcombine.high %v3175, %v3175
        %v3178 = vcombine.high %v2986, %v2986
        %v3180 = vunpack.c.l.s4 1983009808
        %v3181 = vunpack.c.0.s8 %v3180
        %v3182 = vlaneseq
        %v3183 = vshrl.u32 %v3182, 7
        %v3184 = vsub.s32 %v3181, %v3183
        %v3185 = vrot.slane %v2986, %v3184
        %v3187 = vunpack.c.l.s4 1983009808
        %v3188 = vunpack.c.0.s8 %v3187
        %v3189 = vlaneseq
        %v3190 = vshrl.u32 %v3189, 7
        %v3191 = vsub.s32 %v3188, %v3190
        %v3192 = vrot.slane %v3178, %v3191
        %v3193 = vcombine.high %v3185, %v3185
        %v3194 = vcombine.high %v3192, %v3192
        %v3195 = vcombine.high %v2987, %v2987
        %v3197 = vunpack.c.l.s4 1983009808
        %v3198 = vunpack.c.0.s8 %v3197
        %v3199 = vlaneseq
        %v3200 = vshrl.u32 %v3199, 7
        %v3201 = vsub.s32 %v3198, %v3200
        %v3202 = vrot.slane %v2987, %v3201
        %v3204 = vunpack.c.l.s4 1983009808
        %v3205 = vunpack.c.0.s8 %v3204
        %v3206 = vlaneseq
        %v3207 = vshrl.u32 %v3206, 7
        %v3208 = vsub.s32 %v3205, %v3207
        %v3209 = vrot.slane %v3195, %v3208
        %v3210 = vcombine.high %v3202, %v3202
        %v3211 = vcombine.high %v3209, %v3209
        %v3212 = vcombine.high %v2988, %v2988
        %v3214 = vunpack.c.l.s4 1983009808
        %v3215 = vunpack.c.0.s8 %v3214
        %v3216 = vlaneseq
        %v3217 = vshrl.u32 %v3216, 7
        %v3218 = vsub.s32 %v3215, %v3217
        %v3219 = vrot.slane %v2988, %v3218
        %v3221 = vunpack.c.l.s4 1983009808
        %v3222 = vunpack.c.0.s8 %v3221
        %v3223 = vlaneseq
        %v3224 = vshrl.u32 %v3223, 7
        %v3225 = vsub.s32 %v3222, %v3224
        %v3226 = vrot.slane %v3212, %v3225
        %v3227 = vcombine.high %v3219, %v3219
        %v3228 = vcombine.high %v3226, %v3226
        %v3229 = vcombine.high %v2989, %v2989
        %v3231 = vunpack.c.l.s4 1983009808
        %v3232 = vunpack.c.0.s8 %v3231
        %v3233 = vlaneseq
        %v3234 = vshrl.u32 %v3233, 7
        %v3235 = vsub.s32 %v3232, %v3234
        %v3236 = vrot.slane %v2989, %v3235
        %v3238 = vunpack.c.l.s4 1983009808
        %v3239 = vunpack.c.0.s8 %v3238
        %v3240 = vlaneseq
        %v3241 = vshrl.u32 %v3240, 7
        %v3242 = vsub.s32 %v3239, %v3241
        %v3243 = vrot.slane %v3229, %v3242
        %v3244 = vcombine.high %v3236, %v3236
        %v3245 = vcombine.high %v3243, %v3243
        %v3246 = vcombine.high %v2990, %v2990
        %v3248 = vunpack.c.l.s4 1983009808
        %v3249 = vunpack.c.0.s8 %v3248
        %v3250 = vlaneseq
        %v3251 = vshrl.u32 %v3250, 7
        %v3252 = vsub.s32 %v3249, %v3251
        %v3253 = vrot.slane %v2990, %v3252
        %v3255 = vunpack.c.l.s4 1983009808
        %v3256 = vunpack.c.0.s8 %v3255
        %v3257 = vlaneseq
        %v3258 = vshrl.u32 %v3257, 7
        %v3259 = vsub.s32 %v3256, %v3258
        %v3260 = vrot.slane %v3246, %v3259
        %v3261 = vcombine.high %v3253, %v3253
        %v3262 = vcombine.high %v3260, %v3260
        %v3263 = vcombine.high %v2991, %v2991
        %v3265 = vunpack.c.l.s4 1983009808
        %v3266 = vunpack.c.0.s8 %v3265
        %v3267 = vlaneseq
        %v3268 = vshrl.u32 %v3267, 7
        %v3269 = vsub.s32 %v3266, %v3268
        %v3270 = vrot.slane %v2991, %v3269
        %v3272 = vunpack.c.l.s4 1983009808
        %v3273 = vunpack.c.0.s8 %v3272
        %v3274 = vlaneseq
        %v3275 = vshrl.u32 %v3274, 7
        %v3276 = vsub.s32 %v3273, %v3275
        %v3277 = vrot.slane %v3263, %v3276
        %v3278 = vcombine.high %v3270, %v3270
        %v3279 = vcombine.high %v3277, %v3277
        %v3280 = vcombine.high %v2992, %v2992
        %v3282 = vunpack.c.l.s4 1983009808
        %v3283 = vunpack.c.0.s8 %v3282
        %v3284 = vlaneseq
        %v3285 = vshrl.u32 %v3284, 7
        %v3286 = vsub.s32 %v3283, %v3285
        %v3287 = vrot.slane %v2992, %v3286
        %v3289 = vunpack.c.l.s4 1983009808
        %v3290 = vunpack.c.0.s8 %v3289
        %v3291 = vlaneseq
        %v3292 = vshrl.u32 %v3291, 7
        %v3293 = vsub.s32 %v3290, %v3292
        %v3294 = vrot.slane %v3280, %v3293
        %v3295 = vcombine.high %v3287, %v3287
        %v3296 = vcombine.high %v3294, %v3294
        %v3297 = vcombine.high %v2993, %v2993
        %v3299 = vunpack.c.l.s4 1983009808
        %v3300 = vunpack.c.0.s8 %v3299
        %v3301 = vlaneseq
        %v3302 = vshrl.u32 %v3301, 7
        %v3303 = vsub.s32 %v3300, %v3302
        %v3304 = vrot.slane %v2993, %v3303
        %v3306 = vunpack.c.l.s4 1983009808
        %v3307 = vunpack.c.0.s8 %v3306
        %v3308 = vlaneseq
        %v3309 = vshrl.u32 %v3308, 7
        %v3310 = vsub.s32 %v3307, %v3309
        %v3311 = vrot.slane %v3297, %v3310
        %v3312 = vcombine.high %v3304, %v3304
        %v3313 = vcombine.high %v3311, %v3311
        %v3314 = vcombine.high %v2994, %v2994
        %v3316 = vunpack.c.l.s4 1983009808
        %v3317 = vunpack.c.0.s8 %v3316
        %v3318 = vlaneseq
        %v3319 = vshrl.u32 %v3318, 7
        %v3320 = vsub.s32 %v3317, %v3319
        %v3321 = vrot.slane %v2994, %v3320
        %v3323 = vunpack.c.l.s4 1983009808
        %v3324 = vunpack.c.0.s8 %v3323
        %v3325 = vlaneseq
        %v3326 = vshrl.u32 %v3325, 7
        %v3327 = vsub.s32 %v3324, %v3326
        %v3328 = vrot.slane %v3314, %v3327
        %v3329 = vcombine.high %v3321, %v3321
        %v3330 = vcombine.high %v3328, %v3328
        %v3331 = vcombine.high %v2995, %v2995
        %v3333 = vunpack.c.l.s4 1983009808
        %v3334 = vunpack.c.0.s8 %v3333
        %v3335 = vlaneseq
        %v3336 = vshrl.u32 %v3335, 7
        %v3337 = vsub.s32 %v3334, %v3336
        %v3338 = vrot.slane %v2995, %v3337
        %v3340 = vunpack.c.l.s4 1983009808
        %v3341 = vunpack.c.0.s8 %v3340
        %v3342 = vlaneseq
        %v3343 = vshrl.u32 %v3342, 7
        %v3344 = vsub.s32 %v3341, %v3343
        %v3345 = vrot.slane %v3331, %v3344
        %v3346 = vcombine.high %v3338, %v3338
        %v3347 = vcombine.high %v3345, %v3345
        %v3348 = vcombine.high %v2996, %v2996
        %v3350 = vunpack.c.l.s4 1983009808
        %v3351 = vunpack.c.0.s8 %v3350
        %v3352 = vlaneseq
        %v3353 = vshrl.u32 %v3352, 7
        %v3354 = vsub.s32 %v3351, %v3353
        %v3355 = vrot.slane %v2996, %v3354
        %v3357 = vunpack.c.l.s4 1983009808
        %v3358 = vunpack.c.0.s8 %v3357
        %v3359 = vlaneseq
        %v3360 = vshrl.u32 %v3359, 7
        %v3361 = vsub.s32 %v3358, %v3360
        %v3362 = vrot.slane %v3348, %v3361
        %v3363 = vcombine.high %v3355, %v3355
        %v3364 = vcombine.high %v3362, %v3362
        %v3365 = vcombine.high %v2997, %v2997
        %v3367 = vunpack.c.l.s4 1983009808
        %v3368 = vunpack.c.0.s8 %v3367
        %v3369 = vlaneseq
        %v3370 = vshrl.u32 %v3369, 7
        %v3371 = vsub.s32 %v3368, %v3370
        %v3372 = vrot.slane %v2997, %v3371
        %v3374 = vunpack.c.l.s4 1983009808
        %v3375 = vunpack.c.0.s8 %v3374
        %v3376 = vlaneseq
        %v3377 = vshrl.u32 %v3376, 7
        %v3378 = vsub.s32 %v3375, %v3377
        %v3379 = vrot.slane %v3365, %v3378
        %v3380 = vcombine.high %v3372, %v3372
        %v3381 = vcombine.high %v3379, %v3379
        %v3382 = vcombine.high %v2998, %v2998
        %v3384 = vunpack.c.l.s4 1983009808
        %v3385 = vunpack.c.0.s8 %v3384
        %v3386 = vlaneseq
        %v3387 = vshrl.u32 %v3386, 7
        %v3388 = vsub.s32 %v3385, %v3387
        %v3389 = vrot.slane %v2998, %v3388
        %v3391 = vunpack.c.l.s4 1983009808
        %v3392 = vunpack.c.0.s8 %v3391
        %v3393 = vlaneseq
        %v3394 = vshrl.u32 %v3393, 7
        %v3395 = vsub.s32 %v3392, %v3394
        %v3396 = vrot.slane %v3382, %v3395
        %v3397 = vcombine.high %v3389, %v3389
        %v3398 = vcombine.high %v3396, %v3396
        %v3399 = vcombine.high %v2999, %v2999
        %v3401 = vunpack.c.l.s4 1983009808
        %v3402 = vunpack.c.0.s8 %v3401
        %v3403 = vlaneseq
        %v3404 = vshrl.u32 %v3403, 7
        %v3405 = vsub.s32 %v3402, %v3404
        %v3406 = vrot.slane %v2999, %v3405
        %v3408 = vunpack.c.l.s4 1983009808
        %v3409 = vunpack.c.0.s8 %v3408
        %v3410 = vlaneseq
        %v3411 = vshrl.u32 %v3410, 7
        %v3412 = vsub.s32 %v3409, %v3411
        %v3413 = vrot.slane %v3399, %v3412
        %v3414 = vcombine.high %v3406, %v3406
        %v3415 = vcombine.high %v3413, %v3413
        %v3416 = vcombine.high %v3000, %v3000
        %v3418 = vunpack.c.l.s4 1983009808
        %v3419 = vunpack.c.0.s8 %v3418
        %v3420 = vlaneseq
        %v3421 = vshrl.u32 %v3420, 7
        %v3422 = vsub.s32 %v3419, %v3421
        %v3423 = vrot.slane %v3000, %v3422
        %v3425 = vunpack.c.l.s4 1983009808
        %v3426 = vunpack.c.0.s8 %v3425
        %v3427 = vlaneseq
        %v3428 = vshrl.u32 %v3427, 7
        %v3429 = vsub.s32 %v3426, %v3428
        %v3430 = vrot.slane %v3416, %v3429
        %v3431 = vcombine.high %v3423, %v3423
        %v3432 = vcombine.high %v3430, %v3430
        %v3433 = vcombine.high %v3001, %v3001
        %v3435 = vunpack.c.l.s4 1983009808
        %v3436 = vunpack.c.0.s8 %v3435
        %v3437 = vlaneseq
        %v3438 = vshrl.u32 %v3437, 7
        %v3439 = vsub.s32 %v3436, %v3438
        %v3440 = vrot.slane %v3001, %v3439
        %v3442 = vunpack.c.l.s4 1983009808
        %v3443 = vunpack.c.0.s8 %v3442
        %v3444 = vlaneseq
        %v3445 = vshrl.u32 %v3444, 7
        %v3446 = vsub.s32 %v3443, %v3445
        %v3447 = vrot.slane %v3433, %v3446
        %v3448 = vcombine.high %v3440, %v3440
        %v3449 = vcombine.high %v3447, %v3447
        %v3450 = vcombine.high %v3002, %v3002
        %v3452 = vunpack.c.l.s4 1983009808
        %v3453 = vunpack.c.0.s8 %v3452
        %v3454 = vlaneseq
        %v3455 = vshrl.u32 %v3454, 7
        %v3456 = vsub.s32 %v3453, %v3455
        %v3457 = vrot.slane %v3002, %v3456
        %v3459 = vunpack.c.l.s4 1983009808
        %v3460 = vunpack.c.0.s8 %v3459
        %v3461 = vlaneseq
        %v3462 = vshrl.u32 %v3461, 7
        %v3463 = vsub.s32 %v3460, %v3462
        %v3464 = vrot.slane %v3450, %v3463
        %v3465 = vcombine.high %v3457, %v3457
        %v3466 = vcombine.high %v3464, %v3464
        %v3467 = vcombine.high %v3003, %v3003
        %v3469 = vunpack.c.l.s4 1983009808
        %v3470 = vunpack.c.0.s8 %v3469
        %v3471 = vlaneseq
        %v3472 = vshrl.u32 %v3471, 7
        %v3473 = vsub.s32 %v3470, %v3472
        %v3474 = vrot.slane %v3003, %v3473
        %v3476 = vunpack.c.l.s4 1983009808
        %v3477 = vunpack.c.0.s8 %v3476
        %v3478 = vlaneseq
        %v3479 = vshrl.u32 %v3478, 7
        %v3480 = vsub.s32 %v3477, %v3479
        %v3481 = vrot.slane %v3467, %v3480
        %v3482 = vcombine.high %v3474, %v3474
        %v3483 = vcombine.high %v3481, %v3481
        %v3484 = vcombine.high %v3004, %v3004
        %v3486 = vunpack.c.l.s4 1983009808
        %v3487 = vunpack.c.0.s8 %v3486
        %v3488 = vlaneseq
        %v3489 = vshrl.u32 %v3488, 7
        %v3490 = vsub.s32 %v3487, %v3489
        %v3491 = vrot.slane %v3004, %v3490
        %v3493 = vunpack.c.l.s4 1983009808
        %v3494 = vunpack.c.0.s8 %v3493
        %v3495 = vlaneseq
        %v3496 = vshrl.u32 %v3495, 7
        %v3497 = vsub.s32 %v3494, %v3496
        %v3498 = vrot.slane %v3484, %v3497
        %v3499 = vcombine.high %v3491, %v3491
        %v3500 = vcombine.high %v3498, %v3498
        %v3501 = vcombine.high %v3005, %v3005
        %v3503 = vunpack.c.l.s4 1983009808
        %v3504 = vunpack.c.0.s8 %v3503
        %v3505 = vlaneseq
        %v3506 = vshrl.u32 %v3505, 7
        %v3507 = vsub.s32 %v3504, %v3506
        %v3508 = vrot.slane %v3005, %v3507
        %v3510 = vunpack.c.l.s4 1983009808
        %v3511 = vunpack.c.0.s8 %v3510
        %v3512 = vlaneseq
        %v3513 = vshrl.u32 %v3512, 7
        %v3514 = vsub.s32 %v3511, %v3513
        %v3515 = vrot.slane %v3501, %v3514
        %v3516 = vcombine.high %v3508, %v3508
        %v3517 = vcombine.high %v3515, %v3515
        %v3518 = vcombine.high %v3006, %v3006
        %v3520 = vunpack.c.l.s4 1983009808
        %v3521 = vunpack.c.0.s8 %v3520
        %v3522 = vlaneseq
        %v3523 = vshrl.u32 %v3522, 7
        %v3524 = vsub.s32 %v3521, %v3523
        %v3525 = vrot.slane %v3006, %v3524
        %v3527 = vunpack.c.l.s4 1983009808
        %v3528 = vunpack.c.0.s8 %v3527
        %v3529 = vlaneseq
        %v3530 = vshrl.u32 %v3529, 7
        %v3531 = vsub.s32 %v3528, %v3530
        %v3532 = vrot.slane %v3518, %v3531
        %v3533 = vcombine.high %v3525, %v3525
        %v3534 = vcombine.high %v3532, %v3532
        %v3535 = vcombine.high %v3007, %v3007
        %v3537 = vunpack.c.l.s4 1983009808
        %v3538 = vunpack.c.0.s8 %v3537
        %v3539 = vlaneseq
        %v3540 = vshrl.u32 %v3539, 7
        %v3541 = vsub.s32 %v3538, %v3540
        %v3542 = vrot.slane %v3007, %v3541
        %v3544 = vunpack.c.l.s4 1983009808
        %v3545 = vunpack.c.0.s8 %v3544
        %v3546 = vlaneseq
        %v3547 = vshrl.u32 %v3546, 7
        %v3548 = vsub.s32 %v3545, %v3547
        %v3549 = vrot.slane %v3535, %v3548
        %v3550 = vcombine.high %v3542, %v3542
        %v3551 = vcombine.high %v3549, %v3549
        %v3552 = vcombine.high %v3008, %v3008
        %v3554 = vunpack.c.l.s4 1983009808
        %v3555 = vunpack.c.0.s8 %v3554
        %v3556 = vlaneseq
        %v3557 = vshrl.u32 %v3556, 7
        %v3558 = vsub.s32 %v3555, %v3557
        %v3559 = vrot.slane %v3008, %v3558
        %v3561 = vunpack.c.l.s4 1983009808
        %v3562 = vunpack.c.0.s8 %v3561
        %v3563 = vlaneseq
        %v3564 = vshrl.u32 %v3563, 7
        %v3565 = vsub.s32 %v3562, %v3564
        %v3566 = vrot.slane %v3552, %v3565
        %v3567 = vcombine.high %v3559, %v3559
        %v3568 = vcombine.high %v3566, %v3566
        %v3569 = vcombine.high %v3009, %v3009
        %v3571 = vunpack.c.l.s4 1983009808
        %v3572 = vunpack.c.0.s8 %v3571
        %v3573 = vlaneseq
        %v3574 = vshrl.u32 %v3573, 7
        %v3575 = vsub.s32 %v3572, %v3574
        %v3576 = vrot.slane %v3009, %v3575
        %v3578 = vunpack.c.l.s4 1983009808
        %v3579 = vunpack.c.0.s8 %v3578
        %v3580 = vlaneseq
        %v3581 = vshrl.u32 %v3580, 7
        %v3582 = vsub.s32 %v3579, %v3581
        %v3583 = vrot.slane %v3569, %v3582
        %v3584 = vcombine.high %v3576, %v3576
        %v3585 = vcombine.high %v3583, %v3583
        %v3714 = vrot.slane %v3049, 7
        %v3715 = vrot.slane %v3714, 2
        %v3716 = vrot.slane %v3057, 7
        %v3717 = vrot.slane %v3716, 2
        %v3718 = vrot.slane %v3056, 7
        %v3719 = vrot.slane %v3718, 2
        %v3720 = vrot.slane %v3058, 7
        %v3721 = vrot.slane %v3720, 2
        %v3722 = vrot.slane %v3066, 7
        %v3723 = vrot.slane %v3722, 2
        %v3724 = vrot.slane %v3074, 7
        %v3725 = vrot.slane %v3724, 2
        %v3726 = vrot.slane %v3073, 7
        %v3727 = vrot.slane %v3726, 2
        %v3728 = vrot.slane %v3075, 7
        %v3729 = vrot.slane %v3728, 2
        %v3730 = vrot.slane %v3083, 7
        %v3731 = vrot.slane %v3730, 2
        %v3732 = vrot.slane %v3091, 7
        %v3733 = vrot.slane %v3732, 2
        %v3734 = vrot.slane %v3090, 7
        %v3735 = vrot.slane %v3734, 2
        %v3736 = vrot.slane %v3092, 7
        %v3737 = vrot.slane %v3736, 2
        %v3738 = vrot.slane %v3100, 7
        %v3739 = vrot.slane %v3738, 2
        %v3740 = vrot.slane %v3108, 7
        %v3741 = vrot.slane %v3740, 2
        %v3742 = vrot.slane %v3107, 7
        %v3743 = vrot.slane %v3742, 2
        %v3744 = vrot.slane %v3109, 7
        %v3745 = vrot.slane %v3744, 2
        %v3746 = vrot.slane %v3117, 7
        %v3747 = vrot.slane %v3746, 2
        %v3748 = vrot.slane %v3125, 7
        %v3749 = vrot.slane %v3748, 2
        %v3750 = vrot.slane %v3124, 7
        %v3751 = vrot.slane %v3750, 2
        %v3752 = vrot.slane %v3126, 7
        %v3753 = vrot.slane %v3752, 2
        %v3754 = vrot.slane %v3134, 7
        %v3755 = vrot.slane %v3754, 2
        %v3756 = vrot.slane %v3142, 7
        %v3757 = vrot.slane %v3756, 2
        %v3758 = vrot.slane %v3141, 7
        %v3759 = vrot.slane %v3758, 2
        %v3760 = vrot.slane %v3143, 7
        %v3761 = vrot.slane %v3760, 2
        %v3762 = vrot.slane %v3151, 7
        %v3763 = vrot.slane %v3762, 2
        %v3764 = vrot.slane %v3159, 7
        %v3765 = vrot.slane %v3764, 2
        %v3766 = vrot.slane %v3158, 7
        %v3767 = vrot.slane %v3766, 2
        %v3768 = vrot.slane %v3160, 7
        %v3769 = vrot.slane %v3768, 2
        %v3770 = vrot.slane %v3168, 7
        %v3771 = vrot.slane %v3770, 2
        %v3772 = vrot.slane %v3176, 7
        %v3773 = vrot.slane %v3772, 2
        %v3774 = vrot.slane %v3175, 7
        %v3775 = vrot.slane %v3774, 2
        %v3776 = vrot.slane %v3177, 7
        %v3777 = vrot.slane %v3776, 2
        %v3778 = vrot.slane %v3185, 7
        %v3779 = vrot.slane %v3778, 2
        %v3780 = vrot.slane %v3193, 7
        %v3781 = vrot.slane %v3780, 2
        %v3782 = vrot.slane %v3192, 7
        %v3783 = vrot.slane %v3782, 2
        %v3784 = vrot.slane %v3194, 7
        %v3785 = vrot.slane %v3784, 2
        %v3786 = vrot.slane %v3202, 7
        %v3787 = vrot.slane %v3786, 2
        %v3788 = vrot.slane %v3210, 7
        %v3789 = vrot.slane %v3788, 2
        %v3790 = vrot.slane %v3209, 7
        %v3791 = vrot.slane %v3790, 2
        %v3792 = vrot.slane %v3211, 7
        %v3793 = vrot.slane %v3792, 2
        %v3794 = vrot.slane %v3219, 7
        %v3795 = vrot.slane %v3794, 2
        %v3796 = vrot.slane %v3227, 7
        %v3797 = vrot.slane %v3796, 2
        %v3798 = vrot.slane %v3226, 7
        %v3799 = vrot.slane %v3798, 2
        %v3800 = vrot.slane %v3228, 7
        %v3801 = vrot.slane %v3800, 2
        %v3802 = vrot.slane %v3236, 7
        %v3803 = vrot.slane %v3802, 2
        %v3804 = vrot.slane %v3244, 7
        %v3805 = vrot.slane %v3804, 2
        %v3806 = vrot.slane %v3243, 7
        %v3807 = vrot.slane %v3806, 2
        %v3808 = vrot.slane %v3245, 7
        %v3809 = vrot.slane %v3808, 2
        %v3810 = vrot.slane %v3253, 7
        %v3811 = vrot.slane %v3810, 2
        %v3812 = vrot.slane %v3261, 7
        %v3813 = vrot.slane %v3812, 2
        %v3814 = vrot.slane %v3260, 7
        %v3815 = vrot.slane %v3814, 2
        %v3816 = vrot.slane %v3262, 7
        %v3817 = vrot.slane %v3816, 2
        %v3818 = vrot.slane %v3270, 7
        %v3819 = vrot.slane %v3818, 2
        %v3820 = vrot.slane %v3278, 7
        %v3821 = vrot.slane %v3820, 2
        %v3822 = vrot.slane %v3277, 7
        %v3823 = vrot.slane %v3822, 2
        %v3824 = vrot.slane %v3279, 7
        %v3825 = vrot.slane %v3824, 2
        %v3826 = vrot.slane %v3287, 7
        %v3827 = vrot.slane %v3826, 2
        %v3828 = vrot.slane %v3295, 7
        %v3829 = vrot.slane %v3828, 2
        %v3830 = vrot.slane %v3294, 7
        %v3831 = vrot.slane %v3830, 2
        %v3832 = vrot.slane %v3296, 7
        %v3833 = vrot.slane %v3832, 2
        %v3834 = vrot.slane %v3304, 7
        %v3835 = vrot.slane %v3834, 2
        %v3836 = vrot.slane %v3312, 7
        %v3837 = vrot.slane %v3836, 2
        %v3838 = vrot.slane %v3311, 7
        %v3839 = vrot.slane %v3838, 2
        %v3840 = vrot.slane %v3313, 7
        %v3841 = vrot.slane %v3840, 2
        %v3842 = vrot.slane %v3321, 7
        %v3843 = vrot.slane %v3842, 2
        %v3844 = vrot.slane %v3329, 7
        %v3845 = vrot.slane %v3844, 2
        %v3846 = vrot.slane %v3328, 7
        %v3847 = vrot.slane %v3846, 2
        %v3848 = vrot.slane %v3330, 7
        %v3849 = vrot.slane %v3848, 2
        %v3850 = vrot.slane %v3338, 7
        %v3851 = vrot.slane %v3850, 2
        %v3852 = vrot.slane %v3346, 7
        %v3853 = vrot.slane %v3852, 2
        %v3854 = vrot.slane %v3345, 7
        %v3855 = vrot.slane %v3854, 2
        %v3856 = vrot.slane %v3347, 7
        %v3857 = vrot.slane %v3856, 2
        %v3858 = vrot.slane %v3355, 7
        %v3859 = vrot.slane %v3858, 2
        %v3860 = vrot.slane %v3363, 7
        %v3861 = vrot.slane %v3860, 2
        %v3862 = vrot.slane %v3362, 7
        %v3863 = vrot.slane %v3862, 2
        %v3864 = vrot.slane %v3364, 7
        %v3865 = vrot.slane %v3864, 2
        %v3866 = vrot.slane %v3372, 7
        %v3867 = vrot.slane %v3866, 2
        %v3868 = vrot.slane %v3380, 7
        %v3869 = vrot.slane %v3868, 2
        %v3870 = vrot.slane %v3379, 7
        %v3871 = vrot.slane %v3870, 2
        %v3872 = vrot.slane %v3381, 7
        %v3873 = vrot.slane %v3872, 2
        %v3874 = vrot.slane %v3389, 7
        %v3875 = vrot.slane %v3874, 2
        %v3876 = vrot.slane %v3397, 7
        %v3877 = vrot.slane %v3876, 2
        %v3878 = vrot.slane %v3396, 7
        %v3879 = vrot.slane %v3878, 2
        %v3880 = vrot.slane %v3398, 7
        %v3881 = vrot.slane %v3880, 2
        %v3882 = vrot.slane %v3406, 7
        %v3883 = vrot.slane %v3882, 2
        %v3884 = vrot.slane %v3414, 7
        %v3885 = vrot.slane %v3884, 2
        %v3886 = vrot.slane %v3413, 7
        %v3887 = vrot.slane %v3886, 2
        %v3888 = vrot.slane %v3415, 7
        %v3889 = vrot.slane %v3888, 2
        %v3890 = vrot.slane %v3423, 7
        %v3891 = vrot.slane %v3890, 2
        %v3892 = vrot.slane %v3431, 7
        %v3893 = vrot.slane %v3892, 2
        %v3894 = vrot.slane %v3430, 7
        %v3895 = vrot.slane %v3894, 2
        %v3896 = vrot.slane %v3432, 7
        %v3897 = vrot.slane %v3896, 2
        %v3898 = vrot.slane %v3440, 7
        %v3899 = vrot.slane %v3898, 2
        %v3900 = vrot.slane %v3448, 7
        %v3901 = vrot.slane %v3900, 2
        %v3902 = vrot.slane %v3447, 7
        %v3903 = vrot.slane %v3902, 2
        %v3904 = vrot.slane %v3449, 7
        %v3905 = vrot.slane %v3904, 2
        %v3906 = vrot.slane %v3457, 7
        %v3907 = vrot.slane %v3906, 2
        %v3908 = vrot.slane %v3465, 7
        %v3909 = vrot.slane %v3908, 2
        %v3910 = vrot.slane %v3464, 7
        %v3911 = vrot.slane %v3910, 2
        %v3912 = vrot.slane %v3466, 7
        %v3913 = vrot.slane %v3912, 2
        %v3914 = vrot.slane %v3474, 7
        %v3915 = vrot.slane %v3914, 2
        %v3916 = vrot.slane %v3482, 7
        %v3917 = vrot.slane %v3916, 2
        %v3918 = vrot.slane %v3481, 7
        %v3919 = vrot.slane %v3918, 2
        %v3920 = vrot.slane %v3483, 7
        %v3921 = vrot.slane %v3920, 2
        %v3922 = vrot.slane %v3491, 7
        %v3923 = vrot.slane %v3922, 2
        %v3924 = vrot.slane %v3499, 7
        %v3925 = vrot.slane %v3924, 2
        %v3926 = vrot.slane %v3498, 7
        %v3927 = vrot.slane %v3926, 2
        %v3928 = vrot.slane %v3500, 7
        %v3929 = vrot.slane %v3928, 2
        %v3930 = vrot.slane %v3508, 7
        %v3931 = vrot.slane %v3930, 2
        %v3932 = vrot.slane %v3516, 7
        %v3933 = vrot.slane %v3932, 2
        %v3934 = vrot.slane %v3515, 7
        %v3935 = vrot.slane %v3934, 2
        %v3936 = vrot.slane %v3517, 7
        %v3937 = vrot.slane %v3936, 2
        %v3938 = vrot.slane %v3525, 7
        %v3939 = vrot.slane %v3938, 2
        %v3940 = vrot.slane %v3533, 7
        %v3941 = vrot.slane %v3940, 2
        %v3942 = vrot.slane %v3532, 7
        %v3943 = vrot.slane %v3942, 2
        %v3944 = vrot.slane %v3534, 7
        %v3945 = vrot.slane %v3944, 2
        %v3946 = vrot.slane %v3542, 7
        %v3947 = vrot.slane %v3946, 2
        %v3948 = vrot.slane %v3550, 7
        %v3949 = vrot.slane %v3948, 2
        %v3950 = vrot.slane %v3549, 7
        %v3951 = vrot.slane %v3950, 2
        %v3952 = vrot.slane %v3551, 7
        %v3953 = vrot.slane %v3952, 2
        %v3954 = vrot.slane %v3559, 7
        %v3955 = vrot.slane %v3954, 2
        %v3956 = vrot.slane %v3567, 7
        %v3957 = vrot.slane %v3956, 2
        %v3958 = vrot.slane %v3566, 7
        %v3959 = vrot.slane %v3958, 2
        %v3960 = vrot.slane %v3568, 7
        %v3961 = vrot.slane %v3960, 2
        %v3962 = vrot.slane %v3576, 7
        %v3963 = vrot.slane %v3962, 2
        %v3964 = vrot.slane %v3584, 7
        %v3965 = vrot.slane %v3964, 2
        %v3966 = vrot.slane %v3583, 7
        %v3967 = vrot.slane %v3966, 2
        %v3968 = vrot.slane %v3585, 7
        %v3969 = vrot.slane %v3968, 2
        %v4098 = vadd.f32 %v3049, %v3715
        %v4099 = vadd.f32 %v3057, %v3717
        %v4100 = vadd.f32 %v3056, %v3719
        %v4101 = vadd.f32 %v3058, %v3721
        %v4102 = vadd.f32 %v3066, %v3723
        %v4103 = vadd.f32 %v3074, %v3725
        %v4104 = vadd.f32 %v3073, %v3727
        %v4105 = vadd.f32 %v3075, %v3729
        %v4106 = vadd.f32 %v3083, %v3731
        %v4107 = vadd.f32 %v3091, %v3733
        %v4108 = vadd.f32 %v3090, %v3735
        %v4109 = vadd.f32 %v3092, %v3737
        %v4110 = vadd.f32 %v3100, %v3739
        %v4111 = vadd.f32 %v3108, %v3741
        %v4112 = vadd.f32 %v3107, %v3743
        %v4113 = vadd.f32 %v3109, %v3745
        %v4114 = vadd.f32 %v3117, %v3747
        %v4115 = vadd.f32 %v3125, %v3749
        %v4116 = vadd.f32 %v3124, %v3751
        %v4117 = vadd.f32 %v3126, %v3753
        %v4118 = vadd.f32 %v3134, %v3755
        %v4119 = vadd.f32 %v3142, %v3757
        %v4120 = vadd.f32 %v3141, %v3759
        %v4121 = vadd.f32 %v3143, %v3761
        %v4122 = vadd.f32 %v3151, %v3763
        %v4123 = vadd.f32 %v3159, %v3765
        %v4124 = vadd.f32 %v3158, %v3767
        %v4125 = vadd.f32 %v3160, %v3769
        %v4126 = vadd.f32 %v3168, %v3771
        %v4127 = vadd.f32 %v3176, %v3773
        %v4128 = vadd.f32 %v3175, %v3775
        %v4129 = vadd.f32 %v3177, %v3777
        %v4130 = vadd.f32 %v3185, %v3779
        %v4131 = vadd.f32 %v3193, %v3781
        %v4132 = vadd.f32 %v3192, %v3783
        %v4133 = vadd.f32 %v3194, %v3785
        %v4134 = vadd.f32 %v3202, %v3787
        %v4135 = vadd.f32 %v3210, %v3789
        %v4136 = vadd.f32 %v3209, %v3791
        %v4137 = vadd.f32 %v3211, %v3793
        %v4138 = vadd.f32 %v3219, %v3795
        %v4139 = vadd.f32 %v3227, %v3797
        %v4140 = vadd.f32 %v3226, %v3799
        %v4141 = vadd.f32 %v3228, %v3801
        %v4142 = vadd.f32 %v3236, %v3803
        %v4143 = vadd.f32 %v3244, %v3805
        %v4144 = vadd.f32 %v3243, %v3807
        %v4145 = vadd.f32 %v3245, %v3809
        %v4146 = vadd.f32 %v3253, %v3811
        %v4147 = vadd.f32 %v3261, %v3813
        %v4148 = vadd.f32 %v3260, %v3815
        %v4149 = vadd.f32 %v3262, %v3817
        %v4150 = vadd.f32 %v3270, %v3819
        %v4151 = vadd.f32 %v3278, %v3821
        %v4152 = vadd.f32 %v3277, %v3823
        %v4153 = vadd.f32 %v3279, %v3825
        %v4154 = vadd.f32 %v3287, %v3827
        %v4155 = vadd.f32 %v3295, %v3829
        %v4156 = vadd.f32 %v3294, %v3831
        %v4157 = vadd.f32 %v3296, %v3833
        %v4158 = vadd.f32 %v3304, %v3835
        %v4159 = vadd.f32 %v3312, %v3837
        %v4160 = vadd.f32 %v3311, %v3839
        %v4161 = vadd.f32 %v3313, %v3841
        %v4162 = vadd.f32 %v3321, %v3843
        %v4163 = vadd.f32 %v3329, %v3845
        %v4164 = vadd.f32 %v3328, %v3847
        %v4165 = vadd.f32 %v3330, %v3849
        %v4166 = vadd.f32 %v3338, %v3851
        %v4167 = vadd.f32 %v3346, %v3853
        %v4168 = vadd.f32 %v3345, %v3855
        %v4169 = vadd.f32 %v3347, %v3857
        %v4170 = vadd.f32 %v3355, %v3859
        %v4171 = vadd.f32 %v3363, %v3861
        %v4172 = vadd.f32 %v3362, %v3863
        %v4173 = vadd.f32 %v3364, %v3865
        %v4174 = vadd.f32 %v3372, %v3867
        %v4175 = vadd.f32 %v3380, %v3869
        %v4176 = vadd.f32 %v3379, %v3871
        %v4177 = vadd.f32 %v3381, %v3873
        %v4178 = vadd.f32 %v3389, %v3875
        %v4179 = vadd.f32 %v3397, %v3877
        %v4180 = vadd.f32 %v3396, %v3879
        %v4181 = vadd.f32 %v3398, %v3881
        %v4182 = vadd.f32 %v3406, %v3883
        %v4183 = vadd.f32 %v3414, %v3885
        %v4184 = vadd.f32 %v3413, %v3887
        %v4185 = vadd.f32 %v3415, %v3889
        %v4186 = vadd.f32 %v3423, %v3891
        %v4187 = vadd.f32 %v3431, %v3893
        %v4188 = vadd.f32 %v3430, %v3895
        %v4189 = vadd.f32 %v3432, %v3897
        %v4190 = vadd.f32 %v3440, %v3899
        %v4191 = vadd.f32 %v3448, %v3901
        %v4192 = vadd.f32 %v3447, %v3903
        %v4193 = vadd.f32 %v3449, %v3905
        %v4194 = vadd.f32 %v3457, %v3907
        %v4195 = vadd.f32 %v3465, %v3909
        %v4196 = vadd.f32 %v3464, %v3911
        %v4197 = vadd.f32 %v3466, %v3913
        %v4198 = vadd.f32 %v3474, %v3915
        %v4199 = vadd.f32 %v3482, %v3917
        %v4200 = vadd.f32 %v3481, %v3919
        %v4201 = vadd.f32 %v3483, %v3921
        %v4202 = vadd.f32 %v3491, %v3923
        %v4203 = vadd.f32 %v3499, %v3925
        %v4204 = vadd.f32 %v3498, %v3927
        %v4205 = vadd.f32 %v3500, %v3929
        %v4206 = vadd.f32 %v3508, %v3931
        %v4207 = vadd.f32 %v3516, %v3933
        %v4208 = vadd.f32 %v3515, %v3935
        %v4209 = vadd.f32 %v3517, %v3937
        %v4210 = vadd.f32 %v3525, %v3939
        %v4211 = vadd.f32 %v3533, %v3941
        %v4212 = vadd.f32 %v3532, %v3943
        %v4213 = vadd.f32 %v3534, %v3945
        %v4214 = vadd.f32 %v3542, %v3947
        %v4215 = vadd.f32 %v3550, %v3949
        %v4216 = vadd.f32 %v3549, %v3951
        %v4217 = vadd.f32 %v3551, %v3953
        %v4218 = vadd.f32 %v3559, %v3955
        %v4219 = vadd.f32 %v3567, %v3957
        %v4220 = vadd.f32 %v3566, %v3959
        %v4221 = vadd.f32 %v3568, %v3961
        %v4222 = vadd.f32 %v3576, %v3963
        %v4223 = vadd.f32 %v3584, %v3965
        %v4224 = vadd.f32 %v3583, %v3967
        %v4225 = vadd.f32 %v3585, %v3969
        %v4226 = vadd.f32 %v4098, %v4106
        %v4227 = vadd.f32 %v4099, %v4107
        %v4228 = vadd.f32 %v4100, %v4108
        %v4229 = vadd.f32 %v4101, %v4109
        %v4230 = vadd.f32 %v4102, %v4110
        %v4231 = vadd.f32 %v4103, %v4111
        %v4232 = vadd.f32 %v4104, %v4112
        %v4233 = vadd.f32 %v4105, %v4113
        %v4234 = vadd.f32 %v4114, %v4122
        %v4235 = vadd.f32 %v4115, %v4123
        %v4236 = vadd.f32 %v4116, %v4124
        %v4237 = vadd.f32 %v4117, %v4125
        %v4238 = vadd.f32 %v4118, %v4126
        %v4239 = vadd.f32 %v4119, %v4127
        %v4240 = vadd.f32 %v4120, %v4128
        %v4241 = vadd.f32 %v4121, %v4129
        %v4242 = vadd.f32 %v4130, %v4138
        %v4243 = vadd.f32 %v4131, %v4139
        %v4244 = vadd.f32 %v4132, %v4140
        %v4245 = vadd.f32 %v4133, %v4141
        %v4246 = vadd.f32 %v4134, %v4142
        %v4247 = vadd.f32 %v4135, %v4143
        %v4248 = vadd.f32 %v4136, %v4144
        %v4249 = vadd.f32 %v4137, %v4145
        %v4250 = vadd.f32 %v4146, %v4154
        %v4251 = vadd.f32 %v4147, %v4155
        %v4252 = vadd.f32 %v4148, %v4156
        %v4253 = vadd.f32 %v4149, %v4157
        %v4254 = vadd.f32 %v4150, %v4158
        %v4255 = vadd.f32 %v4151, %v4159
        %v4256 = vadd.f32 %v4152, %v4160
        %v4257 = vadd.f32 %v4153, %v4161
        %v4258 = vadd.f32 %v4162, %v4170
        %v4259 = vadd.f32 %v4163, %v4171
        %v4260 = vadd.f32 %v4164, %v4172
        %v4261 = vadd.f32 %v4165, %v4173
        %v4262 = vadd.f32 %v4166, %v4174
        %v4263 = vadd.f32 %v4167, %v4175
        %v4264 = vadd.f32 %v4168, %v4176
        %v4265 = vadd.f32 %v4169, %v4177
        %v4266 = vadd.f32 %v4178, %v4186
        %v4267 = vadd.f32 %v4179, %v4187
        %v4268 = vadd.f32 %v4180, %v4188
        %v4269 = vadd.f32 %v4181, %v4189
        %v4270 = vadd.f32 %v4182, %v4190
        %v4271 = vadd.f32 %v4183, %v4191
        %v4272 = vadd.f32 %v4184, %v4192
        %v4273 = vadd.f32 %v4185, %v4193
        %v4274 = vadd.f32 %v4194, %v4202
        %v4275 = vadd.f32 %v4195, %v4203
        %v4276 = vadd.f32 %v4196, %v4204
        %v4277 = vadd.f32 %v4197, %v4205
        %v4278 = vadd.f32 %v4198, %v4206
        %v4279 = vadd.f32 %v4199, %v4207
        %v4280 = vadd.f32 %v4200, %v4208
        %v4281 = vadd.f32 %v4201, %v4209
        %v4282 = vadd.f32 %v4210, %v4218
        %v4283 = vadd.f32 %v4211, %v4219
        %v4284 = vadd.f32 %v4212, %v4220
        %v4285 = vadd.f32 %v4213, %v4221
        %v4286 = vadd.f32 %v4214, %v4222
        %v4287 = vadd.f32 %v4215, %v4223
        %v4288 = vadd.f32 %v4216, %v4224
        %v4289 = vadd.f32 %v4217, %v4225
        %v4290 = vmul.f32 %v4226, 0.25
        %v4291 = vmul.f32 %v4227, 0.25
        %v4292 = vmul.f32 %v4228, 0.25
        %v4293 = vmul.f32 %v4229, 0.25
        %v4294 = vmul.f32 %v4230, 0.25
        %v4295 = vmul.f32 %v4231, 0.25
        %v4296 = vmul.f32 %v4232, 0.25
        %v4297 = vmul.f32 %v4233, 0.25
        %v4298 = vmul.f32 %v4234, 0.25
        %v4299 = vmul.f32 %v4235, 0.25
        %v4300 = vmul.f32 %v4236, 0.25
        %v4301 = vmul.f32 %v4237, 0.25
        %v4302 = vmul.f32 %v4238, 0.25
        %v4303 = vmul.f32 %v4239, 0.25
        %v4304 = vmul.f32 %v4240, 0.25
        %v4305 = vmul.f32 %v4241, 0.25
        %v4306 = vmul.f32 %v4242, 0.25
        %v4307 = vmul.f32 %v4243, 0.25
        %v4308 = vmul.f32 %v4244, 0.25
        %v4309 = vmul.f32 %v4245, 0.25
        %v4310 = vmul.f32 %v4246, 0.25
        %v4311 = vmul.f32 %v4247, 0.25
        %v4312 = vmul.f32 %v4248, 0.25
        %v4313 = vmul.f32 %v4249, 0.25
        %v4314 = vmul.f32 %v4250, 0.25
        %v4315 = vmul.f32 %v4251, 0.25
        %v4316 = vmul.f32 %v4252, 0.25
        %v4317 = vmul.f32 %v4253, 0.25
        %v4318 = vmul.f32 %v4254, 0.25
        %v4319 = vmul.f32 %v4255, 0.25
        %v4320 = vmul.f32 %v4256, 0.25
        %v4321 = vmul.f32 %v4257, 0.25
        %v4322 = vmul.f32 %v4258, 0.25
        %v4323 = vmul.f32 %v4259, 0.25
        %v4324 = vmul.f32 %v4260, 0.25
        %v4325 = vmul.f32 %v4261, 0.25
        %v4326 = vmul.f32 %v4262, 0.25
        %v4327 = vmul.f32 %v4263, 0.25
        %v4328 = vmul.f32 %v4264, 0.25
        %v4329 = vmul.f32 %v4265, 0.25
        %v4330 = vmul.f32 %v4266, 0.25
        %v4331 = vmul.f32 %v4267, 0.25
        %v4332 = vmul.f32 %v4268, 0.25
        %v4333 = vmul.f32 %v4269, 0.25
        %v4334 = vmul.f32 %v4270, 0.25
        %v4335 = vmul.f32 %v4271, 0.25
        %v4336 = vmul.f32 %v4272, 0.25
        %v4337 = vmul.f32 %v4273, 0.25
        %v4338 = vmul.f32 %v4274, 0.25
        %v4339 = vmul.f32 %v4275, 0.25
        %v4340 = vmul.f32 %v4276, 0.25
        %v4341 = vmul.f32 %v4277, 0.25
        %v4342 = vmul.f32 %v4278, 0.25
        %v4343 = vmul.f32 %v4279, 0.25
        %v4344 = vmul.f32 %v4280, 0.25
        %v4345 = vmul.f32 %v4281, 0.25
        %v4346 = vmul.f32 %v4282, 0.25
        %v4347 = vmul.f32 %v4283, 0.25
        %v4348 = vmul.f32 %v4284, 0.25
        %v4349 = vmul.f32 %v4285, 0.25
        %v4350 = vmul.f32 %v4286, 0.25
        %v4351 = vmul.f32 %v4287, 0.25
        %v4352 = vmul.f32 %v4288, 0.25
        %v4353 = vmul.f32 %v4289, 0.25
        %v4354 = vpack.c.bf16 %v4290, %v4290
        %v4355 = vpack.c.bf16 %v4291, %v4291
        %v4356 = vpack.c.bf16 %v4292, %v4292
        %v4357 = vpack.c.bf16 %v4293, %v4293
        %v4358 = vpack.c.bf16 %v4294, %v4294
        %v4359 = vpack.c.bf16 %v4295, %v4295
        %v4360 = vpack.c.bf16 %v4296, %v4296
        %v4361 = vpack.c.bf16 %v4297, %v4297
        %v4362 = vpack.c.bf16 %v4298, %v4298
        %v4363 = vpack.c.bf16 %v4299, %v4299
        %v4364 = vpack.c.bf16 %v4300, %v4300
        %v4365 = vpack.c.bf16 %v4301, %v4301
        %v4366 = vpack.c.bf16 %v4302, %v4302
        %v4367 = vpack.c.bf16 %v4303, %v4303
        %v4368 = vpack.c.bf16 %v4304, %v4304
        %v4369 = vpack.c.bf16 %v4305, %v4305
        %v4370 = vpack.c.bf16 %v4306, %v4306
        %v4371 = vpack.c.bf16 %v4307, %v4307
        %v4372 = vpack.c.bf16 %v4308, %v4308
        %v4373 = vpack.c.bf16 %v4309, %v4309
        %v4374 = vpack.c.bf16 %v4310, %v4310
        %v4375 = vpack.c.bf16 %v4311, %v4311
        %v4376 = vpack.c.bf16 %v4312, %v4312
        %v4377 = vpack.c.bf16 %v4313, %v4313
        %v4378 = vpack.c.bf16 %v4314, %v4314
        %v4379 = vpack.c.bf16 %v4315, %v4315
        %v4380 = vpack.c.bf16 %v4316, %v4316
        %v4381 = vpack.c.bf16 %v4317, %v4317
        %v4382 = vpack.c.bf16 %v4318, %v4318
        %v4383 = vpack.c.bf16 %v4319, %v4319
        %v4384 = vpack.c.bf16 %v4320, %v4320
        %v4385 = vpack.c.bf16 %v4321, %v4321
        %v4386 = vpack.c.bf16 %v4322, %v4322
        %v4387 = vpack.c.bf16 %v4323, %v4323
        %v4388 = vpack.c.bf16 %v4324, %v4324
        %v4389 = vpack.c.bf16 %v4325, %v4325
        %v4390 = vpack.c.bf16 %v4326, %v4326
        %v4391 = vpack.c.bf16 %v4327, %v4327
        %v4392 = vpack.c.bf16 %v4328, %v4328
        %v4393 = vpack.c.bf16 %v4329, %v4329
        %v4394 = vpack.c.bf16 %v4330, %v4330
        %v4395 = vpack.c.bf16 %v4331, %v4331
        %v4396 = vpack.c.bf16 %v4332, %v4332
        %v4397 = vpack.c.bf16 %v4333, %v4333
        %v4398 = vpack.c.bf16 %v4334, %v4334
        %v4399 = vpack.c.bf16 %v4335, %v4335
        %v4400 = vpack.c.bf16 %v4336, %v4336
        %v4401 = vpack.c.bf16 %v4337, %v4337
        %v4402 = vpack.c.bf16 %v4338, %v4338
        %v4403 = vpack.c.bf16 %v4339, %v4339
        %v4404 = vpack.c.bf16 %v4340, %v4340
        %v4405 = vpack.c.bf16 %v4341, %v4341
        %v4406 = vpack.c.bf16 %v4342, %v4342
        %v4407 = vpack.c.bf16 %v4343, %v4343
        %v4408 = vpack.c.bf16 %v4344, %v4344
        %v4409 = vpack.c.bf16 %v4345, %v4345
        %v4410 = vpack.c.bf16 %v4346, %v4346
        %v4411 = vpack.c.bf16 %v4347, %v4347
        %v4412 = vpack.c.bf16 %v4348, %v4348
        %v4413 = vpack.c.bf16 %v4349, %v4349
        %v4414 = vpack.c.bf16 %v4350, %v4350
        %v4415 = vpack.c.bf16 %v4351, %v4351
        %v4416 = vpack.c.bf16 %v4352, %v4352
        %v4417 = vpack.c.bf16 %v4353, %v4353
        %v4482 = vunpack.c.l.b16 %v4354
        %v4483 = vunpack.c.l.b16 %v4355
        %v4484 = vunpack.c.l.b16 %v4356
        %v4485 = vunpack.c.l.b16 %v4357
        %v4486 = vunpack.c.l.b16 %v4358
        %v4487 = vunpack.c.l.b16 %v4359
        %v4488 = vunpack.c.l.b16 %v4360
        %v4489 = vunpack.c.l.b16 %v4361
        %v4490 = vunpack.c.l.b16 %v4362
        %v4491 = vunpack.c.l.b16 %v4363
        %v4492 = vunpack.c.l.b16 %v4364
        %v4493 = vunpack.c.l.b16 %v4365
        %v4494 = vunpack.c.l.b16 %v4366
        %v4495 = vunpack.c.l.b16 %v4367
        %v4496 = vunpack.c.l.b16 %v4368
        %v4497 = vunpack.c.l.b16 %v4369
        %v4498 = vunpack.c.l.b16 %v4370
        %v4499 = vunpack.c.l.b16 %v4371
        %v4500 = vunpack.c.l.b16 %v4372
        %v4501 = vunpack.c.l.b16 %v4373
        %v4502 = vunpack.c.l.b16 %v4374
        %v4503 = vunpack.c.l.b16 %v4375
        %v4504 = vunpack.c.l.b16 %v4376
        %v4505 = vunpack.c.l.b16 %v4377
        %v4506 = vunpack.c.l.b16 %v4378
        %v4507 = vunpack.c.l.b16 %v4379
        %v4508 = vunpack.c.l.b16 %v4380
        %v4509 = vunpack.c.l.b16 %v4381
        %v4510 = vunpack.c.l.b16 %v4382
        %v4511 = vunpack.c.l.b16 %v4383
        %v4512 = vunpack.c.l.b16 %v4384
        %v4513 = vunpack.c.l.b16 %v4385
        %v4514 = vunpack.c.l.b16 %v4386
        %v4515 = vunpack.c.l.b16 %v4387
        %v4516 = vunpack.c.l.b16 %v4388
        %v4517 = vunpack.c.l.b16 %v4389
        %v4518 = vunpack.c.l.b16 %v4390
        %v4519 = vunpack.c.l.b16 %v4391
        %v4520 = vunpack.c.l.b16 %v4392
        %v4521 = vunpack.c.l.b16 %v4393
        %v4522 = vunpack.c.l.b16 %v4394
        %v4523 = vunpack.c.l.b16 %v4395
        %v4524 = vunpack.c.l.b16 %v4396
        %v4525 = vunpack.c.l.b16 %v4397
        %v4526 = vunpack.c.l.b16 %v4398
        %v4527 = vunpack.c.l.b16 %v4399
        %v4528 = vunpack.c.l.b16 %v4400
        %v4529 = vunpack.c.l.b16 %v4401
        %v4530 = vunpack.c.l.b16 %v4402
        %v4531 = vunpack.c.l.b16 %v4403
        %v4532 = vunpack.c.l.b16 %v4404
        %v4533 = vunpack.c.l.b16 %v4405
        %v4534 = vunpack.c.l.b16 %v4406
        %v4535 = vunpack.c.l.b16 %v4407
        %v4536 = vunpack.c.l.b16 %v4408
        %v4537 = vunpack.c.l.b16 %v4409
        %v4538 = vunpack.c.l.b16 %v4410
        %v4539 = vunpack.c.l.b16 %v4411
        %v4540 = vunpack.c.l.b16 %v4412
        %v4541 = vunpack.c.l.b16 %v4413
        %v4542 = vunpack.c.l.b16 %v4414
        %v4543 = vunpack.c.l.b16 %v4415
        %v4544 = vunpack.c.l.b16 %v4416
        %v4545 = vunpack.c.l.b16 %v4417
        %v4546 = vpack.c.b16 %v4482, %v4482
        %v4547 = vpack.c.b16 %v4483, %v4483
        %v4548 = vpack.c.b16 %v4484, %v4484
        %v4549 = vpack.c.b16 %v4485, %v4485
        %v4550 = vpack.c.b16 %v4486, %v4486
        %v4551 = vpack.c.b16 %v4487, %v4487
        %v4552 = vpack.c.b16 %v4488, %v4488
        %v4553 = vpack.c.b16 %v4489, %v4489
        %v4554 = vpack.c.b16 %v4490, %v4490
        %v4555 = vpack.c.b16 %v4491, %v4491
        %v4556 = vpack.c.b16 %v4492, %v4492
        %v4557 = vpack.c.b16 %v4493, %v4493
        %v4558 = vpack.c.b16 %v4494, %v4494
        %v4559 = vpack.c.b16 %v4495, %v4495
        %v4560 = vpack.c.b16 %v4496, %v4496
        %v4561 = vpack.c.b16 %v4497, %v4497
        %v4562 = vpack.c.b16 %v4498, %v4498
        %v4563 = vpack.c.b16 %v4499, %v4499
        %v4564 = vpack.c.b16 %v4500, %v4500
        %v4565 = vpack.c.b16 %v4501, %v4501
        %v4566 = vpack.c.b16 %v4502, %v4502
        %v4567 = vpack.c.b16 %v4503, %v4503
        %v4568 = vpack.c.b16 %v4504, %v4504
        %v4569 = vpack.c.b16 %v4505, %v4505
        %v4570 = vpack.c.b16 %v4506, %v4506
        %v4571 = vpack.c.b16 %v4507, %v4507
        %v4572 = vpack.c.b16 %v4508, %v4508
        %v4573 = vpack.c.b16 %v4509, %v4509
        %v4574 = vpack.c.b16 %v4510, %v4510
        %v4575 = vpack.c.b16 %v4511, %v4511
        %v4576 = vpack.c.b16 %v4512, %v4512
        %v4577 = vpack.c.b16 %v4513, %v4513
        %v4578 = vpack.c.b16 %v4514, %v4514
        %v4579 = vpack.c.b16 %v4515, %v4515
        %v4580 = vpack.c.b16 %v4516, %v4516
        %v4581 = vpack.c.b16 %v4517, %v4517
        %v4582 = vpack.c.b16 %v4518, %v4518
        %v4583 = vpack.c.b16 %v4519, %v4519
        %v4584 = vpack.c.b16 %v4520, %v4520
        %v4585 = vpack.c.b16 %v4521, %v4521
        %v4586 = vpack.c.b16 %v4522, %v4522
        %v4587 = vpack.c.b16 %v4523, %v4523
        %v4588 = vpack.c.b16 %v4524, %v4524
        %v4589 = vpack.c.b16 %v4525, %v4525
        %v4590 = vpack.c.b16 %v4526, %v4526
        %v4591 = vpack.c.b16 %v4527, %v4527
        %v4592 = vpack.c.b16 %v4528, %v4528
        %v4593 = vpack.c.b16 %v4529, %v4529
        %v4594 = vpack.c.b16 %v4530, %v4530
        %v4595 = vpack.c.b16 %v4531, %v4531
        %v4596 = vpack.c.b16 %v4532, %v4532
        %v4597 = vpack.c.b16 %v4533, %v4533
        %v4598 = vpack.c.b16 %v4534, %v4534
        %v4599 = vpack.c.b16 %v4535, %v4535
        %v4600 = vpack.c.b16 %v4536, %v4536
        %v4601 = vpack.c.b16 %v4537, %v4537
        %v4602 = vpack.c.b16 %v4538, %v4538
        %v4603 = vpack.c.b16 %v4539, %v4539
        %v4604 = vpack.c.b16 %v4540, %v4540
        %v4605 = vpack.c.b16 %v4541, %v4541
        %v4606 = vpack.c.b16 %v4542, %v4542
        %v4607 = vpack.c.b16 %v4543, %v4543
        %v4608 = vpack.c.b16 %v4544, %v4544
        %v4609 = vpack.c.b16 %v4545, %v4545
        %v4610 = vunpack.c.l.b16 %v4546
        %v4611 = vunpack.c.l.b16 %v4547
        %v4612 = vunpack.c.l.b16 %v4548
        %v4613 = vunpack.c.l.b16 %v4549
        %v4614 = vunpack.c.l.b16 %v4550
        %v4615 = vunpack.c.l.b16 %v4551
        %v4616 = vunpack.c.l.b16 %v4552
        %v4617 = vunpack.c.l.b16 %v4553
        %v4618 = vunpack.c.l.b16 %v4554
        %v4619 = vunpack.c.l.b16 %v4555
        %v4620 = vunpack.c.l.b16 %v4556
        %v4621 = vunpack.c.l.b16 %v4557
        %v4622 = vunpack.c.l.b16 %v4558
        %v4623 = vunpack.c.l.b16 %v4559
        %v4624 = vunpack.c.l.b16 %v4560
        %v4625 = vunpack.c.l.b16 %v4561
        %v4626 = vunpack.c.l.b16 %v4562
        %v4627 = vunpack.c.l.b16 %v4563
        %v4628 = vunpack.c.l.b16 %v4564
        %v4629 = vunpack.c.l.b16 %v4565
        %v4630 = vunpack.c.l.b16 %v4566
        %v4631 = vunpack.c.l.b16 %v4567
        %v4632 = vunpack.c.l.b16 %v4568
        %v4633 = vunpack.c.l.b16 %v4569
        %v4634 = vunpack.c.l.b16 %v4570
        %v4635 = vunpack.c.l.b16 %v4571
        %v4636 = vunpack.c.l.b16 %v4572
        %v4637 = vunpack.c.l.b16 %v4573
        %v4638 = vunpack.c.l.b16 %v4574
        %v4639 = vunpack.c.l.b16 %v4575
        %v4640 = vunpack.c.l.b16 %v4576
        %v4641 = vunpack.c.l.b16 %v4577
        %v4642 = vunpack.c.l.b16 %v4578
        %v4643 = vunpack.c.l.b16 %v4579
        %v4644 = vunpack.c.l.b16 %v4580
        %v4645 = vunpack.c.l.b16 %v4581
        %v4646 = vunpack.c.l.b16 %v4582
        %v4647 = vunpack.c.l.b16 %v4583
        %v4648 = vunpack.c.l.b16 %v4584
        %v4649 = vunpack.c.l.b16 %v4585
        %v4650 = vunpack.c.l.b16 %v4586
        %v4651 = vunpack.c.l.b16 %v4587
        %v4652 = vunpack.c.l.b16 %v4588
        %v4653 = vunpack.c.l.b16 %v4589
        %v4654 = vunpack.c.l.b16 %v4590
        %v4655 = vunpack.c.l.b16 %v4591
        %v4656 = vunpack.c.l.b16 %v4592
        %v4657 = vunpack.c.l.b16 %v4593
        %v4658 = vunpack.c.l.b16 %v4594
        %v4659 = vunpack.c.l.b16 %v4595
        %v4660 = vunpack.c.l.b16 %v4596
        %v4661 = vunpack.c.l.b16 %v4597
        %v4662 = vunpack.c.l.b16 %v4598
        %v4663 = vunpack.c.l.b16 %v4599
        %v4664 = vunpack.c.l.b16 %v4600
        %v4665 = vunpack.c.l.b16 %v4601
        %v4666 = vunpack.c.l.b16 %v4602
        %v4667 = vunpack.c.l.b16 %v4603
        %v4668 = vunpack.c.l.b16 %v4604
        %v4669 = vunpack.c.l.b16 %v4605
        %v4670 = vunpack.c.l.b16 %v4606
        %v4671 = vunpack.c.l.b16 %v4607
        %v4672 = vunpack.c.l.b16 %v4608
        %v4673 = vunpack.c.l.b16 %v4609
        %v4674 = vrot.slane %v4611, 7
        %vm4675 = vcmask 1041409
        %v4676 = vsel %vm4675, %v4674, %v4610
        %v4677 = vrot.slane %v4612, 6
        %vm4678 = vcmask 1042434
        %v4679 = vsel %vm4678, %v4677, %v4676
        %v4680 = vrot.slane %v4613, 5
        %vm4681 = vcmask 1043459
        %v4682 = vsel %vm4681, %v4680, %v4679
        %v4683 = vrot.slane %v4614, 4
        %vm4684 = vcmask 1044484
        %v4685 = vsel %vm4684, %v4683, %v4682
        %v4686 = vrot.slane %v4615, 3
        %vm4687 = vcmask 1045509
        %v4688 = vsel %vm4687, %v4686, %v4685
        %v4689 = vrot.slane %v4616, 2
        %vm4690 = vcmask 1046534
        %v4691 = vsel %vm4690, %v4689, %v4688
        %v4692 = vrot.slane %v4617, 1
        %vm4693 = vcmask 1047559
        %v4694 = vsel %vm4693, %v4692, %v4691
        %v4695 = vrot.slane %v4619, 7
        %v4696 = vsel %vm4675, %v4695, %v4618
        %v4697 = vrot.slane %v4620, 6
        %v4698 = vsel %vm4678, %v4697, %v4696
        %v4699 = vrot.slane %v4621, 5
        %v4700 = vsel %vm4681, %v4699, %v4698
        %v4701 = vrot.slane %v4622, 4
        %v4702 = vsel %vm4684, %v4701, %v4700
        %v4703 = vrot.slane %v4623, 3
        %v4704 = vsel %vm4687, %v4703, %v4702
        %v4705 = vrot.slane %v4624, 2
        %v4706 = vsel %vm4690, %v4705, %v4704
        %v4707 = vrot.slane %v4625, 1
        %v4708 = vsel %vm4693, %v4707, %v4706
        %v4709 = vrot.slane %v4627, 7
        %v4710 = vsel %vm4675, %v4709, %v4626
        %v4711 = vrot.slane %v4628, 6
        %v4712 = vsel %vm4678, %v4711, %v4710
        %v4713 = vrot.slane %v4629, 5
        %v4714 = vsel %vm4681, %v4713, %v4712
        %v4715 = vrot.slane %v4630, 4
        %v4716 = vsel %vm4684, %v4715, %v4714
        %v4717 = vrot.slane %v4631, 3
        %v4718 = vsel %vm4687, %v4717, %v4716
        %v4719 = vrot.slane %v4632, 2
        %v4720 = vsel %vm4690, %v4719, %v4718
        %v4721 = vrot.slane %v4633, 1
        %v4722 = vsel %vm4693, %v4721, %v4720
        %v4723 = vrot.slane %v4635, 7
        %v4724 = vsel %vm4675, %v4723, %v4634
        %v4725 = vrot.slane %v4636, 6
        %v4726 = vsel %vm4678, %v4725, %v4724
        %v4727 = vrot.slane %v4637, 5
        %v4728 = vsel %vm4681, %v4727, %v4726
        %v4729 = vrot.slane %v4638, 4
        %v4730 = vsel %vm4684, %v4729, %v4728
        %v4731 = vrot.slane %v4639, 3
        %v4732 = vsel %vm4687, %v4731, %v4730
        %v4733 = vrot.slane %v4640, 2
        %v4734 = vsel %vm4690, %v4733, %v4732
        %v4735 = vrot.slane %v4641, 1
        %v4736 = vsel %vm4693, %v4735, %v4734
        %v4737 = vrot.slane %v4643, 7
        %v4738 = vsel %vm4675, %v4737, %v4642
        %v4739 = vrot.slane %v4644, 6
        %v4740 = vsel %vm4678, %v4739, %v4738
        %v4741 = vrot.slane %v4645, 5
        %v4742 = vsel %vm4681, %v4741, %v4740
        %v4743 = vrot.slane %v4646, 4
        %v4744 = vsel %vm4684, %v4743, %v4742
        %v4745 = vrot.slane %v4647, 3
        %v4746 = vsel %vm4687, %v4745, %v4744
        %v4747 = vrot.slane %v4648, 2
        %v4748 = vsel %vm4690, %v4747, %v4746
        %v4749 = vrot.slane %v4649, 1
        %v4750 = vsel %vm4693, %v4749, %v4748
        %v4751 = vrot.slane %v4651, 7
        %v4752 = vsel %vm4675, %v4751, %v4650
        %v4753 = vrot.slane %v4652, 6
        %v4754 = vsel %vm4678, %v4753, %v4752
        %v4755 = vrot.slane %v4653, 5
        %v4756 = vsel %vm4681, %v4755, %v4754
        %v4757 = vrot.slane %v4654, 4
        %v4758 = vsel %vm4684, %v4757, %v4756
        %v4759 = vrot.slane %v4655, 3
        %v4760 = vsel %vm4687, %v4759, %v4758
        %v4761 = vrot.slane %v4656, 2
        %v4762 = vsel %vm4690, %v4761, %v4760
        %v4763 = vrot.slane %v4657, 1
        %v4764 = vsel %vm4693, %v4763, %v4762
        %v4765 = vrot.slane %v4659, 7
        %v4766 = vsel %vm4675, %v4765, %v4658
        %v4767 = vrot.slane %v4660, 6
        %v4768 = vsel %vm4678, %v4767, %v4766
        %v4769 = vrot.slane %v4661, 5
        %v4770 = vsel %vm4681, %v4769, %v4768
        %v4771 = vrot.slane %v4662, 4
        %v4772 = vsel %vm4684, %v4771, %v4770
        %v4773 = vrot.slane %v4663, 3
        %v4774 = vsel %vm4687, %v4773, %v4772
        %v4775 = vrot.slane %v4664, 2
        %v4776 = vsel %vm4690, %v4775, %v4774
        %v4777 = vrot.slane %v4665, 1
        %v4778 = vsel %vm4693, %v4777, %v4776
        %v4779 = vrot.slane %v4667, 7
        %v4780 = vsel %vm4675, %v4779, %v4666
        %v4781 = vrot.slane %v4668, 6
        %v4782 = vsel %vm4678, %v4781, %v4780
        %v4783 = vrot.slane %v4669, 5
        %v4784 = vsel %vm4681, %v4783, %v4782
        %v4785 = vrot.slane %v4670, 4
        %v4786 = vsel %vm4684, %v4785, %v4784
        %v4787 = vrot.slane %v4671, 3
        %v4788 = vsel %vm4687, %v4787, %v4786
        %v4789 = vrot.slane %v4672, 2
        %v4790 = vsel %vm4690, %v4789, %v4788
        %v4791 = vrot.slane %v4673, 1
        %v4792 = vsel %vm4693, %v4791, %v4790
        %v4793 = vpack.c.b16 %v4694, %v4694
        %v4794 = vpack.c.b16 %v4708, %v4708
        %v4795 = vpack.c.b16 %v4722, %v4722
        %v4796 = vpack.c.b16 %v4736, %v4736
        %v4797 = vpack.c.b16 %v4750, %v4750
        %v4798 = vpack.c.b16 %v4764, %v4764
        %v4799 = vpack.c.b16 %v4778, %v4778
        %v4800 = vpack.c.b16 %v4792, %v4792
        %vm4809 = vcmask 125952
        %4810 = vst.msk [vmem:[%s197] sm:$0xf] %vm4809, %v4793
        %4811 = vst.msk [vmem:[%s197 + $0x4] sm:$0xf] %vm4809, %v4794
        %4812 = vst.msk [vmem:[%s197 + $0x8] sm:$0xf] %vm4809, %v4795
        %4813 = vst.msk [vmem:[%s197 + $0xc] sm:$0xf] %vm4809, %v4796
        %4814 = vst.msk [vmem:[%s197 + $0x10] sm:$0xf] %vm4809, %v4797
        %4815 = vst.msk [vmem:[%s197 + $0x14] sm:$0xf] %vm4809, %v4798
        %4816 = vst.msk [vmem:[%s197 + $0x18] sm:$0xf] %vm4809, %v4799
        %4817 = vst.msk [vmem:[%s197 + $0x1c] sm:$0xf] %vm4809, %v4800
        %s4818 = sand.u32 %s94, 1
        %s4819 = scalar_lea.sflag [#allocation6], %s4818
        %s4820 = sand.u32 %s94, 1
        %s4821 = smul.addr %s4820, 32
        %s4822 = scalar_lea.vmem [#allocation9], %s4821
        // Predicated region
        $region41: #{tpu_custom_call.1} parent=27 // pred_check
          %p4823 = pneg %p104
        $region42: #{tpu_custom_call.1} parent=27 // pred_check_branch
          %4825 = sbr.rel (%p4823) target = $region44
        $region43: #{tpu_custom_call.1} parent=27 // pred_region
          %s4827 = ssub.s32 512, 512
          %4828 = vsyncadd %s4819, %s4827
          %s4829 = smul.addr %s24, 8
          %s4830 = sadd.s32 %s25, %s4829
          %s4831 = smul.addr %s4830, 64
          %s4832 = scalar_lea.hbm %s2, %s4831
          %s4833 = sshll.u32 %s4822, 4
          %s4834 = int_to_ptr.vmem [resolvable:$true] %s4833
          %4839 = dma.vmem_to_hbm [thread:$0]  %s4834, 512, %s4832, %s4819, 64, 64, 4
        $region44: #{tpu_custom_call.1} parent=27 // pred_fallthru
          _
      $region28: #{tpu_custom_call.1} parent=5 // pred_fallthru
        _
      %p4840 = scmp.le.s32.totalorder 2, %s15
      // Predicated region
      $region45: #{tpu_custom_call.1} parent=5 // pred_check
        %p4841 = pneg %p4840
      $region46: #{tpu_custom_call.1} parent=5 // pred_check_branch
        %4843 = sbr.rel (%p4841) target = $region48
      $region47: #{tpu_custom_call.1} parent=5 // pred_region
        %s4844 = ssub.s32 %s15, 2
        // Predicated region
        $region49: #{tpu_custom_call.1} parent=47 // pred_check
          %p4845 = pneg %p110
        $region50: #{tpu_custom_call.1} parent=47 // pred_check_branch
          %4847 = sbr.rel (%p4845) target = $region52
        $region51: #{tpu_custom_call.1} parent=47 // pred_region
          %s4848 = sand.u32 %s95, 1
          %s4849 = scalar_lea.sflag [#allocation6], %s4848
          %s4850 = sand.u32 %s95, 1
          %s4851 = smul.addr %s4850, 32
          %s4852 = scalar_lea.vmem [#allocation9], %s4851
          %4853 = dma.done %s4849, 512
        $region52: #{tpu_custom_call.1} parent=47 // pred_fallthru
          _
      $region48: #{tpu_custom_call.1} parent=5 // pred_fallthru
        _
    $region6: #{tpu_custom_call.1} parent=1 // loop_footer
      %s19 = sadd.s32 1, %s15
    $region7: #{tpu_custom_call.1} parent=1 // loop_footer_branch
      %14 = sbr.rel target = $region3
    $region8: #{tpu_custom_call.1} parent=1 // loop_exit
      _
    %4854 = vsyncpa [#allocation5], 1
    %s4855 = scalar_lea.sflag [#allocation5], 1
    %4856 = vsyncpa %s4855, 1
    %4857 = vsyncpa [#allocation8], 1
    %4858 = vsyncpa [#allocation6], 1
    %s4859 = scalar_lea.sflag [#allocation6], 1
    %4860 = vsyncpa %s4859, 1

</llo_original>
